<compile_context>
chip_gen: v6e
topology: v6e:2x2x1
jax: 0.10.0
libtpu: 0.0.40
codegen_flags: <defaults>
</compile_context>

<pallas_src>
import functools

import jax
import jax.numpy as jnp
from jax.experimental import pallas as pl
from jax.experimental.pallas import tpu as pltpu


def _round_up(x, m):
    return ((x + m - 1) // m) * m


def _choose_tp(p, k, cout, max_tp, align):
    """P-tile size: multiple of `align`, capped by max_tp and a VMEM budget so
    double-buffered blocks stay well under every chip's scoped VMEM limit."""
    tp = _round_up(min(max_tp, p), align)
    budget = 12 << 20
    while tp > align:
        need = 2 * (tp * k * 2 + tp * cout * 4) + k * cout * 2
        if need <= budget:
            break
        tp = _round_up(tp // 2, align)
    return max(tp, align)


# ----------------------------- Pallas kernels ------------------------------ #

def _conv_fused_kernel(p_ref, w_ref, b_ref, o_ref, *, use_instnorm, use_act,
                       neg_slope, eps, p_real, transpose_out):
    """Whole-P tile: bf16 matmul (f32 acc) + bias (+ InstanceNorm) (+ LeakyReLU)."""
    x = p_ref[0]                                               # (TP, K) bf16
    if transpose_out:
        # w_ref holds W^T (Cout, K); contract both operands on K so the result
        # is (Cout, TP) and the stored last dim is P (lane-dense store).
        y = jax.lax.dot_general(w_ref[...], x, (((1,), (1,)), ((), ())),
                                preferred_element_type=jnp.float32)
        y = y + b_ref[...]                                     # (Cout,TP)+(Cout,1)
        if use_act:
            y = jnp.where(y >= 0, y, neg_slope * y)
        o_ref[0] = y.astype(o_ref.dtype)
        return
    y = jnp.dot(x, w_ref[...], preferred_element_type=jnp.float32)
    y = y + b_ref[...]                                         # (TP,Cout)+(1,Cout)
    if use_instnorm:
        tp = y.shape[0]
        if tp == p_real:
            mu = jnp.mean(y, axis=0, keepdims=True)
            var = jnp.mean((y - mu) ** 2, axis=0, keepdims=True)   # biased var
        else:  # tile padded beyond the real spatial size -> mask padded rows
            row = jax.lax.broadcasted_iota(jnp.int32, y.shape, 0)
            m = (row < p_real).astype(jnp.float32)
            inv_n = 1.0 / float(p_real)
            mu = jnp.sum(y * m, axis=0, keepdims=True) * inv_n
            var = jnp.sum(((y - mu) ** 2) * m, axis=0, keepdims=True) * inv_n
        y = (y - mu) * jax.lax.rsqrt(var + eps)
    if use_act:
        y = jnp.where(y >= 0, y, neg_slope * y)                # LeakyReLU(0.2)
    o_ref[0] = y.astype(o_ref.dtype)


def _conv_tiled_kernel(p_ref, w_ref, b_ref, o_ref, *, use_act, neg_slope,
                       transpose_out):
    """One (TP, K) tile of a conv layer without InstanceNorm."""
    x = p_ref[0]
    if transpose_out:
        y = jax.lax.dot_general(w_ref[...], x, (((1,), (1,)), ((), ())),
                                preferred_element_type=jnp.float32) + b_ref[...]
    else:
        y = jnp.dot(x, w_ref[...], preferred_element_type=jnp.float32) + b_ref[...]
    if use_act:
        y = jnp.where(y >= 0, y, neg_slope * y)
    o_ref[0] = y.astype(o_ref.dtype)


def _conv_stats_kernel(p_ref, w_ref, b_ref, y_ref, s_ref, *, p_real, tp):
    """Pass 1 of the tiled-InstanceNorm path: conv+bias for one P tile and
    accumulate per-channel sum / sum-of-squares in a resident stats block."""
    t = pl.program_id(1)

    @pl.when(t == 0)
    def _():
        s_ref[...] = jnp.zeros_like(s_ref)

    x = p_ref[0]                                               # (TP, K) bf16
    y = jnp.dot(x, w_ref[...], preferred_element_type=jnp.float32) + b_ref[...]
    y_ref[0] = y.astype(y_ref.dtype)
    row = jax.lax.broadcasted_iota(jnp.int32, y.shape, 0) + t * tp
    m = (row < p_real).astype(jnp.float32)                     # mask padded rows
    ym = y * m
    ssum = jnp.sum(ym, axis=0, keepdims=True)                  # (1, Cout)
    ssq = jnp.sum(ym * y, axis=0, keepdims=True)               # (1, Cout)
    s_ref[0] = s_ref[0] + jnp.concatenate([ssum, ssq], axis=0)


def _norm_act_kernel(y_ref, s_ref, o_ref, *, p_real, neg_slope, eps):
    """Pass 2: InstanceNorm (from accumulated stats) + LeakyReLU per P tile."""
    y = y_ref[0]                                               # (TP, Cout) f32
    s = s_ref[0]                                               # (2, Cout) f32
    inv_n = 1.0 / float(p_real)
    mu = s[0:1, :] * inv_n
    var = jnp.maximum(s[1:2, :] * inv_n - mu * mu, 0.0)        # biased var
    y = (y - mu) * jax.lax.rsqrt(var + eps)
    y = jnp.where(y >= 0, y, neg_slope * y)
    o_ref[0] = y.astype(o_ref.dtype)


def _attention_kernel(x_ref, w_ref, b_ref, gamma_ref, o_ref, *, cqp, scale,
                      p_real):
    """EfficientSelfAttention (downsample_factor=1) for one batch element.
    Q|K|V projections fused into one matmul; q/k weights are zero-padded to a
    128-lane width (the extra columns contribute exactly 0 to QK^T)."""
    x = x_ref[0]                                               # (Pp, C) bf16
    qkv = jnp.dot(x, w_ref[...], preferred_element_type=jnp.float32) + b_ref[...]
    q = qkv[:, :cqp].astype(jnp.bfloat16)
    k = qkv[:, cqp:2 * cqp].astype(jnp.bfloat16)
    v = qkv[:, 2 * cqp:].astype(jnp.bfloat16)
    energy = jax.lax.dot_general(q, k, (((1,), (1,)), ((), ())),
                                 preferred_element_type=jnp.float32) * scale
    if p_real != energy.shape[1]:                              # mask padded keys
        col = jax.lax.broadcasted_iota(jnp.int32, energy.shape, 1)
        energy = jnp.where(col < p_real, energy, -1e30)
    energy = energy - jnp.max(energy, axis=-1, keepdims=True)
    p = jnp.exp(energy)
    attn = p * pl.reciprocal(jnp.sum(p, axis=-1, keepdims=True), approx=True)
    out = jnp.dot(attn.astype(jnp.bfloat16), v,
                  preferred_element_type=jnp.float32)          # (Pp, C)
    gamma = gamma_ref[0, 0]
    o_ref[0] = (gamma * out + x.astype(jnp.float32)).astype(o_ref.dtype)
    # TODO(synk): switch to an online-softmax (flash-style) loop over key tiles
    # when P grows large enough that the (P, P) energy block pressures VMEM.


# ------------------------------ Pallas wrappers ----------------------------- #

def conv_layer(patches, w_mat, bias, *, use_instnorm, use_act,
               transpose_out=False, out_dtype=jnp.bfloat16,
               neg_slope=0.2, eps=1e-5, max_tp=512):
    """patches: (N, P, K); w_mat: (K, Cout); bias: (Cout,).
    Returns (N, P, Cout), or (N, Cout, P) when transpose_out=True."""
    assert not (transpose_out and use_instnorm)
    N, P, K = patches.shape
    Cout = w_mat.shape[1]
    align = 128 if transpose_out else 8        # lane-dense tiles for (Cout,P) out
    tp = _choose_tp(P, K, Cout, max_tp, align)
    n_pt = pl.cdiv(P, tp)
    p_pad = n_pt * tp
    if p_pad != P:
        patches = jnp.pad(patches, ((0, 0), (0, p_pad - P), (0, 0)))
    patches = patches.astype(jnp.bfloat16)
    w_in = (w_mat.T if transpose_out else w_mat).astype(jnp.bfloat16)
    b_in = (bias.reshape(Cout, 1) if transpose_out
            else bias.reshape(1, Cout)).astype(jnp.float32)
    # TODO(synk): at production feature sizes, also zero-pad Cout of the early
    # conv layers to a multiple of 128 for fully lane-dense intermediate stores.

    if n_pt == 1:
        kernel = functools.partial(
            _conv_fused_kernel, use_instnorm=use_instnorm, use_act=use_act,
            neg_slope=neg_slope, eps=eps, p_real=P, transpose_out=transpose_out)
        if transpose_out:
            out_shape = jax.ShapeDtypeStruct((N, Cout, p_pad), out_dtype)
            out_spec = pl.BlockSpec((1, Cout, p_pad), lambda n: (n, 0, 0))
        else:
            out_shape = jax.ShapeDtypeStruct((N, p_pad, Cout), out_dtype)
            out_spec = pl.BlockSpec((1, p_pad, Cout), lambda n: (n, 0, 0))
        y = pl.pallas_call(
            kernel, out_shape=out_shape, grid=(N,),
            in_specs=[pl.BlockSpec((1, p_pad, K), lambda n: (n, 0, 0)),
                      pl.BlockSpec(w_in.shape, lambda n: (0, 0)),
                      pl.BlockSpec(b_in.shape, lambda n: (0, 0))],
            out_specs=out_spec,
            compiler_params=pltpu.CompilerParams(
                dimension_semantics=("parallel",)),
        )(patches, w_in, b_in)
    elif not use_instnorm:
        kernel = functools.partial(
            _conv_tiled_kernel, use_act=use_act, neg_slope=neg_slope,
            transpose_out=transpose_out)
        if transpose_out:
            out_shape = jax.ShapeDtypeStruct((N, Cout, p_pad), out_dtype)
            out_spec = pl.BlockSpec((1, Cout, tp), lambda n, t: (n, 0, t))
        else:
            out_shape = jax.ShapeDtypeStruct((N, p_pad, Cout), out_dtype)
            out_spec = pl.BlockSpec((1, tp, Cout), lambda n, t: (n, t, 0))
        y = pl.pallas_call(
            kernel, out_shape=out_shape, grid=(N, n_pt),
            in_specs=[pl.BlockSpec((1, tp, K), lambda n, t: (n, t, 0)),
                      pl.BlockSpec(w_in.shape, lambda n, t: (0, 0)),
                      pl.BlockSpec(b_in.shape, lambda n, t: (0, 0))],
            out_specs=out_spec,
            compiler_params=pltpu.CompilerParams(
                dimension_semantics=("parallel", "parallel")),
        )(patches, w_in, b_in)
    else:
        # Pass 1: per-tile conv + bias, accumulating per-channel sum / sum-sq
        # in a stats block resident across the (last, "arbitrary") P-tile axis.
        stats_kernel = functools.partial(_conv_stats_kernel, p_real=P, tp=tp)
        y_raw, stats = pl.pallas_call(
            stats_kernel,
            out_shape=(jax.ShapeDtypeStruct((N, p_pad, Cout), jnp.float32),
                       jax.ShapeDtypeStruct((N, 2, Cout), jnp.float32)),
            grid=(N, n_pt),
            in_specs=[pl.BlockSpec((1, tp, K), lambda n, t: (n, t, 0)),
                      pl.BlockSpec((K, Cout), lambda n, t: (0, 0)),
                      pl.BlockSpec((1, Cout), lambda n, t: (0, 0))],
            out_specs=(pl.BlockSpec((1, tp, Cout), lambda n, t: (n, t, 0)),
                       pl.BlockSpec((1, 2, Cout), lambda n, t: (n, 0, 0))),
            compiler_params=pltpu.CompilerParams(
                dimension_semantics=("parallel", "arbitrary")),
        )(patches, w_in, b_in)
        # Pass 2: InstanceNorm + LeakyReLU, tiled over P.
        norm_kernel = functools.partial(_norm_act_kernel, p_real=P,
                                        neg_slope=neg_slope, eps=eps)
        y = pl.pallas_call(
            norm_kernel,
            out_shape=jax.ShapeDtypeStruct((N, p_pad, Cout), out_dtype),
            grid=(N, n_pt),
            in_specs=[pl.BlockSpec((1, tp, Cout), lambda n, t: (n, t, 0)),
                      pl.BlockSpec((1, 2, Cout), lambda n, t: (n, 0, 0))],
            out_specs=pl.BlockSpec((1, tp, Cout), lambda n, t: (n, t, 0)),
            compiler_params=pltpu.CompilerParams(
                dimension_semantics=("parallel", "parallel")),
        )(y_raw, stats)

    if p_pad != P:
        y = y[:, :, :P] if transpose_out else y[:, :P, :]
    return y


def attention_block(x_flat, wq, bq, wk, bk, wv, bv, gamma):
    """x_flat: (N, P, C). wq/wk: (C, Cq); wv: (C, C); biases 1-D; gamma (1,1)."""
    N, P, C = x_flat.shape
    Cq = wq.shape[1]
    cqp = _round_up(Cq, 128)          # lane-aligned q/k slices (zero-padded)

    def pad_cols(w, b):
        return (jnp.pad(w, ((0, 0), (0, cqp - w.shape[1]))),
                jnp.pad(b.reshape(-1), (0, cqp - b.shape[-1])))

    wq_p, bq_p = pad_cols(wq, bq)
    wk_p, bk_p = pad_cols(wk, bk)
    w_qkv = jnp.concatenate([wq_p, wk_p, wv], axis=1).astype(jnp.bfloat16)
    b_qkv = jnp.concatenate([bq_p, bk_p, bv.reshape(-1)]).reshape(1, -1)
    b_qkv = b_qkv.astype(jnp.float32)
    wdim = 2 * cqp + C

    p_pad = _round_up(P, 8)
    if p_pad != P:
        x_flat = jnp.pad(x_flat, ((0, 0), (0, p_pad - P), (0, 0)))
    x_flat = x_flat.astype(jnp.bfloat16)

    kernel = functools.partial(_attention_kernel, cqp=cqp,
                               scale=float(Cq) ** (-0.5), p_real=P)
    out = pl.pallas_call(
        kernel,
        out_shape=jax.ShapeDtypeStruct((N, p_pad, C), jnp.bfloat16),
        grid=(N,),
        in_specs=[
            pl.BlockSpec((1, p_pad, C), lambda n: (n, 0, 0)),
            pl.BlockSpec((C, wdim), lambda n: (0, 0)),
            pl.BlockSpec((1, wdim), lambda n: (0, 0)),
            pl.BlockSpec(memory_space=pltpu.MemorySpace.SMEM),   # gamma scalar
        ],
        out_specs=pl.BlockSpec((1, p_pad, C), lambda n: (n, 0, 0)),
        compiler_params=pltpu.CompilerParams(dimension_semantics=("parallel",)),
    )(x_flat, w_qkv, b_qkv, gamma)
    return out[:, :P, :] if p_pad != P else out


# ------------------------------- JAX glue ---------------------------------- #

def im2col_nhwc(x, k, stride, pad):
    """x: (N, H, W, C) -> patches (N, Ho*Wo, k*k*C); feature order (kh, kw, cin)
    matches conv weights flattened as transpose(2,3,1,0).reshape(-1, Cout)."""
    # TODO(synk): fuse im2col into the conv kernel (manual DMA of input row
    # bands) to avoid materializing the k*k-duplicated patch tensor in HBM.
    N, H, W, C = x.shape
    xp = jnp.pad(x, ((0, 0), (pad, pad), (pad, pad), (0, 0)))
    Ho = (H + 2 * pad - k) // stride + 1
    Wo = (W + 2 * pad - k) // stride + 1
    cols = []
    for i in range(k):
        for j in range(k):
            cols.append(xp[:, i:i + stride * Ho:stride,
                           j:j + stride * Wo:stride, :])
    patches = jnp.stack(cols, axis=3)                 # (N, Ho, Wo, k*k, C)
    return patches.reshape(N, Ho * Wo, k * k * C), Ho, Wo


def spectral_normalize(w, key, n_iter=5):
    """Deterministic power-iteration spectral normalization (glue; approximates
    torch.nn.utils.spectral_norm's W / sigma reparameterization)."""
    w_mat = w.reshape(w.shape[0], -1)
    u = jax.random.normal(key, (w_mat.shape[0],), jnp.float32)
    u = u / (jnp.linalg.norm(u) + 1e-12)
    v = None
    for _ in range(n_iter):
        v = w_mat.T @ u
        v = v / (jnp.linalg.norm(v) + 1e-12)
        u = w_mat @ v
        u = u / (jnp.linalg.norm(u) + 1e-12)
    sigma = jnp.dot(u, w_mat @ v)
    return w / sigma


def init_discriminator_params(key, in_channels, features):
    keys = iter(jax.random.split(key, 4 * len(features) + 16))
    params = {"layers": [], "attention": None, "final": None}
    in_c = in_channels
    for f in features:
        w = 0.1 * jax.random.normal(next(keys), (f, in_c, 4, 4), jnp.float32)
        w = spectral_normalize(w, next(keys))
        b = 0.02 * jax.random.normal(next(keys), (f,), jnp.float32)
        params["layers"].append((w, b))
        in_c = f
    C = in_c
    Cq = C // 8
    wq = 0.1 * jax.random.normal(next(keys), (Cq, C, 1, 1), jnp.float32)
    bq = 0.02 * jax.random.normal(next(keys), (Cq,), jnp.float32)
    wk = 0.1 * jax.random.normal(next(keys), (Cq, C, 1, 1), jnp.float32)
    bk = 0.02 * jax.random.normal(next(keys), (Cq,), jnp.float32)
    wv = 0.1 * jax.random.normal(next(keys), (C, C, 1, 1), jnp.float32)
    bv = 0.02 * jax.random.normal(next(keys), (C,), jnp.float32)
    gamma = jnp.zeros((), jnp.float32)   # matches nn.Parameter(torch.zeros(1))
    params["attention"] = (wq, bq, wk, bk, wv, bv, gamma)
    wf = 0.1 * jax.random.normal(next(keys), (1, C, 4, 4), jnp.float32)
    wf = spectral_normalize(wf, next(keys))
    bf = 0.02 * jax.random.normal(next(keys), (1,), jnp.float32)
    params["final"] = (wf, bf)
    return params


def discriminator_forward(x, params, *, max_tp=512):
    """x: (N, in_channels, H, W) f32 -> (N, 1, H', W') f32 (PatchGAN map)."""
    # TODO(synk): gradient checkpointing (_checkpoint_forward) is a training-time
    # memory optimization with no effect on forward math; omitted.
    N = x.shape[0]
    x = jnp.transpose(x, (0, 2, 3, 1)).astype(jnp.bfloat16)   # NHWC, once
    # Conv stack: conv(k4,s2,p1) [+ InstanceNorm] + LeakyReLU(0.2)
    for idx, (w, b) in enumerate(params["layers"]):
        patches, Ho, Wo = im2col_nhwc(x, 4, 2, 1)
        Cout = w.shape[0]
        w_mat = jnp.transpose(w, (2, 3, 1, 0)).reshape(-1, Cout)
        y = conv_layer(patches, w_mat, b, use_instnorm=(idx > 0), use_act=True,
                       out_dtype=jnp.bfloat16, max_tp=max_tp)   # (N, P, Cout)
        x = y.reshape(N, Ho, Wo, Cout)                          # stays NHWC
    # EfficientSelfAttention (downsample_factor=1); NHWC -> (N, P, C) is free.
    Hc, Wc, C = x.shape[1], x.shape[2], x.shape[3]
    wq, bq, wk, bk, wv, bv, gamma = params["attention"]
    o = attention_block(
        x.reshape(N, Hc * Wc, C),
        wq.reshape(wq.shape[0], C).T, bq,
        wk.reshape(wk.shape[0], C).T, bk,
        wv.reshape(wv.shape[0], C).T, bv,
        gamma.reshape(1, 1),
    )
    x = o.reshape(N, Hc, Wc, C)
    # Final conv(k4,s1,p1) -> 1 channel; computed transposed so the kernel's
    # stored last dim is P (lane-dense) and the result is already NCHW.
    wf, bf = params["final"]
    patches, Ho, Wo = im2col_nhwc(x, 4, 1, 1)
    wf_mat = jnp.transpose(wf, (2, 3, 1, 0)).reshape(-1, 1)
    y = conv_layer(patches, wf_mat, bf, use_instnorm=False, use_act=False,
                   transpose_out=True, out_dtype=jnp.float32, max_tp=max_tp)
    return y.reshape(N, 1, Ho, Wo)


# --------------------------------- main ------------------------------------ #

if __name__ == "__main__":
    key = jax.random.PRNGKey(0)
    k_params, k_x = jax.random.split(key)

    # Small, module-consistent shapes: features scaled down from [64,128,256,512].
    in_channels = 1
    features = [8, 16, 32, 64]
    N, H, W = 2, 64, 64

    params = init_discriminator_params(k_params, in_channels, features)
    x = jax.random.normal(k_x, (N, in_channels, H, W), jnp.float32)

    # max_tp=128 so the demo exercises both the single-tile fused path and the
    # tiled / two-pass InstanceNorm path.
    fwd = jax.jit(functools.partial(discriminator_forward, max_tp=128))
    out = jax.block_until_ready(fwd(x, params))

    assert out.shape == (N, 1, 3, 3), out.shape
    assert out.dtype == jnp.float32
    assert bool(jnp.all(jnp.isfinite(out)))
    print("KERNEL_OK")
</pallas_src>

<mosaic_0001>
module attributes {stable_mosaic.version = 11 : i64} {
  func.func @_conv_tiled_kernel(%arg0: i32, %arg1: i32, %arg2: memref<1x128x16xbf16, #tpu.memory_space<vmem>>, %arg3: memref<16x8xbf16, #tpu.memory_space<vmem>>, %arg4: memref<1x8xf32, #tpu.memory_space<vmem>>, %arg5: memref<1x128x8xbf16, #tpu.memory_space<vmem>>) attributes {dimension_semantics = [#tpu.dimension_semantics<parallel>, #tpu.dimension_semantics<parallel>], iteration_bounds = array<i64: 2, 8>, scalar_prefetch = 0 : i64, scratch_operands = 0 : i64, tpu.core_type = #tpu.core_type<tc>, window_params = [{transform_indices = @transform_0, window_bounds = array<i64: 1, 128, 16>}, {pipeline_mode = #tpu.pipeline_mode<synchronous>, transform_indices = @transform_1, window_bounds = array<i64: 16, 8>}, {pipeline_mode = #tpu.pipeline_mode<synchronous>, transform_indices = @transform_2, window_bounds = array<i64: 1, 8>}, {transform_indices = @transform_3, window_bounds = array<i64: 1, 128, 8>}]} {
    %c0 = arith.constant 0 : index
    %c0_0 = arith.constant 0 : index
    %c0_1 = arith.constant 0 : index
    %0 = vector.load %arg2[%c0, %c0_0, %c0_1] : memref<1x128x16xbf16, #tpu.memory_space<vmem>>, vector<1x128x16xbf16>
    %1 = vector.shape_cast %0 : vector<1x128x16xbf16> to vector<128x16xbf16>
    %c0_2 = arith.constant 0 : index
    %c0_3 = arith.constant 0 : index
    %2 = vector.load %arg3[%c0_2, %c0_3] : memref<16x8xbf16, #tpu.memory_space<vmem>>, vector<16x8xbf16>
    %cst = arith.constant dense<0.000000e+00> : vector<128x8xf32>
    %3 = tpu.matmul %1, %2, %cst {dimension_numbers = #tpu.dot_dimension_numbers<[1], [0], [0], [1], [0, 0, 1, 1], [], []>} : vector<128x16xbf16>, vector<16x8xbf16>, vector<128x8xf32> -> vector<128x8xf32>
    %c0_4 = arith.constant 0 : index
    %c0_5 = arith.constant 0 : index
    %4 = vector.load %arg4[%c0_4, %c0_5] : memref<1x8xf32, #tpu.memory_space<vmem>>, vector<1x8xf32>
    %5 = vector.broadcast %4 : vector<1x8xf32> to vector<128x8xf32>
    %6 = arith.addf %3, %5 : vector<128x8xf32>
    %cst_6 = arith.constant 0.000000e+00 : f32
    %7 = vector.broadcast %cst_6 : f32 to vector<128x8xf32>
    %8 = arith.cmpf oge, %6, %7 : vector<128x8xf32>
    %cst_7 = arith.constant 2.000000e-01 : f32
    %9 = vector.broadcast %cst_7 : f32 to vector<128x8xf32>
    %10 = arith.mulf %9, %6 : vector<128x8xf32>
    %11 = arith.select %8, %6, %10 : vector<128x8xi1>, vector<128x8xf32>
    %12 = arith.truncf %11 : vector<128x8xf32> to vector<128x8xbf16>
    %c0_8 = arith.constant 0 : index
    %c0_9 = arith.constant 0 : index
    %c0_10 = arith.constant 0 : index
    %13 = vector.load %arg5[%c0_8, %c0_9, %c0_10] : memref<1x128x8xbf16, #tpu.memory_space<vmem>>, vector<1x128x8xbf16>
    %14 = vector.shape_cast %13 : vector<1x128x8xbf16> to vector<128x8xbf16>
    %15 = vector.shape_cast %12 : vector<128x8xbf16> to vector<1x128x8xbf16>
    tpu.vector_store %arg5[%c0_8, %c0_9, %c0_10], %15 {strides = array<i32>} : memref<1x128x8xbf16, #tpu.memory_space<vmem>>, vector<1x128x8xbf16>,
    return
  }
  func.func @transform_0(%arg0: i32, %arg1: i32) -> (i32, i32, i32) {
    %c0_i32 = arith.constant 0 : i32
    %c0_i32_0 = arith.constant 0 : i32
    return %arg0, %arg1, %c0_i32 : i32, i32, i32
  }
  func.func @transform_1(%arg0: i32, %arg1: i32) -> (i32, i32) {
    %c0_i32 = arith.constant 0 : i32
    %c0_i32_0 = arith.constant 0 : i32
    %c0_i32_1 = arith.constant 0 : i32
    return %c0_i32, %c0_i32_0 : i32, i32
  }
  func.func @transform_2(%arg0: i32, %arg1: i32) -> (i32, i32) {
    %c0_i32 = arith.constant 0 : i32
    %c0_i32_0 = arith.constant 0 : i32
    %c0_i32_1 = arith.constant 0 : i32
    return %c0_i32, %c0_i32_0 : i32, i32
  }
  func.func @transform_3(%arg0: i32, %arg1: i32) -> (i32, i32, i32) {
    %c0_i32 = arith.constant 0 : i32
    %c0_i32_0 = arith.constant 0 : i32
    return %arg0, %arg1, %c0_i32 : i32, i32, i32
  }
}

module attributes {stable_mosaic.version = 11 : i64} {
  func.func @_norm_act_kernel(%arg0: i32, %arg1: i32, %arg2: memref<1x128x16xf32, #tpu.memory_space<vmem>>, %arg3: memref<1x2x16xf32, #tpu.memory_space<vmem>>, %arg4: memref<1x128x16xbf16, #tpu.memory_space<vmem>>) attributes {dimension_semantics = [#tpu.dimension_semantics<parallel>, #tpu.dimension_semantics<parallel>], iteration_bounds = array<i64: 2, 2>, scalar_prefetch = 0 : i64, scratch_operands = 0 : i64, tpu.core_type = #tpu.core_type<tc>, window_params = [{transform_indices = @transform_0, window_bounds = array<i64: 1, 128, 16>}, {transform_indices = @transform_1, window_bounds = array<i64: 1, 2, 16>}, {transform_indices = @transform_2, window_bounds = array<i64: 1, 128, 16>}]} {
    %c0 = arith.constant 0 : index
    %c0_0 = arith.constant 0 : index
    %c0_1 = arith.constant 0 : index
    %0 = vector.load %arg2[%c0, %c0_0, %c0_1] : memref<1x128x16xf32, #tpu.memory_space<vmem>>, vector<1x128x16xf32>
    %1 = vector.shape_cast %0 : vector<1x128x16xf32> to vector<128x16xf32>
    %c0_2 = arith.constant 0 : index
    %c0_3 = arith.constant 0 : index
    %c0_4 = arith.constant 0 : index
    %2 = vector.load %arg3[%c0_2, %c0_3, %c0_4] : memref<1x2x16xf32, #tpu.memory_space<vmem>>, vector<1x2x16xf32>
    %3 = vector.shape_cast %2 : vector<1x2x16xf32> to vector<2x16xf32>
    %4 = vector.extract_strided_slice %3 {offsets = [0, 0], sizes = [1, 16], strides = [1, 1]} : vector<2x16xf32> to vector<1x16xf32>
    %cst = arith.constant 3.906250e-03 : f32
    %5 = vector.broadcast %cst : f32 to vector<1x16xf32>
    %6 = arith.mulf %4, %5 : vector<1x16xf32>
    %7 = vector.extract_strided_slice %3 {offsets = [1, 0], sizes = [1, 16], strides = [1, 1]} : vector<2x16xf32> to vector<1x16xf32>
    %cst_5 = arith.constant 3.906250e-03 : f32
    %8 = vector.broadcast %cst_5 : f32 to vector<1x16xf32>
    %9 = arith.mulf %7, %8 : vector<1x16xf32>
    %10 = arith.mulf %6, %6 : vector<1x16xf32>
    %11 = arith.subf %9, %10 : vector<1x16xf32>
    %cst_6 = arith.constant 0.000000e+00 : f32
    %12 = vector.broadcast %cst_6 : f32 to vector<1x16xf32>
    %13 = arith.maximumf %11, %12 : vector<1x16xf32>
    %14 = vector.broadcast %6 : vector<1x16xf32> to vector<128x16xf32>
    %15 = arith.subf %1, %14 : vector<128x16xf32>
    %cst_7 = arith.constant 9.99999974E-6 : f32
    %16 = vector.broadcast %cst_7 : f32 to vector<1x16xf32>
    %17 = arith.addf %13, %16 : vector<1x16xf32>
    %18 = math.rsqrt %17 : vector<1x16xf32>
    %19 = vector.broadcast %18 : vector<1x16xf32> to vector<128x16xf32>
    %20 = arith.mulf %15, %19 : vector<128x16xf32>
    %cst_8 = arith.constant 0.000000e+00 : f32
    %21 = vector.broadcast %cst_8 : f32 to vector<128x16xf32>
    %22 = arith.cmpf oge, %20, %21 : vector<128x16xf32>
    %cst_9 = arith.constant 2.000000e-01 : f32
    %23 = vector.broadcast %cst_9 : f32 to vector<128x16xf32>
    %24 = arith.mulf %23, %20 : vector<128x16xf32>
    %25 = arith.select %22, %20, %24 : vector<128x16xi1>, vector<128x16xf32>
    %26 = arith.truncf %25 : vector<128x16xf32> to vector<128x16xbf16>
    %c0_10 = arith.constant 0 : index
    %c0_11 = arith.constant 0 : index
    %c0_12 = arith.constant 0 : index
    %27 = vector.load %arg4[%c0_10, %c0_11, %c0_12] : memref<1x128x16xbf16, #tpu.memory_space<vmem>>, vector<1x128x16xbf16>
    %28 = vector.shape_cast %27 : vector<1x128x16xbf16> to vector<128x16xbf16>
    %29 = vector.shape_cast %26 : vector<128x16xbf16> to vector<1x128x16xbf16>
    tpu.vector_store %arg4[%c0_10, %c0_11, %c0_12], %29 {strides = array<i32>} : memref<1x128x16xbf16, #tpu.memory_space<vmem>>, vector<1x128x16xbf16>,
    return
  }
  func.func @transform_0(%arg0: i32, %arg1: i32) -> (i32, i32, i32) {
    %c0_i32 = arith.constant 0 : i32
    %c0_i32_0 = arith.constant 0 : i32
    return %arg0, %arg1, %c0_i32 : i32, i32, i32
  }
  func.func @transform_1(%arg0: i32, %arg1: i32) -> (i32, i32, i32) {
    %c0_i32 = arith.constant 0 : i32
    %c0_i32_0 = arith.constant 0 : i32
    %c0_i32_1 = arith.constant 0 : i32
    return %arg0, %c0_i32, %c0_i32_0 : i32, i32, i32
  }
  func.func @transform_2(%arg0: i32, %arg1: i32) -> (i32, i32, i32) {
    %c0_i32 = arith.constant 0 : i32
    %c0_i32_0 = arith.constant 0 : i32
    return %arg0, %arg1, %c0_i32 : i32, i32, i32
  }
}

module attributes {stable_mosaic.version = 11 : i64} {
  func.func @_conv_stats_kernel(%arg0: i32, %arg1: i32, %arg2: memref<1x128x128xbf16, #tpu.memory_space<vmem>>, %arg3: memref<128x16xbf16, #tpu.memory_space<vmem>>, %arg4: memref<1x16xf32, #tpu.memory_space<vmem>>, %arg5: memref<1x128x16xf32, #tpu.memory_space<vmem>>, %arg6: memref<1x2x16xf32, #tpu.memory_space<vmem>>) attributes {dimension_semantics = [#tpu.dimension_semantics<parallel>, #tpu.dimension_semantics<arbitrary>], iteration_bounds = array<i64: 2, 2>, scalar_prefetch = 0 : i64, scratch_operands = 0 : i64, tpu.core_type = #tpu.core_type<tc>, window_params = [{transform_indices = @transform_0, window_bounds = array<i64: 1, 128, 128>}, {pipeline_mode = #tpu.pipeline_mode<synchronous>, transform_indices = @transform_1, window_bounds = array<i64: 128, 16>}, {pipeline_mode = #tpu.pipeline_mode<synchronous>, transform_indices = @transform_2, window_bounds = array<i64: 1, 16>}, {transform_indices = @transform_3, window_bounds = array<i64: 1, 128, 16>}, {transform_indices = @transform_4, window_bounds = array<i64: 1, 2, 16>}]} {
    %c0_i32 = arith.constant 0 : i32
    %0 = arith.cmpi eq, %arg1, %c0_i32 : i32
    %1 = arith.extui %0 : i1 to i32
    %c0_i32_0 = arith.constant 0 : i32
    %2 = arith.cmpi ne, %1, %c0_i32_0 : i32
    scf.if %2 {
      %cst_18 = arith.constant 0.000000e+00 : f32
      %34 = vector.broadcast %cst_18 : f32 to vector<1x2x16xf32>
      %c0_19 = arith.constant 0 : index
      %c0_20 = arith.constant 0 : index
      %c0_21 = arith.constant 0 : index
      %35 = vector.load %arg6[%c0_19, %c0_20, %c0_21] : memref<1x2x16xf32, #tpu.memory_space<vmem>>, vector<1x2x16xf32>
      tpu.vector_store %arg6[%c0_19, %c0_20, %c0_21], %34 {strides = array<i32>} : memref<1x2x16xf32, #tpu.memory_space<vmem>>, vector<1x2x16xf32>,
    } else {
    }
    %c0 = arith.constant 0 : index
    %c0_1 = arith.constant 0 : index
    %c0_2 = arith.constant 0 : index
    %3 = vector.load %arg2[%c0, %c0_1, %c0_2] : memref<1x128x128xbf16, #tpu.memory_space<vmem>>, vector<1x128x128xbf16>
    %4 = vector.shape_cast %3 : vector<1x128x128xbf16> to vector<128x128xbf16>
    %c0_3 = arith.constant 0 : index
    %c0_4 = arith.constant 0 : index
    %5 = vector.load %arg3[%c0_3, %c0_4] : memref<128x16xbf16, #tpu.memory_space<vmem>>, vector<128x16xbf16>
    %cst = arith.constant dense<0.000000e+00> : vector<128x16xf32>
    %6 = tpu.matmul %4, %5, %cst {dimension_numbers = #tpu.dot_dimension_numbers<[1], [0], [0], [1], [0, 0, 1, 1], [], []>} : vector<128x128xbf16>, vector<128x16xbf16>, vector<128x16xf32> -> vector<128x16xf32>
    %c0_5 = arith.constant 0 : index
    %c0_6 = arith.constant 0 : index
    %7 = vector.load %arg4[%c0_5, %c0_6] : memref<1x16xf32, #tpu.memory_space<vmem>>, vector<1x16xf32>
    %8 = vector.broadcast %7 : vector<1x16xf32> to vector<128x16xf32>
    %9 = arith.addf %6, %8 : vector<128x16xf32>
    %c0_7 = arith.constant 0 : index
    %c0_8 = arith.constant 0 : index
    %c0_9 = arith.constant 0 : index
    %10 = vector.load %arg5[%c0_7, %c0_8, %c0_9] : memref<1x128x16xf32, #tpu.memory_space<vmem>>, vector<1x128x16xf32>
    %11 = vector.shape_cast %10 : vector<1x128x16xf32> to vector<128x16xf32>
    %12 = vector.shape_cast %9 : vector<128x16xf32> to vector<1x128x16xf32>
    tpu.vector_store %arg5[%c0_7, %c0_8, %c0_9], %12 {strides = array<i32>} : memref<1x128x16xf32, #tpu.memory_space<vmem>>, vector<1x128x16xf32>,
    %13 = tpu.iota {dimensions = array<i32: 0>} : vector<128x16xi32>
    %c128_i32 = arith.constant 128 : i32
    %14 = arith.muli %arg1, %c128_i32 : i32
    %15 = vector.broadcast %14 : i32 to vector<128x16xi32>
    %16 = arith.addi %13, %15 : vector<128x16xi32>
    %c256_i32 = arith.constant 256 : i32
    %17 = vector.broadcast %c256_i32 : i32 to vector<128x16xi32>
    %18 = arith.cmpi slt, %16, %17 : vector<128x16xi32>
    %19 = arith.extui %18 : vector<128x16xi1> to vector<128x16xi32>
    %20 = arith.sitofp %19 : vector<128x16xi32> to vector<128x16xf32>
    %21 = arith.mulf %9, %20 : vector<128x16xf32>
    %cst_10 = arith.constant dense<0.000000e+00> : vector<16xf32>
    %22 = vector.multi_reduction <add>, %21, %cst_10 [0] : vector<128x16xf32> to vector<16xf32>
    %23 = vector.shape_cast %22 : vector<16xf32> to vector<1x16xf32>
    %24 = arith.mulf %21, %9 : vector<128x16xf32>
    %cst_11 = arith.constant dense<0.000000e+00> : vector<16xf32>
    %25 = vector.multi_reduction <add>, %24, %cst_11 [0] : vector<128x16xf32> to vector<16xf32>
    %26 = vector.shape_cast %25 : vector<16xf32> to vector<1x16xf32>
    %c0_12 = arith.constant 0 : index
    %c0_13 = arith.constant 0 : index
    %c0_14 = arith.constant 0 : index
    %27 = vector.load %arg6[%c0_12, %c0_13, %c0_14] : memref<1x2x16xf32, #tpu.memory_space<vmem>>, vector<1x2x16xf32>
    %28 = vector.shape_cast %27 : vector<1x2x16xf32> to vector<2x16xf32>
    %29 = tpu.concatenate %23, %26 in 0 : vector<1x16xf32>, vector<1x16xf32> -> vector<2x16xf32>
    %30 = arith.addf %28, %29 : vector<2x16xf32>
    %c0_15 = arith.constant 0 : index
    %c0_16 = arith.constant 0 : index
    %c0_17 = arith.constant 0 : index
    %31 = vector.load %arg6[%c0_15, %c0_16, %c0_17] : memref<1x2x16xf32, #tpu.memory_space<vmem>>, vector<1x2x16xf32>
    %32 = vector.shape_cast %31 : vector<1x2x16xf32> to vector<2x16xf32>
    %33 = vector.shape_cast %30 : vector<2x16xf32> to vector<1x2x16xf32>
    tpu.vector_store %arg6[%c0_15, %c0_16, %c0_17], %33 {strides = array<i32>} : memref<1x2x16xf32, #tpu.memory_space<vmem>>, vector<1x2x16xf32>,
    return
  }
  func.func @transform_0(%arg0: i32, %arg1: i32) -> (i32, i32, i32) {
    %c0_i32 = arith.constant 0 : i32
    %c0_i32_0 = arith.constant 0 : i32
    return %arg0, %arg1, %c0_i32 : i32, i32, i32
  }
  func.func @transform_1(%arg0: i32, %arg1: i32) -> (i32, i32) {
    %c0_i32 = arith.constant 0 : i32
    %c0_i32_0 = arith.constant 0 : i32
    %c0_i32_1 = arith.constant 0 : i32
    return %c0_i32, %c0_i32_0 : i32, i32
  }
  func.func @transform_2(%arg0: i32, %arg1: i32) -> (i32, i32) {
    %c0_i32 = arith.constant 0 : i32
    %c0_i32_0 = arith.constant 0 : i32
    %c0_i32_1 = arith.constant 0 : i32
    return %c0_i32, %c0_i32_0 : i32, i32
  }
  func.func @transform_3(%arg0: i32, %arg1: i32) -> (i32, i32, i32) {
    %c0_i32 = arith.constant 0 : i32
    %c0_i32_0 = arith.constant 0 : i32
    return %arg0, %arg1, %c0_i32 : i32, i32, i32
  }
  func.func @transform_4(%arg0: i32, %arg1: i32) -> (i32, i32, i32) {
    %c0_i32 = arith.constant 0 : i32
    %c0_i32_0 = arith.constant 0 : i32
    %c0_i32_1 = arith.constant 0 : i32
    return %arg0, %c0_i32, %c0_i32_0 : i32, i32, i32
  }
}

module attributes {stable_mosaic.version = 11 : i64} {
  func.func @_conv_fused_kernel(%arg0: i32, %arg1: memref<1x64x256xbf16, #tpu.memory_space<vmem>>, %arg2: memref<256x32xbf16, #tpu.memory_space<vmem>>, %arg3: memref<1x32xf32, #tpu.memory_space<vmem>>, %arg4: memref<1x64x32xbf16, #tpu.memory_space<vmem>>) attributes {dimension_semantics = [#tpu.dimension_semantics<parallel>], iteration_bounds = array<i64: 2>, scalar_prefetch = 0 : i64, scratch_operands = 0 : i64, tpu.core_type = #tpu.core_type<tc>, window_params = [{transform_indices = @transform_0, window_bounds = array<i64: 1, 64, 256>}, {pipeline_mode = #tpu.pipeline_mode<synchronous>, transform_indices = @transform_1, window_bounds = array<i64: 256, 32>}, {pipeline_mode = #tpu.pipeline_mode<synchronous>, transform_indices = @transform_2, window_bounds = array<i64: 1, 32>}, {transform_indices = @transform_3, window_bounds = array<i64: 1, 64, 32>}]} {
    %c0 = arith.constant 0 : index
    %c0_0 = arith.constant 0 : index
    %c0_1 = arith.constant 0 : index
    %0 = vector.load %arg1[%c0, %c0_0, %c0_1] : memref<1x64x256xbf16, #tpu.memory_space<vmem>>, vector<1x64x256xbf16>
    %1 = vector.shape_cast %0 : vector<1x64x256xbf16> to vector<64x256xbf16>
    %c0_2 = arith.constant 0 : index
    %c0_3 = arith.constant 0 : index
    %2 = vector.load %arg2[%c0_2, %c0_3] : memref<256x32xbf16, #tpu.memory_space<vmem>>, vector<256x32xbf16>
    %cst = arith.constant dense<0.000000e+00> : vector<64x32xf32>
    %3 = tpu.matmul %1, %2, %cst {dimension_numbers = #tpu.dot_dimension_numbers<[1], [0], [0], [1], [0, 0, 1, 1], [], []>} : vector<64x256xbf16>, vector<256x32xbf16>, vector<64x32xf32> -> vector<64x32xf32>
    %c0_4 = arith.constant 0 : index
    %c0_5 = arith.constant 0 : index
    %4 = vector.load %arg3[%c0_4, %c0_5] : memref<1x32xf32, #tpu.memory_space<vmem>>, vector<1x32xf32>
    %5 = vector.broadcast %4 : vector<1x32xf32> to vector<64x32xf32>
    %6 = arith.addf %3, %5 : vector<64x32xf32>
    %cst_6 = arith.constant dense<0.000000e+00> : vector<32xf32>
    %7 = vector.multi_reduction <add>, %6, %cst_6 [0] : vector<64x32xf32> to vector<32xf32>
    %8 = vector.shape_cast %7 : vector<32xf32> to vector<1x32xf32>
    %cst_7 = arith.constant 6.400000e+01 : f32
    %9 = vector.broadcast %cst_7 : f32 to vector<1x32xf32>
    %10 = arith.divf %8, %9 : vector<1x32xf32>
    %11 = vector.broadcast %10 : vector<1x32xf32> to vector<64x32xf32>
    %12 = arith.subf %6, %11 : vector<64x32xf32>
    %13 = arith.mulf %12, %12 : vector<64x32xf32>
    %cst_8 = arith.constant dense<0.000000e+00> : vector<32xf32>
    %14 = vector.multi_reduction <add>, %13, %cst_8 [0] : vector<64x32xf32> to vector<32xf32>
    %15 = vector.shape_cast %14 : vector<32xf32> to vector<1x32xf32>
    %cst_9 = arith.constant 6.400000e+01 : f32
    %16 = vector.broadcast %cst_9 : f32 to vector<1x32xf32>
    %17 = arith.divf %15, %16 : vector<1x32xf32>
    %18 = vector.broadcast %10 : vector<1x32xf32> to vector<64x32xf32>
    %19 = arith.subf %6, %18 : vector<64x32xf32>
    %cst_10 = arith.constant 9.99999974E-6 : f32
    %20 = vector.broadcast %cst_10 : f32 to vector<1x32xf32>
    %21 = arith.addf %17, %20 : vector<1x32xf32>
    %22 = math.rsqrt %21 : vector<1x32xf32>
    %23 = vector.broadcast %22 : vector<1x32xf32> to vector<64x32xf32>
    %24 = arith.mulf %19, %23 : vector<64x32xf32>
    %cst_11 = arith.constant 0.000000e+00 : f32
    %25 = vector.broadcast %cst_11 : f32 to vector<64x32xf32>
    %26 = arith.cmpf oge, %24, %25 : vector<64x32xf32>
    %cst_12 = arith.constant 2.000000e-01 : f32
    %27 = vector.broadcast %cst_12 : f32 to vector<64x32xf32>
    %28 = arith.mulf %27, %24 : vector<64x32xf32>
    %29 = arith.select %26, %24, %28 : vector<64x32xi1>, vector<64x32xf32>
    %30 = arith.truncf %29 : vector<64x32xf32> to vector<64x32xbf16>
    %c0_13 = arith.constant 0 : index
    %c0_14 = arith.constant 0 : index
    %c0_15 = arith.constant 0 : index
    %31 = vector.load %arg4[%c0_13, %c0_14, %c0_15] : memref<1x64x32xbf16, #tpu.memory_space<vmem>>, vector<1x64x32xbf16>
    %32 = vector.shape_cast %31 : vector<1x64x32xbf16> to vector<64x32xbf16>
    %33 = vector.shape_cast %30 : vector<64x32xbf16> to vector<1x64x32xbf16>
    tpu.vector_store %arg4[%c0_13, %c0_14, %c0_15], %33 {strides = array<i32>} : memref<1x64x32xbf16, #tpu.memory_space<vmem>>, vector<1x64x32xbf16>,
    return
  }
  func.func @transform_0(%arg0: i32) -> (i32, i32, i32) {
    %c0_i32 = arith.constant 0 : i32
    %c0_i32_0 = arith.constant 0 : i32
    %c0_i32_1 = arith.constant 0 : i32
    return %arg0, %c0_i32, %c0_i32_0 : i32, i32, i32
  }
  func.func @transform_1(%arg0: i32) -> (i32, i32) {
    %c0_i32 = arith.constant 0 : i32
    %c0_i32_0 = arith.constant 0 : i32
    %c0_i32_1 = arith.constant 0 : i32
    return %c0_i32, %c0_i32_0 : i32, i32
  }
  func.func @transform_2(%arg0: i32) -> (i32, i32) {
    %c0_i32 = arith.constant 0 : i32
    %c0_i32_0 = arith.constant 0 : i32
    %c0_i32_1 = arith.constant 0 : i32
    return %c0_i32, %c0_i32_0 : i32, i32
  }
  func.func @transform_3(%arg0: i32) -> (i32, i32, i32) {
    %c0_i32 = arith.constant 0 : i32
    %c0_i32_0 = arith.constant 0 : i32
    %c0_i32_1 = arith.constant 0 : i32
    return %arg0, %c0_i32, %c0_i32_0 : i32, i32, i32
  }
}

module attributes {stable_mosaic.version = 11 : i64} {
  func.func @_conv_fused_kernel(%arg0: i32, %arg1: memref<1x16x512xbf16, #tpu.memory_space<vmem>>, %arg2: memref<512x64xbf16, #tpu.memory_space<vmem>>, %arg3: memref<1x64xf32, #tpu.memory_space<vmem>>, %arg4: memref<1x16x64xbf16, #tpu.memory_space<vmem>>) attributes {dimension_semantics = [#tpu.dimension_semantics<parallel>], iteration_bounds = array<i64: 2>, scalar_prefetch = 0 : i64, scratch_operands = 0 : i64, tpu.core_type = #tpu.core_type<tc>, window_params = [{transform_indices = @transform_0, window_bounds = array<i64: 1, 16, 512>}, {pipeline_mode = #tpu.pipeline_mode<synchronous>, transform_indices = @transform_1, window_bounds = array<i64: 512, 64>}, {pipeline_mode = #tpu.pipeline_mode<synchronous>, transform_indices = @transform_2, window_bounds = array<i64: 1, 64>}, {transform_indices = @transform_3, window_bounds = array<i64: 1, 16, 64>}]} {
    %c0 = arith.constant 0 : index
    %c0_0 = arith.constant 0 : index
    %c0_1 = arith.constant 0 : index
    %0 = vector.load %arg1[%c0, %c0_0, %c0_1] : memref<1x16x512xbf16, #tpu.memory_space<vmem>>, vector<1x16x512xbf16>
    %1 = vector.shape_cast %0 : vector<1x16x512xbf16> to vector<16x512xbf16>
    %c0_2 = arith.constant 0 : index
    %c0_3 = arith.constant 0 : index
    %2 = vector.load %arg2[%c0_2, %c0_3] : memref<512x64xbf16, #tpu.memory_space<vmem>>, vector<512x64xbf16>
    %cst = arith.constant dense<0.000000e+00> : vector<16x64xf32>
    %3 = tpu.matmul %1, %2, %cst {dimension_numbers = #tpu.dot_dimension_numbers<[1], [0], [0], [1], [0, 0, 1, 1], [], []>} : vector<16x512xbf16>, vector<512x64xbf16>, vector<16x64xf32> -> vector<16x64xf32>
    %c0_4 = arith.constant 0 : index
    %c0_5 = arith.constant 0 : index
    %4 = vector.load %arg3[%c0_4, %c0_5] : memref<1x64xf32, #tpu.memory_space<vmem>>, vector<1x64xf32>
    %5 = vector.broadcast %4 : vector<1x64xf32> to vector<16x64xf32>
    %6 = arith.addf %3, %5 : vector<16x64xf32>
    %cst_6 = arith.constant dense<0.000000e+00> : vector<64xf32>
    %7 = vector.multi_reduction <add>, %6, %cst_6 [0] : vector<16x64xf32> to vector<64xf32>
    %8 = vector.shape_cast %7 : vector<64xf32> to vector<1x64xf32>
    %cst_7 = arith.constant 1.600000e+01 : f32
    %9 = vector.broadcast %cst_7 : f32 to vector<1x64xf32>
    %10 = arith.divf %8, %9 : vector<1x64xf32>
    %11 = vector.broadcast %10 : vector<1x64xf32> to vector<16x64xf32>
    %12 = arith.subf %6, %11 : vector<16x64xf32>
    %13 = arith.mulf %12, %12 : vector<16x64xf32>
    %cst_8 = arith.constant dense<0.000000e+00> : vector<64xf32>
    %14 = vector.multi_reduction <add>, %13, %cst_8 [0] : vector<16x64xf32> to vector<64xf32>
    %15 = vector.shape_cast %14 : vector<64xf32> to vector<1x64xf32>
    %cst_9 = arith.constant 1.600000e+01 : f32
    %16 = vector.broadcast %cst_9 : f32 to vector<1x64xf32>
    %17 = arith.divf %15, %16 : vector<1x64xf32>
    %18 = vector.broadcast %10 : vector<1x64xf32> to vector<16x64xf32>
    %19 = arith.subf %6, %18 : vector<16x64xf32>
    %cst_10 = arith.constant 9.99999974E-6 : f32
    %20 = vector.broadcast %cst_10 : f32 to vector<1x64xf32>
    %21 = arith.addf %17, %20 : vector<1x64xf32>
    %22 = math.rsqrt %21 : vector<1x64xf32>
    %23 = vector.broadcast %22 : vector<1x64xf32> to vector<16x64xf32>
    %24 = arith.mulf %19, %23 : vector<16x64xf32>
    %cst_11 = arith.constant 0.000000e+00 : f32
    %25 = vector.broadcast %cst_11 : f32 to vector<16x64xf32>
    %26 = arith.cmpf oge, %24, %25 : vector<16x64xf32>
    %cst_12 = arith.constant 2.000000e-01 : f32
    %27 = vector.broadcast %cst_12 : f32 to vector<16x64xf32>
    %28 = arith.mulf %27, %24 : vector<16x64xf32>
    %29 = arith.select %26, %24, %28 : vector<16x64xi1>, vector<16x64xf32>
    %30 = arith.truncf %29 : vector<16x64xf32> to vector<16x64xbf16>
    %c0_13 = arith.constant 0 : index
    %c0_14 = arith.constant 0 : index
    %c0_15 = arith.constant 0 : index
    %31 = vector.load %arg4[%c0_13, %c0_14, %c0_15] : memref<1x16x64xbf16, #tpu.memory_space<vmem>>, vector<1x16x64xbf16>
    %32 = vector.shape_cast %31 : vector<1x16x64xbf16> to vector<16x64xbf16>
    %33 = vector.shape_cast %30 : vector<16x64xbf16> to vector<1x16x64xbf16>
    tpu.vector_store %arg4[%c0_13, %c0_14, %c0_15], %33 {strides = array<i32>} : memref<1x16x64xbf16, #tpu.memory_space<vmem>>, vector<1x16x64xbf16>,
    return
  }
  func.func @transform_0(%arg0: i32) -> (i32, i32, i32) {
    %c0_i32 = arith.constant 0 : i32
    %c0_i32_0 = arith.constant 0 : i32
    %c0_i32_1 = arith.constant 0 : i32
    return %arg0, %c0_i32, %c0_i32_0 : i32, i32, i32
  }
  func.func @transform_1(%arg0: i32) -> (i32, i32) {
    %c0_i32 = arith.constant 0 : i32
    %c0_i32_0 = arith.constant 0 : i32
    %c0_i32_1 = arith.constant 0 : i32
    return %c0_i32, %c0_i32_0 : i32, i32
  }
  func.func @transform_2(%arg0: i32) -> (i32, i32) {
    %c0_i32 = arith.constant 0 : i32
    %c0_i32_0 = arith.constant 0 : i32
    %c0_i32_1 = arith.constant 0 : i32
    return %c0_i32, %c0_i32_0 : i32, i32
  }
  func.func @transform_3(%arg0: i32) -> (i32, i32, i32) {
    %c0_i32 = arith.constant 0 : i32
    %c0_i32_0 = arith.constant 0 : i32
    %c0_i32_1 = arith.constant 0 : i32
    return %arg0, %c0_i32, %c0_i32_0 : i32, i32, i32
  }
}

module attributes {stable_mosaic.version = 11 : i64} {
  func.func @_attention_kernel(%arg0: i32, %arg1: memref<1x16x64xbf16, #tpu.memory_space<vmem>>, %arg2: memref<64x320xbf16, #tpu.memory_space<vmem>>, %arg3: memref<1x320xf32, #tpu.memory_space<vmem>>, %arg4: memref<1x1xf32, #tpu.memory_space<smem>>, %arg5: memref<1x16x64xbf16, #tpu.memory_space<vmem>>) attributes {dimension_semantics = [#tpu.dimension_semantics<parallel>], iteration_bounds = array<i64: 2>, scalar_prefetch = 0 : i64, scratch_operands = 0 : i64, tpu.core_type = #tpu.core_type<tc>, window_params = [{transform_indices = @transform_0, window_bounds = array<i64: 1, 16, 64>}, {pipeline_mode = #tpu.pipeline_mode<synchronous>, transform_indices = @transform_1, window_bounds = array<i64: 64, 320>}, {pipeline_mode = #tpu.pipeline_mode<synchronous>, transform_indices = @transform_2, window_bounds = array<i64: 1, 320>}, {transform_indices = @transform_3, window_bounds = array<i64: 1, 1>}, {transform_indices = @transform_4, window_bounds = array<i64: 1, 16, 64>}]} {
    %c0 = arith.constant 0 : index
    %c0_0 = arith.constant 0 : index
    %c0_1 = arith.constant 0 : index
    %0 = vector.load %arg1[%c0, %c0_0, %c0_1] : memref<1x16x64xbf16, #tpu.memory_space<vmem>>, vector<1x16x64xbf16>
    %1 = vector.shape_cast %0 : vector<1x16x64xbf16> to vector<16x64xbf16>
    %c0_2 = arith.constant 0 : index
    %c0_3 = arith.constant 0 : index
    %2 = vector.load %arg2[%c0_2, %c0_3] : memref<64x320xbf16, #tpu.memory_space<vmem>>, vector<64x320xbf16>
    %cst = arith.constant dense<0.000000e+00> : vector<16x320xf32>
    %3 = tpu.matmul %1, %2, %cst {dimension_numbers = #tpu.dot_dimension_numbers<[1], [0], [0], [1], [0, 0, 1, 1], [], []>} : vector<16x64xbf16>, vector<64x320xbf16>, vector<16x320xf32> -> vector<16x320xf32>
    %c0_4 = arith.constant 0 : index
    %c0_5 = arith.constant 0 : index
    %4 = vector.load %arg3[%c0_4, %c0_5] : memref<1x320xf32, #tpu.memory_space<vmem>>, vector<1x320xf32>
    %5 = vector.broadcast %4 : vector<1x320xf32> to vector<16x320xf32>
    %6 = arith.addf %3, %5 : vector<16x320xf32>
    %7 = vector.extract_strided_slice %6 {offsets = [0, 0], sizes = [16, 128], strides = [1, 1]} : vector<16x320xf32> to vector<16x128xf32>
    %8 = arith.truncf %7 : vector<16x128xf32> to vector<16x128xbf16>
    %9 = vector.extract_strided_slice %6 {offsets = [0, 128], sizes = [16, 128], strides = [1, 1]} : vector<16x320xf32> to vector<16x128xf32>
    %10 = arith.truncf %9 : vector<16x128xf32> to vector<16x128xbf16>
    %11 = vector.extract_strided_slice %6 {offsets = [0, 256], sizes = [16, 64], strides = [1, 1]} : vector<16x320xf32> to vector<16x64xf32>
    %12 = arith.truncf %11 : vector<16x64xf32> to vector<16x64xbf16>
    %cst_6 = arith.constant dense<0.000000e+00> : vector<16x16xf32>
    %13 = tpu.matmul %8, %10, %cst_6 {dimension_numbers = #tpu.dot_dimension_numbers<[1], [1], [0], [0], [0, 0, 1, 0], [], []>} : vector<16x128xbf16>, vector<16x128xbf16>, vector<16x16xf32> -> vector<16x16xf32>
    %cst_7 = arith.constant 0.353553385 : f32
    %14 = vector.broadcast %cst_7 : f32 to vector<16x16xf32>
    %15 = arith.mulf %13, %14 : vector<16x16xf32>
    %cst_8 = arith.constant dense<0xFF800000> : vector<16xf32>
    %16 = vector.multi_reduction <maximumf>, %15, %cst_8 [1] : vector<16x16xf32> to vector<16xf32>
    %17 = vector.shape_cast %16 : vector<16xf32> to vector<16x1xf32>
    %18 = vector.broadcast %17 : vector<16x1xf32> to vector<16x16xf32>
    %19 = arith.subf %15, %18 : vector<16x16xf32>
    %20 = math.exp %19 : vector<16x16xf32>
    %cst_9 = arith.constant dense<0.000000e+00> : vector<16xf32>
    %21 = vector.multi_reduction <add>, %20, %cst_9 [1] : vector<16x16xf32> to vector<16xf32>
    %22 = vector.shape_cast %21 : vector<16xf32> to vector<16x1xf32>
    %23 = tpu.reciprocal %22 {approx = true} : vector<16x1xf32> -> vector<16x1xf32>
    %24 = vector.broadcast %23 : vector<16x1xf32> to vector<16x16xf32>
    %25 = arith.mulf %20, %24 : vector<16x16xf32>
    %26 = arith.truncf %25 : vector<16x16xf32> to vector<16x16xbf16>
    %cst_10 = arith.constant dense<0.000000e+00> : vector<16x64xf32>
    %27 = tpu.matmul %26, %12, %cst_10 {dimension_numbers = #tpu.dot_dimension_numbers<[1], [0], [0], [1], [0, 0, 1, 1], [], []>} : vector<16x16xbf16>, vector<16x64xbf16>, vector<16x64xf32> -> vector<16x64xf32>
    %c0_11 = arith.constant 0 : index
    %c0_12 = arith.constant 0 : index
    %28 = memref.load %arg4[%c0_11, %c0_12] : memref<1x1xf32, #tpu.memory_space<smem>>
    %29 = vector.broadcast %28 : f32 to vector<16x64xf32>
    %30 = arith.mulf %29, %27 : vector<16x64xf32>
    %31 = arith.extf %1 : vector<16x64xbf16> to vector<16x64xf32>
    %32 = arith.addf %30, %31 : vector<16x64xf32>
    %33 = arith.truncf %32 : vector<16x64xf32> to vector<16x64xbf16>
    %c0_13 = arith.constant 0 : index
    %c0_14 = arith.constant 0 : index
    %c0_15 = arith.constant 0 : index
    %34 = vector.load %arg5[%c0_13, %c0_14, %c0_15] : memref<1x16x64xbf16, #tpu.memory_space<vmem>>, vector<1x16x64xbf16>
    %35 = vector.shape_cast %34 : vector<1x16x64xbf16> to vector<16x64xbf16>
    %36 = vector.shape_cast %33 : vector<16x64xbf16> to vector<1x16x64xbf16>
    tpu.vector_store %arg5[%c0_13, %c0_14, %c0_15], %36 {strides = array<i32>} : memref<1x16x64xbf16, #tpu.memory_space<vmem>>, vector<1x16x64xbf16>,
    return
  }
  func.func @transform_0(%arg0: i32) -> (i32, i32, i32) {
    %c0_i32 = arith.constant 0 : i32
    %c0_i32_0 = arith.constant 0 : i32
    %c0_i32_1 = arith.constant 0 : i32
    return %arg0, %c0_i32, %c0_i32_0 : i32, i32, i32
  }
  func.func @transform_1(%arg0: i32) -> (i32, i32) {
    %c0_i32 = arith.constant 0 : i32
    %c0_i32_0 = arith.constant 0 : i32
    %c0_i32_1 = arith.constant 0 : i32
    return %c0_i32, %c0_i32_0 : i32, i32
  }
  func.func @transform_2(%arg0: i32) -> (i32, i32) {
    %c0_i32 = arith.constant 0 : i32
    %c0_i32_0 = arith.constant 0 : i32
    %c0_i32_1 = arith.constant 0 : i32
    return %c0_i32, %c0_i32_0 : i32, i32
  }
  func.func @transform_3(%arg0: i32) -> (i32, i32) {
    %c0_i32 = arith.constant 0 : i32
    %c0_i32_0 = arith.constant 0 : i32
    %c0_i32_1 = arith.constant 0 : i32
    return %c0_i32, %c0_i32_0 : i32, i32
  }
  func.func @transform_4(%arg0: i32) -> (i32, i32, i32) {
    %c0_i32 = arith.constant 0 : i32
    %c0_i32_0 = arith.constant 0 : i32
    %c0_i32_1 = arith.constant 0 : i32
    return %arg0, %c0_i32, %c0_i32_0 : i32, i32, i32
  }
}

module attributes {stable_mosaic.version = 11 : i64} {
  func.func @_conv_fused_kernel(%arg0: i32, %arg1: memref<1x128x1024xbf16, #tpu.memory_space<vmem>>, %arg2: memref<1x1024xbf16, #tpu.memory_space<vmem>>, %arg3: memref<1x1xf32, #tpu.memory_space<vmem>>, %arg4: memref<1x1x128xf32, #tpu.memory_space<vmem>>) attributes {dimension_semantics = [#tpu.dimension_semantics<parallel>], iteration_bounds = array<i64: 2>, scalar_prefetch = 0 : i64, scratch_operands = 0 : i64, tpu.core_type = #tpu.core_type<tc>, window_params = [{transform_indices = @transform_0, window_bounds = array<i64: 1, 128, 1024>}, {pipeline_mode = #tpu.pipeline_mode<synchronous>, transform_indices = @transform_1, window_bounds = array<i64: 1, 1024>}, {pipeline_mode = #tpu.pipeline_mode<synchronous>, transform_indices = @transform_2, window_bounds = array<i64: 1, 1>}, {transform_indices = @transform_3, window_bounds = array<i64: 1, 1, 128>}]} {
    %c0 = arith.constant 0 : index
    %c0_0 = arith.constant 0 : index
    %c0_1 = arith.constant 0 : index
    %0 = vector.load %arg1[%c0, %c0_0, %c0_1] : memref<1x128x1024xbf16, #tpu.memory_space<vmem>>, vector<1x128x1024xbf16>
    %1 = vector.shape_cast %0 : vector<1x128x1024xbf16> to vector<128x1024xbf16>
    %c0_2 = arith.constant 0 : index
    %c0_3 = arith.constant 0 : index
    %2 = vector.load %arg2[%c0_2, %c0_3] : memref<1x1024xbf16, #tpu.memory_space<vmem>>, vector<1x1024xbf16>
    %cst = arith.constant dense<0.000000e+00> : vector<1x128xf32>
    %3 = tpu.matmul %2, %1, %cst {dimension_numbers = #tpu.dot_dimension_numbers<[1], [1], [0], [0], [0, 0, 1, 0], [], []>} : vector<1x1024xbf16>, vector<128x1024xbf16>, vector<1x128xf32> -> vector<1x128xf32>
    %c0_4 = arith.constant 0 : index
    %c0_5 = arith.constant 0 : index
    %4 = vector.load %arg3[%c0_4, %c0_5] : memref<1x1xf32, #tpu.memory_space<vmem>>, vector<1x1xf32>
    %5 = vector.broadcast %4 : vector<1x1xf32> to vector<1x128xf32>
    %6 = arith.addf %3, %5 : vector<1x128xf32>
    %c0_6 = arith.constant 0 : index
    %c0_7 = arith.constant 0 : index
    %c0_8 = arith.constant 0 : index
    %7 = vector.load %arg4[%c0_6, %c0_7, %c0_8] : memref<1x1x128xf32, #tpu.memory_space<vmem>>, vector<1x1x128xf32>
    %8 = vector.shape_cast %7 : vector<1x1x128xf32> to vector<1x128xf32>
    %9 = vector.shape_cast %6 : vector<1x128xf32> to vector<1x1x128xf32>
    tpu.vector_store %arg4[%c0_6, %c0_7, %c0_8], %9 {strides = array<i32>} : memref<1x1x128xf32, #tpu.memory_space<vmem>>, vector<1x1x128xf32>,
    return
  }
  func.func @transform_0(%arg0: i32) -> (i32, i32, i32) {
    %c0_i32 = arith.constant 0 : i32
    %c0_i32_0 = arith.constant 0 : i32
    %c0_i32_1 = arith.constant 0 : i32
    return %arg0, %c0_i32, %c0_i32_0 : i32, i32, i32
  }
  func.func @transform_1(%arg0: i32) -> (i32, i32) {
    %c0_i32 = arith.constant 0 : i32
    %c0_i32_0 = arith.constant 0 : i32
    %c0_i32_1 = arith.constant 0 : i32
    return %c0_i32, %c0_i32_0 : i32, i32
  }
  func.func @transform_2(%arg0: i32) -> (i32, i32) {
    %c0_i32 = arith.constant 0 : i32
    %c0_i32_0 = arith.constant 0 : i32
    %c0_i32_1 = arith.constant 0 : i32
    return %c0_i32, %c0_i32_0 : i32, i32
  }
  func.func @transform_3(%arg0: i32) -> (i32, i32, i32) {
    %c0_i32 = arith.constant 0 : i32
    %c0_i32_0 = arith.constant 0 : i32
    %c0_i32_1 = arith.constant 0 : i32
    return %arg0, %c0_i32, %c0_i32_0 : i32, i32, i32
  }
}

</mosaic_0001>

<llo_original>
// kernel: discriminator_forward.7
$region0: #{discriminator_forward.7}
  #allocation0 [shape = 'u32[]', space=smem, size = 0x4, offset = 0x4, fixed_abs, tag = 'smem constant byte address 0x4 - core index']
  #allocation1 [shape = 'u32[144,128]{1,0:T(1,128)}', space=vmem, size = 0x12000, scoped, tag = 'internal scratch']
  %s0 = inlined_call_operand.vmem [shape: bf16[2,1024,16], index: 0, kind: input, shape index: {}]
  %s1 = inlined_call_operand.vmem [shape: bf16[16,8], index: 1, kind: input, shape index: {}]
  %s2 = inlined_call_operand.vmem [shape: f32[1,8], index: 2, kind: input, shape index: {}]
  %s3 = inlined_call_operand.vmem [shape: bf16[2,1024,8], index: 3, kind: output, shape index: {}]
  %s4 = sld [smem:[#allocation0]]
  $region45: #{discriminator_forward.7} parent=0
    _
  %s6 = ssub.s32 1, %s4
  %s7 = scalar_select 0, %s6, %s4
  loop: start=0, step=1, limit=18
  $region2: #{discriminator_forward.7} parent=0 // loop_pre_header
    _
  $region3: #{discriminator_forward.7} parent=0 // loop_header
    %s9 = sphi 0, %s13
    %p10 = scmp.ge.s32.totalorder %s9, 18
    %s16 = sphi 0, %s28
    %s17 = sphi 0, %s24
    %s18 = sphi 0, %s16
    %s19 = sphi 0, %s17
    %s20 = sphi 0, %s18
    %s21 = sphi 0, %s19
    %s33 = sphi 0, %s35
    %s36 = sphi 0, %s33
    %s37 = sphi 0, %s36
    %s53 = sphi 0, %s37
    %s57 = sphi 0, %s57
    %s59 = sphi 0, %s57
    %s60 = sphi 0, %s59
    %s74 = sphi 0, %s60
    %s78 = sphi 0, %s78
    %s80 = sphi 0, %s78
    %s81 = sphi 0, %s80
    %s95 = sphi 0, %s81
    %s103 = sphi 0, %s105
    %s106 = sphi 0, %s103
    %s107 = sphi 0, %s106
    %s123 = sphi 0, %s107
  $region4: #{discriminator_forward.7} parent=0 // loop_header_branch
    %12 = sbr.rel (%p10) target = $region8
  $region5: #{discriminator_forward.7} parent=0 // loop_body
    %s14 = ssub.s32 %s9, 1
    %s15 = ssub.s32 %s9, 2
    %s22 = sadd.s32 1, %s17
    %p23 = scmp.ge.s32.totalorder %s22, 8
    %s24 = scalar_select %p23, 0, %s22
    %s25 = sadd.s32 1, %s16
    %s26 = scalar_select %p23, %s25, %s16
    %p27 = scmp.ge.s32.totalorder %s26, 2
    %s28 = scalar_select %p27, 0, %s26
    %s29 = ssub.s32 %s16, %s28
    %s30 = ssub.s32 %s17, %s24
    %s31 = sor.u32 %s29, %s30
    %p32 = scmp.eq.s32.totalorder %s31, 0
    %s34 = sadd.s32 %s33, 1
    %s35 = scalar_select %p32, %s33, %s34
    %p38 = pneg %p32
    %p39 = scmp.eq.s32.totalorder %s9, 15
    %p40 = por %p38, %p39
    %p41 = scmp.ne.s32.totalorder %s33, %s36
    %p42 = scmp.eq.s32.totalorder %s9, 0
    %p43 = por %p41, %p42
    %p44 = scmp.ne.s32.totalorder %s33, %s36
    %p45 = scmp.eq.s32.totalorder %s14, 15
    %p46 = por %p44, %p45
    %p47 = scmp.ne.s32.totalorder %s36, %s37
    %p48 = scmp.eq.s32.totalorder %s14, 0
    %p49 = por %p47, %p48
    %p50 = scmp.ne.s32.totalorder %s36, %s37
    %p51 = scmp.eq.s32.totalorder %s15, 15
    %p52 = por %p50, %p51
    %p54 = scmp.ne.s32.totalorder %s37, %s53
    %p55 = scmp.eq.s32.totalorder %s15, 0
    %p56 = por %p54, %p55
    %s58 = sadd.s32 %s57, 1
    %p61 = scmp.eq.s32.totalorder %s9, 15
    %p62 = scmp.ne.s32.totalorder %s57, %s59
    %p63 = scmp.eq.s32.totalorder %s9, 0
    %p64 = por %p62, %p63
    %p65 = scmp.ne.s32.totalorder %s57, %s59
    %p66 = scmp.eq.s32.totalorder %s14, 15
    %p67 = por %p65, %p66
    %p68 = scmp.ne.s32.totalorder %s59, %s60
    %p69 = scmp.eq.s32.totalorder %s14, 0
    %p70 = por %p68, %p69
    %p71 = scmp.ne.s32.totalorder %s59, %s60
    %p72 = scmp.eq.s32.totalorder %s15, 15
    %p73 = por %p71, %p72
    %p75 = scmp.ne.s32.totalorder %s60, %s74
    %p76 = scmp.eq.s32.totalorder %s15, 0
    %p77 = por %p75, %p76
    %s79 = sadd.s32 %s78, 1
    %p82 = scmp.eq.s32.totalorder %s9, 15
    %p83 = scmp.ne.s32.totalorder %s78, %s80
    %p84 = scmp.eq.s32.totalorder %s9, 0
    %p85 = por %p83, %p84
    %p86 = scmp.ne.s32.totalorder %s78, %s80
    %p87 = scmp.eq.s32.totalorder %s14, 15
    %p88 = por %p86, %p87
    %p89 = scmp.ne.s32.totalorder %s80, %s81
    %p90 = scmp.eq.s32.totalorder %s14, 0
    %p91 = por %p89, %p90
    %p92 = scmp.ne.s32.totalorder %s80, %s81
    %p93 = scmp.eq.s32.totalorder %s15, 15
    %p94 = por %p92, %p93
    %p96 = scmp.ne.s32.totalorder %s81, %s95
    %p97 = scmp.eq.s32.totalorder %s15, 0
    %p98 = por %p96, %p97
    %s99 = ssub.s32 %s16, %s28
    %s100 = ssub.s32 %s17, %s24
    %s101 = sor.u32 %s99, %s100
    %p102 = scmp.eq.s32.totalorder %s101, 0
    %s104 = sadd.s32 %s103, 1
    %s105 = scalar_select %p102, %s103, %s104
    %p108 = pneg %p102
    %p109 = scmp.eq.s32.totalorder %s9, 15
    %p110 = por %p108, %p109
    %p111 = scmp.ne.s32.totalorder %s103, %s106
    %p112 = scmp.eq.s32.totalorder %s9, 0
    %p113 = por %p111, %p112
    %p114 = scmp.ne.s32.totalorder %s103, %s106
    %p115 = scmp.eq.s32.totalorder %s14, 15
    %p116 = por %p114, %p115
    %p117 = scmp.ne.s32.totalorder %s106, %s107
    %p118 = scmp.eq.s32.totalorder %s14, 0
    %p119 = por %p117, %p118
    %p120 = scmp.ne.s32.totalorder %s106, %s107
    %p121 = scmp.eq.s32.totalorder %s15, 15
    %p122 = por %p120, %p121
    %p124 = scmp.ne.s32.totalorder %s107, %s123
    %p125 = scmp.eq.s32.totalorder %s15, 0
    %p126 = por %p124, %p125
    %p127 = scmp.le.s32.totalorder 1, %s9
    %p128 = scmp.lt.s32.totalorder %s9, 17
    %p129 = pnand %p127, %p128
    %p130 = pneg %p129
    // Predicated region
    $region9: #{discriminator_forward.7} parent=5 // pred_check
      _
    $region10: #{discriminator_forward.7} parent=5 // pred_check_branch
      %132 = sbr.rel (%p129) target = $region12
    $region11: #{discriminator_forward.7} parent=5 // pred_region
      %s133 = ssub.s32 %s9, 1
      // Predicated region
      $region13: #{discriminator_forward.7} parent=11 // pred_check
        %p134 = pneg %p70
      $region14: #{discriminator_forward.7} parent=11 // pred_check_branch
        %136 = sbr.rel (%p134) target = $region16
      $region15: #{discriminator_forward.7} parent=11 // pred_region
        _
      $region16: #{discriminator_forward.7} parent=11 // pred_fallthru
        _
      // Predicated region
      $region17: #{discriminator_forward.7} parent=11 // pred_check
        %p137 = pneg %p91
      $region18: #{discriminator_forward.7} parent=11 // pred_check_branch
        %139 = sbr.rel (%p137) target = $region20
      $region19: #{discriminator_forward.7} parent=11 // pred_region
        _
      $region20: #{discriminator_forward.7} parent=11 // pred_fallthru
        _
    $region12: #{discriminator_forward.7} parent=5 // pred_fallthru
      _
    %p140 = scmp.lt.s32.totalorder %s9, 16
    // Predicated region
    $region21: #{discriminator_forward.7} parent=5 // pred_check
      %p141 = pneg %p140
    $region22: #{discriminator_forward.7} parent=5 // pred_check_branch
      %143 = sbr.rel (%p141) target = $region24
    $region23: #{discriminator_forward.7} parent=5 // pred_region
      // Predicated region
      $region25: #{discriminator_forward.7} parent=23 // pred_check
        %p144 = pneg %p43
      $region26: #{discriminator_forward.7} parent=23 // pred_check_branch
        %146 = sbr.rel (%p144) target = $region28
      $region27: #{discriminator_forward.7} parent=23 // pred_region
        %s147 = smul.u32 16, %s17
        %p148 = scmp.lt.s32.totalorder %s16, 1
        %s149 = scalar_select %p148, %s16, 1
        %p150 = scmp.lt.s32.totalorder %s147, 127
        %s151 = scalar_select %p150, %s147, 127
        %s152 = smul.addr %s149, 128
        %s153 = sadd.s32 %s151, %s152
        %s154 = smul.addr %s153, 4
        %s155 = scalar_lea.vmem %s0, %s154
        %s156 = smul.u32 16, %s17
      $region28: #{discriminator_forward.7} parent=23 // pred_fallthru
        _
    $region24: #{discriminator_forward.7} parent=5 // pred_fallthru
      _
    %p157 = scmp.le.s32.totalorder 1, %s9
    %p158 = scmp.lt.s32.totalorder %s9, 17
    %p159 = pnand %p157, %p158
    %p160 = pneg %p159
    // Predicated region
    $region29: #{discriminator_forward.7} parent=5 // pred_check
      _
    $region30: #{discriminator_forward.7} parent=5 // pred_check_branch
      %162 = sbr.rel (%p159) target = $region32
    $region31: #{discriminator_forward.7} parent=5 // pred_region
      %s163 = ssub.s32 %s9, 1
      %s164 = smul.u32 16, %s19
      %p165 = scmp.lt.s32.totalorder %s18, 1
      %s166 = scalar_select %p165, %s18, 1
      %p167 = scmp.lt.s32.totalorder %s164, 127
      %s168 = scalar_select %p167, %s164, 127
      %s169 = smul.addr %s166, 128
      %s170 = sadd.s32 %s168, %s169
      %s171 = smul.addr %s170, 4
      %s172 = scalar_lea.vmem %s0, %s171
      %p173 = pneg %p49
      %p174 = pneg %p46
      %p175 = pneg %p70
      %p176 = pneg %p67
      %p177 = pneg %p91
      %p178 = pneg %p88
      %p179 = pneg %p119
      %p180 = pneg %p116
      %s181 = smul.u32 16, %s19
      %p182 = scmp.lt.s32.totalorder %s18, 1
      %s183 = scalar_select %p182, %s18, 1
      %p184 = scmp.lt.s32.totalorder %s181, 127
      %s185 = scalar_select %p184, %s181, 127
      %s186 = smul.addr %s183, 128
      %s187 = sadd.s32 %s185, %s186
      %s188 = smul.addr %s187, 4
      %s189 = scalar_lea.vmem %s3, %s188
      %s190 = smul.u32 16, %s19
      %p191 = scmp.lt.s32.totalorder %s18, 1
      %s192 = scalar_select %p191, %s18, 1
      %p193 = scmp.lt.s32.totalorder %s190, 127
      %s194 = scalar_select %p193, %s190, 127
      %s195 = smul.addr %s192, 128
      %s196 = sadd.s32 %s194, %s195
      %s197 = smul.addr %s196, 4
      %s198 = scalar_lea.vmem %s0, %s197
      %s199 = smul.u32 16, %s19
      %s200 = smul.u32 16, %s19
      %p201 = scmp.lt.s32.totalorder %s18, 1
      %s202 = scalar_select %p201, %s18, 1
      %p203 = scmp.lt.s32.totalorder %s200, 127
      %s204 = scalar_select %p203, %s200, 127
      %s205 = smul.addr %s202, 128
      %s206 = sadd.s32 %s204, %s205
      %s207 = smul.addr %s206, 4
      %s208 = scalar_lea.vmem %s3, %s207
      %s209 = smul.u32 16, %s19
      %v211 = vld [vmem:[%s198] sm:$0xf]
      %v212 = vld [vmem:[%s198 + $0x4] sm:$0xf]
      %v213 = vld [vmem:[%s198 + $0x8] sm:$0xf]
      %v214 = vld [vmem:[%s198 + $0xc] sm:$0xf]
      %v215 = vld [vmem:[%s198 + $0x10] sm:$0xf]
      %v216 = vld [vmem:[%s198 + $0x14] sm:$0xf]
      %v217 = vld [vmem:[%s198 + $0x18] sm:$0xf]
      %v218 = vld [vmem:[%s198 + $0x1c] sm:$0xf]
      %v219 = vld [vmem:[%s198 + $0x20] sm:$0xf]
      %v220 = vld [vmem:[%s198 + $0x24] sm:$0xf]
      %v221 = vld [vmem:[%s198 + $0x28] sm:$0xf]
      %v222 = vld [vmem:[%s198 + $0x2c] sm:$0xf]
      %v223 = vld [vmem:[%s198 + $0x30] sm:$0xf]
      %v224 = vld [vmem:[%s198 + $0x34] sm:$0xf]
      %v225 = vld [vmem:[%s198 + $0x38] sm:$0xf]
      %v226 = vld [vmem:[%s198 + $0x3c] sm:$0xf]
      %v227 = vld [vmem:[%s1] sm:$0xf]
      %v228 = vld [vmem:[%s1 + $0x4] sm:$0xf]
      %v229 = vld [vmem:[%s2] sm:$0x1]
      %v231 = vlaneseq
      %v232 = vshrl.u32 %v231, 7
      %v233 = vsub.s32 0, %v232
      %v234 = vrot.slane %v229, %v233
      %v252 = vunpack.c.l.b16 %v211
      %v253 = vunpack.c.l.b16 %v212
      %v254 = vunpack.c.l.b16 %v213
      %v255 = vunpack.c.l.b16 %v214
      %v256 = vunpack.c.l.b16 %v215
      %v257 = vunpack.c.l.b16 %v216
      %v258 = vunpack.c.l.b16 %v217
      %v259 = vunpack.c.l.b16 %v218
      %v260 = vunpack.c.l.b16 %v219
      %v261 = vunpack.c.l.b16 %v220
      %v262 = vunpack.c.l.b16 %v221
      %v263 = vunpack.c.l.b16 %v222
      %v264 = vunpack.c.l.b16 %v223
      %v265 = vunpack.c.l.b16 %v224
      %v266 = vunpack.c.l.b16 %v225
      %v267 = vunpack.c.l.b16 %v226
      %v268 = vpack.c.b16 %v253, %v252
      %v269 = vpack.c.b16 %v255, %v254
      %v270 = vpack.c.b16 %v257, %v256
      %v271 = vpack.c.b16 %v259, %v258
      %v272 = vpack.c.b16 %v261, %v260
      %v273 = vpack.c.b16 %v263, %v262
      %v274 = vpack.c.b16 %v265, %v264
      %v275 = vpack.c.b16 %v267, %v266
      %v278 = vunpack.c.l.b16 %v227
      %v279 = vunpack.c.l.b16 %v228
      %v280 = vpack.c.b16 %v279, %v278
      %vm282 = vcmask 130048
      %v284 = vsel %vm282, %v268, 0
      %v287 = vsel %vm282, %v269, 0
      %v290 = vsel %vm282, %v270, 0
      %v293 = vsel %vm282, %v271, 0
      %v296 = vsel %vm282, %v272, 0
      %v299 = vsel %vm282, %v273, 0
      %v302 = vsel %vm282, %v274, 0
      %v305 = vsel %vm282, %v275, 0
      %307 = vmatprep.subr.bf16.mxu0 0
      %308 = vmatpush1.bf16.msra.mxu0 0
      %309 = vmatprep.subr.bf16.mxu0 0
      %310 = vmatpush1.bf16.msra.mxu0 0
      %311 = vmatprep.subr.bf16.mxu0 0
      %312 = vmatpush1.bf16.msra.mxu0 0
      %313 = vmatprep.subr.bf16.mxu0 0
      %314 = vmatpush1.bf16.msra.mxu0 0
      %315 = vmatprep.subr.bf16.mxu0 0
      %316 = vmatpush1.bf16.msra.mxu0 0
      %317 = vmatprep.subr.bf16.mxu0 0
      %318 = vmatpush1.bf16.msra.mxu0 0
      %319 = vmatprep.subr.bf16.mxu0 0
      %320 = vmatpush1.bf16.msra.mxu0 0
      %321 = vmatprep.subr.bf16.mxu0 0
      %322 = vmatpush1.bf16.msra.mxu0 %v280
      %323 = vmatprep.subr.bf16.mxu0 0
      %324 = vmatpush2.bf16.msra.mxu0 0
      %325 = vmatprep.subr.bf16.mxu0 0
      %326 = vmatpush2.bf16.msra.mxu0 0
      %327 = vmatprep.subr.bf16.mxu0 0
      %328 = vmatpush2.bf16.msra.mxu0 0
      %329 = vmatprep.subr.bf16.mxu0 0
      %330 = vmatpush2.bf16.msra.mxu0 0
      %331 = vmatprep.subr.bf16.mxu0 0
      %332 = vmatpush2.bf16.msra.mxu0 0
      %333 = vmatprep.subr.bf16.mxu0 0
      %334 = vmatpush2.bf16.msra.mxu0 0
      %335 = vmatprep.subr.bf16.mxu0 0
      %336 = vmatpush2.bf16.msra.mxu0 0
      %337 = vmatprep.subr.bf16.mxu0 0
      %338 = vmatpush2.bf16.msra.mxu0 0
      %339 = vmatprep.mubr.bf16.mxu0 0
      %340 = vmatmul.mubr.bf16.gmra.mxu0 %v284
      %v341 = vpop.f32.mrf.mxu0
      %v342 = vadd.f32 %v234, %v341
      %v343 = vpop.f32.mrf.mxu0
      %v344 = vpop.f32.mrf.mxu0
      %v345 = vadd.f32 %v234, %v344
      %v346 = vpop.f32.mrf.mxu0
      %347 = vmatprep.mubr.bf16.mxu0 0
      %348 = vmatmul.mubr.bf16.gmra.mxu0 %v287
      %v349 = vpop.f32.mrf.mxu0
      %v350 = vadd.f32 %v234, %v349
      %v351 = vpop.f32.mrf.mxu0
      %v352 = vpop.f32.mrf.mxu0
      %v353 = vadd.f32 %v234, %v352
      %v354 = vpop.f32.mrf.mxu0
      %355 = vmatprep.mubr.bf16.mxu0 0
      %356 = vmatmul.mubr.bf16.gmra.mxu0 %v290
      %v357 = vpop.f32.mrf.mxu0
      %v358 = vadd.f32 %v234, %v357
      %v359 = vpop.f32.mrf.mxu0
      %v360 = vpop.f32.mrf.mxu0
      %v361 = vadd.f32 %v234, %v360
      %v362 = vpop.f32.mrf.mxu0
      %363 = vmatprep.mubr.bf16.mxu0 0
      %364 = vmatmul.mubr.bf16.gmra.mxu0 %v293
      %v365 = vpop.f32.mrf.mxu0
      %v366 = vadd.f32 %v234, %v365
      %v367 = vpop.f32.mrf.mxu0
      %v368 = vpop.f32.mrf.mxu0
      %v369 = vadd.f32 %v234, %v368
      %v370 = vpop.f32.mrf.mxu0
      %371 = vmatprep.mubr.bf16.mxu0 0
      %372 = vmatmul.mubr.bf16.gmra.mxu0 %v296
      %v373 = vpop.f32.mrf.mxu0
      %v374 = vadd.f32 %v234, %v373
      %v375 = vpop.f32.mrf.mxu0
      %v376 = vpop.f32.mrf.mxu0
      %v377 = vadd.f32 %v234, %v376
      %v378 = vpop.f32.mrf.mxu0
      %379 = vmatprep.mubr.bf16.mxu0 0
      %380 = vmatmul.mubr.bf16.gmra.mxu0 %v299
      %v381 = vpop.f32.mrf.mxu0
      %v382 = vadd.f32 %v234, %v381
      %v383 = vpop.f32.mrf.mxu0
      %v384 = vpop.f32.mrf.mxu0
      %v385 = vadd.f32 %v234, %v384
      %v386 = vpop.f32.mrf.mxu0
      %387 = vmatprep.mubr.bf16.mxu0 0
      %388 = vmatmul.mubr.bf16.gmra.mxu0 %v302
      %v389 = vpop.f32.mrf.mxu0
      %v390 = vadd.f32 %v234, %v389
      %v391 = vpop.f32.mrf.mxu0
      %v392 = vpop.f32.mrf.mxu0
      %v393 = vadd.f32 %v234, %v392
      %v394 = vpop.f32.mrf.mxu0
      %395 = vmatprep.mubr.bf16.mxu0 0
      %396 = vmatmul.mubr.bf16.gmra.mxu0 %v305
      %v397 = vpop.f32.mrf.mxu0
      %v398 = vadd.f32 %v234, %v397
      %v399 = vpop.f32.mrf.mxu0
      %v400 = vpop.f32.mrf.mxu0
      %v401 = vadd.f32 %v234, %v400
      %v402 = vpop.f32.mrf.mxu0
      %403 = vdwg.mxu0
      %vm404 = vcmp.ge.f32.partialorder %v342, 0.0
      %vm405 = vcmp.ge.f32.partialorder %v345, 0.0
      %vm406 = vcmp.ge.f32.partialorder %v350, 0.0
      %vm407 = vcmp.ge.f32.partialorder %v353, 0.0
      %vm408 = vcmp.ge.f32.partialorder %v358, 0.0
      %vm409 = vcmp.ge.f32.partialorder %v361, 0.0
      %vm410 = vcmp.ge.f32.partialorder %v366, 0.0
      %vm411 = vcmp.ge.f32.partialorder %v369, 0.0
      %vm412 = vcmp.ge.f32.partialorder %v374, 0.0
      %vm413 = vcmp.ge.f32.partialorder %v377, 0.0
      %vm414 = vcmp.ge.f32.partialorder %v382, 0.0
      %vm415 = vcmp.ge.f32.partialorder %v385, 0.0
      %vm416 = vcmp.ge.f32.partialorder %v390, 0.0
      %vm417 = vcmp.ge.f32.partialorder %v393, 0.0
      %vm418 = vcmp.ge.f32.partialorder %v398, 0.0
      %vm419 = vcmp.ge.f32.partialorder %v401, 0.0
      %v420 = vmul.f32 %v342, 0.2
      %v421 = vmul.f32 %v345, 0.2
      %v422 = vmul.f32 %v350, 0.2
      %v423 = vmul.f32 %v353, 0.2
      %v424 = vmul.f32 %v358, 0.2
      %v425 = vmul.f32 %v361, 0.2
      %v426 = vmul.f32 %v366, 0.2
      %v427 = vmul.f32 %v369, 0.2
      %v428 = vmul.f32 %v374, 0.2
      %v429 = vmul.f32 %v377, 0.2
      %v430 = vmul.f32 %v382, 0.2
      %v431 = vmul.f32 %v385, 0.2
      %v432 = vmul.f32 %v390, 0.2
      %v433 = vmul.f32 %v393, 0.2
      %v434 = vmul.f32 %v398, 0.2
      %v435 = vmul.f32 %v401, 0.2
      %v436 = vsel %vm404, %v342, %v420
      %v437 = vsel %vm405, %v345, %v421
      %v438 = vsel %vm406, %v350, %v422
      %v439 = vsel %vm407, %v353, %v423
      %v440 = vsel %vm408, %v358, %v424
      %v441 = vsel %vm409, %v361, %v425
      %v442 = vsel %vm410, %v366, %v426
      %v443 = vsel %vm411, %v369, %v427
      %v444 = vsel %vm412, %v374, %v428
      %v445 = vsel %vm413, %v377, %v429
      %v446 = vsel %vm414, %v382, %v430
      %v447 = vsel %vm415, %v385, %v431
      %v448 = vsel %vm416, %v390, %v432
      %v449 = vsel %vm417, %v393, %v433
      %v450 = vsel %vm418, %v398, %v434
      %v451 = vsel %vm419, %v401, %v435
      %v452 = vpack.c.bf16 %v437, %v436
      %v453 = vpack.c.bf16 %v439, %v438
      %v454 = vpack.c.bf16 %v441, %v440
      %v455 = vpack.c.bf16 %v443, %v442
      %v456 = vpack.c.bf16 %v445, %v444
      %v457 = vpack.c.bf16 %v447, %v446
      %v458 = vpack.c.bf16 %v449, %v448
      %v459 = vpack.c.bf16 %v451, %v450
      %v468 = vunpack.c.l.b16 %v452
      %v469 = vunpack.c.h.b16 %v452
      %v470 = vunpack.c.l.b16 %v453
      %v471 = vunpack.c.h.b16 %v453
      %v472 = vunpack.c.l.b16 %v454
      %v473 = vunpack.c.h.b16 %v454
      %v474 = vunpack.c.l.b16 %v455
      %v475 = vunpack.c.h.b16 %v455
      %v476 = vunpack.c.l.b16 %v456
      %v477 = vunpack.c.h.b16 %v456
      %v478 = vunpack.c.l.b16 %v457
      %v479 = vunpack.c.h.b16 %v457
      %v480 = vunpack.c.l.b16 %v458
      %v481 = vunpack.c.h.b16 %v458
      %v482 = vunpack.c.l.b16 %v459
      %v483 = vunpack.c.h.b16 %v459
      %v484 = vpack.c.b16 %v468, %v468
      %v485 = vpack.c.b16 %v469, %v469
      %v486 = vpack.c.b16 %v470, %v470
      %v487 = vpack.c.b16 %v471, %v471
      %v488 = vpack.c.b16 %v472, %v472
      %v489 = vpack.c.b16 %v473, %v473
      %v490 = vpack.c.b16 %v474, %v474
      %v491 = vpack.c.b16 %v475, %v475
      %v492 = vpack.c.b16 %v476, %v476
      %v493 = vpack.c.b16 %v477, %v477
      %v494 = vpack.c.b16 %v478, %v478
      %v495 = vpack.c.b16 %v479, %v479
      %v496 = vpack.c.b16 %v480, %v480
      %v497 = vpack.c.b16 %v481, %v481
      %v498 = vpack.c.b16 %v482, %v482
      %v499 = vpack.c.b16 %v483, %v483
      %vm516 = vcmask 60416
      %517 = vst.msk [vmem:[%s208] sm:$0xf] %vm516, %v484
      %518 = vst.msk [vmem:[%s208 + $0x4] sm:$0xf] %vm516, %v485
      %519 = vst.msk [vmem:[%s208 + $0x8] sm:$0xf] %vm516, %v486
      %520 = vst.msk [vmem:[%s208 + $0xc] sm:$0xf] %vm516, %v487
      %521 = vst.msk [vmem:[%s208 + $0x10] sm:$0xf] %vm516, %v488
      %522 = vst.msk [vmem:[%s208 + $0x14] sm:$0xf] %vm516, %v489
      %523 = vst.msk [vmem:[%s208 + $0x18] sm:$0xf] %vm516, %v490
      %524 = vst.msk [vmem:[%s208 + $0x1c] sm:$0xf] %vm516, %v491
      %525 = vst.msk [vmem:[%s208 + $0x20] sm:$0xf] %vm516, %v492
      %526 = vst.msk [vmem:[%s208 + $0x24] sm:$0xf] %vm516, %v493
      %527 = vst.msk [vmem:[%s208 + $0x28] sm:$0xf] %vm516, %v494
      %528 = vst.msk [vmem:[%s208 + $0x2c] sm:$0xf] %vm516, %v495
      %529 = vst.msk [vmem:[%s208 + $0x30] sm:$0xf] %vm516, %v496
      %530 = vst.msk [vmem:[%s208 + $0x34] sm:$0xf] %vm516, %v497
      %531 = vst.msk [vmem:[%s208 + $0x38] sm:$0xf] %vm516, %v498
      %532 = vst.msk [vmem:[%s208 + $0x3c] sm:$0xf] %vm516, %v499
      %s533 = smul.u32 16, %s19
      %p534 = scmp.lt.s32.totalorder %s18, 1
      %s535 = scalar_select %p534, %s18, 1
      %p536 = scmp.lt.s32.totalorder %s533, 127
      %s537 = scalar_select %p536, %s533, 127
      %s538 = smul.addr %s535, 128
      %s539 = sadd.s32 %s537, %s538
      %s540 = smul.addr %s539, 4
      %s541 = scalar_lea.vmem %s3, %s540
      // Predicated region
      $region33: #{discriminator_forward.7} parent=31 // pred_check
        %p542 = pneg %p116
      $region34: #{discriminator_forward.7} parent=31 // pred_check_branch
        %544 = sbr.rel (%p542) target = $region36
      $region35: #{discriminator_forward.7} parent=31 // pred_region
        %s545 = smul.u32 16, %s19
      $region36: #{discriminator_forward.7} parent=31 // pred_fallthru
        _
    $region32: #{discriminator_forward.7} parent=5 // pred_fallthru
      _
    %p546 = scmp.le.s32.totalorder 2, %s9
    // Predicated region
    $region37: #{discriminator_forward.7} parent=5 // pred_check
      %p547 = pneg %p546
    $region38: #{discriminator_forward.7} parent=5 // pred_check_branch
      %549 = sbr.rel (%p547) target = $region40
    $region39: #{discriminator_forward.7} parent=5 // pred_region
      %s550 = ssub.s32 %s9, 2
      // Predicated region
      $region41: #{discriminator_forward.7} parent=39 // pred_check
        %p551 = pneg %p122
      $region42: #{discriminator_forward.7} parent=39 // pred_check_branch
        %553 = sbr.rel (%p551) target = $region44
      $region43: #{discriminator_forward.7} parent=39 // pred_region
        %s554 = smul.u32 16, %s21
        %p555 = scmp.lt.s32.totalorder %s20, 1
        %s556 = scalar_select %p555, %s20, 1
        %p557 = scmp.lt.s32.totalorder %s554, 127
        %s558 = scalar_select %p557, %s554, 127
        %s559 = smul.addr %s556, 128
        %s560 = sadd.s32 %s558, %s559
        %s561 = smul.addr %s560, 4
        %s562 = scalar_lea.vmem %s3, %s561
      $region44: #{discriminator_forward.7} parent=39 // pred_fallthru
        _
    $region40: #{discriminator_forward.7} parent=5 // pred_fallthru
      _
  $region6: #{discriminator_forward.7} parent=0 // loop_footer
    %s13 = sadd.s32 1, %s9
  $region7: #{discriminator_forward.7} parent=0 // loop_footer_branch
    %8 = sbr.rel target = $region3
  $region8: #{discriminator_forward.7} parent=0 // loop_exit
    _

// kernel: discriminator_forward.9
$region0: #{discriminator_forward.9}
  #allocation0 [shape = 'u32[]', space=smem, size = 0x4, offset = 0x4, fixed_abs, tag = 'smem constant byte address 0x4 - core index']
  #allocation1 [shape = 'u32[144,128]{1,0:T(1,128)}', space=vmem, size = 0x12000, scoped, tag = 'internal scratch']
  %s0 = inlined_call_operand.vmem [shape: f32[2,256,16], index: 0, kind: input, shape index: {}]
  %s1 = inlined_call_operand.vmem [shape: f32[2,2,16], index: 1, kind: input, shape index: {}]
  %s2 = inlined_call_operand.vmem [shape: bf16[2,256,16], index: 2, kind: output, shape index: {}]
  %s3 = sld [smem:[#allocation0]]
  $region41: #{discriminator_forward.9} parent=0
    _
  %s5 = ssub.s32 1, %s3
  %s6 = scalar_select 0, %s5, %s3
  loop: start=0, step=1, limit=6
  $region2: #{discriminator_forward.9} parent=0 // loop_pre_header
    _
  $region3: #{discriminator_forward.9} parent=0 // loop_header
    %s8 = sphi 0, %s12
    %p9 = scmp.ge.s32.totalorder %s8, 6
    %s15 = sphi 0, %s27
    %s16 = sphi 0, %s23
    %s17 = sphi 0, %s15
    %s18 = sphi 0, %s16
    %s19 = sphi 0, %s17
    %s20 = sphi 0, %s18
    %s32 = sphi 0, %s34
    %s35 = sphi 0, %s32
    %s36 = sphi 0, %s35
    %s52 = sphi 0, %s36
    %s58 = sphi 0, %s60
    %s61 = sphi 0, %s58
    %s62 = sphi 0, %s61
    %s78 = sphi 0, %s62
    %s86 = sphi 0, %s88
    %s89 = sphi 0, %s86
    %s90 = sphi 0, %s89
    %s106 = sphi 0, %s90
  $region4: #{discriminator_forward.9} parent=0 // loop_header_branch
    %11 = sbr.rel (%p9) target = $region8
  $region5: #{discriminator_forward.9} parent=0 // loop_body
    %s13 = ssub.s32 %s8, 1
    %s14 = ssub.s32 %s8, 2
    %s21 = sadd.s32 1, %s16
    %p22 = scmp.ge.s32.totalorder %s21, 2
    %s23 = scalar_select %p22, 0, %s21
    %s24 = sadd.s32 1, %s15
    %s25 = scalar_select %p22, %s24, %s15
    %p26 = scmp.ge.s32.totalorder %s25, 2
    %s27 = scalar_select %p26, 0, %s25
    %s28 = ssub.s32 %s15, %s27
    %s29 = ssub.s32 %s16, %s23
    %s30 = sor.u32 %s28, %s29
    %p31 = scmp.eq.s32.totalorder %s30, 0
    %s33 = sadd.s32 %s32, 1
    %s34 = scalar_select %p31, %s32, %s33
    %p37 = pneg %p31
    %p38 = scmp.eq.s32.totalorder %s8, 3
    %p39 = por %p37, %p38
    %p40 = scmp.ne.s32.totalorder %s32, %s35
    %p41 = scmp.eq.s32.totalorder %s8, 0
    %p42 = por %p40, %p41
    %p43 = scmp.ne.s32.totalorder %s32, %s35
    %p44 = scmp.eq.s32.totalorder %s13, 3
    %p45 = por %p43, %p44
    %p46 = scmp.ne.s32.totalorder %s35, %s36
    %p47 = scmp.eq.s32.totalorder %s13, 0
    %p48 = por %p46, %p47
    %p49 = scmp.ne.s32.totalorder %s35, %s36
    %p50 = scmp.eq.s32.totalorder %s14, 3
    %p51 = por %p49, %p50
    %p53 = scmp.ne.s32.totalorder %s36, %s52
    %p54 = scmp.eq.s32.totalorder %s14, 0
    %p55 = por %p53, %p54
    %s56 = ssub.s32 %s15, %s27
    %p57 = scmp.eq.s32.totalorder %s56, 0
    %s59 = sadd.s32 %s58, 1
    %s60 = scalar_select %p57, %s58, %s59
    %p63 = pneg %p57
    %p64 = scmp.eq.s32.totalorder %s8, 3
    %p65 = por %p63, %p64
    %p66 = scmp.ne.s32.totalorder %s58, %s61
    %p67 = scmp.eq.s32.totalorder %s8, 0
    %p68 = por %p66, %p67
    %p69 = scmp.ne.s32.totalorder %s58, %s61
    %p70 = scmp.eq.s32.totalorder %s13, 3
    %p71 = por %p69, %p70
    %p72 = scmp.ne.s32.totalorder %s61, %s62
    %p73 = scmp.eq.s32.totalorder %s13, 0
    %p74 = por %p72, %p73
    %p75 = scmp.ne.s32.totalorder %s61, %s62
    %p76 = scmp.eq.s32.totalorder %s14, 3
    %p77 = por %p75, %p76
    %p79 = scmp.ne.s32.totalorder %s62, %s78
    %p80 = scmp.eq.s32.totalorder %s14, 0
    %p81 = por %p79, %p80
    %s82 = ssub.s32 %s15, %s27
    %s83 = ssub.s32 %s16, %s23
    %s84 = sor.u32 %s82, %s83
    %p85 = scmp.eq.s32.totalorder %s84, 0
    %s87 = sadd.s32 %s86, 1
    %s88 = scalar_select %p85, %s86, %s87
    %p91 = pneg %p85
    %p92 = scmp.eq.s32.totalorder %s8, 3
    %p93 = por %p91, %p92
    %p94 = scmp.ne.s32.totalorder %s86, %s89
    %p95 = scmp.eq.s32.totalorder %s8, 0
    %p96 = por %p94, %p95
    %p97 = scmp.ne.s32.totalorder %s86, %s89
    %p98 = scmp.eq.s32.totalorder %s13, 3
    %p99 = por %p97, %p98
    %p100 = scmp.ne.s32.totalorder %s89, %s90
    %p101 = scmp.eq.s32.totalorder %s13, 0
    %p102 = por %p100, %p101
    %p103 = scmp.ne.s32.totalorder %s89, %s90
    %p104 = scmp.eq.s32.totalorder %s14, 3
    %p105 = por %p103, %p104
    %p107 = scmp.ne.s32.totalorder %s90, %s106
    %p108 = scmp.eq.s32.totalorder %s14, 0
    %p109 = por %p107, %p108
    %p110 = scmp.le.s32.totalorder 1, %s8
    %p111 = scmp.lt.s32.totalorder %s8, 5
    %p112 = pnand %p110, %p111
    %p113 = pneg %p112
    // Predicated region
    $region9: #{discriminator_forward.9} parent=5 // pred_check
      _
    $region10: #{discriminator_forward.9} parent=5 // pred_check_branch
      %115 = sbr.rel (%p112) target = $region12
    $region11: #{discriminator_forward.9} parent=5 // pred_region
      %s116 = ssub.s32 %s8, 1
    $region12: #{discriminator_forward.9} parent=5 // pred_fallthru
      _
    %p117 = scmp.lt.s32.totalorder %s8, 4
    // Predicated region
    $region13: #{discriminator_forward.9} parent=5 // pred_check
      %p118 = pneg %p117
    $region14: #{discriminator_forward.9} parent=5 // pred_check_branch
      %120 = sbr.rel (%p118) target = $region16
    $region15: #{discriminator_forward.9} parent=5 // pred_region
      // Predicated region
      $region17: #{discriminator_forward.9} parent=15 // pred_check
        %p121 = pneg %p42
      $region18: #{discriminator_forward.9} parent=15 // pred_check_branch
        %123 = sbr.rel (%p121) target = $region20
      $region19: #{discriminator_forward.9} parent=15 // pred_region
        %s124 = smul.u32 16, %s16
        %p125 = scmp.lt.s32.totalorder %s15, 1
        %s126 = scalar_select %p125, %s15, 1
        %p127 = scmp.lt.s32.totalorder %s124, 31
        %s128 = scalar_select %p127, %s124, 31
        %s129 = smul.addr %s126, 32
        %s130 = sadd.s32 %s128, %s129
        %s131 = smul.addr %s130, 8
        %s132 = scalar_lea.vmem %s0, %s131
        %s133 = smul.u32 16, %s16
      $region20: #{discriminator_forward.9} parent=15 // pred_fallthru
        _
      // Predicated region
      $region21: #{discriminator_forward.9} parent=15 // pred_check
        %p134 = pneg %p68
      $region22: #{discriminator_forward.9} parent=15 // pred_check_branch
        %136 = sbr.rel (%p134) target = $region24
      $region23: #{discriminator_forward.9} parent=15 // pred_region
        %p137 = scmp.lt.s32.totalorder %s15, 1
        %s138 = scalar_select %p137, %s15, 1
        %s139 = smul.addr %s138, 2
        %s140 = scalar_lea.vmem %s1, %s139
      $region24: #{discriminator_forward.9} parent=15 // pred_fallthru
        _
    $region16: #{discriminator_forward.9} parent=5 // pred_fallthru
      _
    %p141 = scmp.le.s32.totalorder 1, %s8
    %p142 = scmp.lt.s32.totalorder %s8, 5
    %p143 = pnand %p141, %p142
    %p144 = pneg %p143
    // Predicated region
    $region25: #{discriminator_forward.9} parent=5 // pred_check
      _
    $region26: #{discriminator_forward.9} parent=5 // pred_check_branch
      %146 = sbr.rel (%p143) target = $region28
    $region27: #{discriminator_forward.9} parent=5 // pred_region
      %s147 = ssub.s32 %s8, 1
      %s148 = smul.u32 16, %s18
      %p149 = scmp.lt.s32.totalorder %s17, 1
      %s150 = scalar_select %p149, %s17, 1
      %p151 = scmp.lt.s32.totalorder %s148, 31
      %s152 = scalar_select %p151, %s148, 31
      %s153 = smul.addr %s150, 32
      %s154 = sadd.s32 %s152, %s153
      %s155 = smul.addr %s154, 8
      %s156 = scalar_lea.vmem %s0, %s155
      %p157 = pneg %p48
      %p158 = pneg %p45
      %p159 = scmp.lt.s32.totalorder %s17, 1
      %s160 = scalar_select %p159, %s17, 1
      %s161 = smul.addr %s160, 2
      %s162 = scalar_lea.vmem %s1, %s161
      %p163 = pneg %p74
      %p164 = pneg %p71
      %p165 = pneg %p102
      %p166 = pneg %p99
      %s167 = smul.u32 16, %s18
      %p168 = scmp.lt.s32.totalorder %s17, 1
      %s169 = scalar_select %p168, %s17, 1
      %p170 = scmp.lt.s32.totalorder %s167, 31
      %s171 = scalar_select %p170, %s167, 31
      %s172 = smul.addr %s169, 32
      %s173 = sadd.s32 %s171, %s172
      %s174 = smul.addr %s173, 4
      %s175 = scalar_lea.vmem %s2, %s174
      %s176 = smul.u32 16, %s18
      %p177 = scmp.lt.s32.totalorder %s17, 1
      %s178 = scalar_select %p177, %s17, 1
      %p179 = scmp.lt.s32.totalorder %s176, 31
      %s180 = scalar_select %p179, %s176, 31
      %s181 = smul.addr %s178, 32
      %s182 = sadd.s32 %s180, %s181
      %s183 = smul.addr %s182, 8
      %s184 = scalar_lea.vmem %s0, %s183
      %s185 = smul.u32 16, %s18
      %p186 = scmp.lt.s32.totalorder %s17, 1
      %s187 = scalar_select %p186, %s17, 1
      %s188 = smul.addr %s187, 2
      %s189 = scalar_lea.vmem %s1, %s188
      %s190 = smul.u32 16, %s18
      %p191 = scmp.lt.s32.totalorder %s17, 1
      %s192 = scalar_select %p191, %s17, 1
      %p193 = scmp.lt.s32.totalorder %s190, 31
      %s194 = scalar_select %p193, %s190, 31
      %s195 = smul.addr %s192, 32
      %s196 = sadd.s32 %s194, %s195
      %s197 = smul.addr %s196, 4
      %s198 = scalar_lea.vmem %s2, %s197
      %s199 = smul.u32 16, %s18
      %v200 = vld [vmem:[%s184] sm:$0xff]
      %v201 = vld [vmem:[%s184 + $0x8] sm:$0xff]
      %v202 = vld [vmem:[%s184 + $0x10] sm:$0xff]
      %v203 = vld [vmem:[%s184 + $0x18] sm:$0xff]
      %v204 = vld [vmem:[%s184 + $0x20] sm:$0xff]
      %v205 = vld [vmem:[%s184 + $0x28] sm:$0xff]
      %v206 = vld [vmem:[%s184 + $0x30] sm:$0xff]
      %v207 = vld [vmem:[%s184 + $0x38] sm:$0xff]
      %v208 = vld [vmem:[%s184 + $0x40] sm:$0xff]
      %v209 = vld [vmem:[%s184 + $0x48] sm:$0xff]
      %v210 = vld [vmem:[%s184 + $0x50] sm:$0xff]
      %v211 = vld [vmem:[%s184 + $0x58] sm:$0xff]
      %v212 = vld [vmem:[%s184 + $0x60] sm:$0xff]
      %v213 = vld [vmem:[%s184 + $0x68] sm:$0xff]
      %v214 = vld [vmem:[%s184 + $0x70] sm:$0xff]
      %v215 = vld [vmem:[%s184 + $0x78] sm:$0xff]
      %v216 = vld [vmem:[%s189] sm:$0x3]
      %v217 = vmul.f32 %v216, 0.00390625
      %v218 = vmul.f32 %v217, %v217
      %v220 = vrot.slane %v218, 7
      %v222 = vsub.f32 %v217, %v220
      %v223 = vmax.f32 %v222, 0.0
      %v224 = vlaneseq
      %v225 = vshrl.u32 %v224, 7
      %v226 = vsub.s32 0, %v225
      %v227 = vrot.slane %v217, %v226
      %v228 = vsub.f32 %v200, %v227
      %v229 = vsub.f32 %v201, %v227
      %v230 = vsub.f32 %v202, %v227
      %v231 = vsub.f32 %v203, %v227
      %v232 = vsub.f32 %v204, %v227
      %v233 = vsub.f32 %v205, %v227
      %v234 = vsub.f32 %v206, %v227
      %v235 = vsub.f32 %v207, %v227
      %v236 = vsub.f32 %v208, %v227
      %v237 = vsub.f32 %v209, %v227
      %v238 = vsub.f32 %v210, %v227
      %v239 = vsub.f32 %v211, %v227
      %v240 = vsub.f32 %v212, %v227
      %v241 = vsub.f32 %v213, %v227
      %v242 = vsub.f32 %v214, %v227
      %v243 = vsub.f32 %v215, %v227
      %v244 = vadd.f32 %v223, 1e-05
      %v245 = vrsqrt.pop %v244
      %v246 = vlaneseq
      %v247 = vshrl.u32 %v246, 7
      %v248 = vsub.s32 1, %v247
      %v249 = vrot.slane %v245, %v248
      %v250 = vmul.f32 %v228, %v249
      %v251 = vmul.f32 %v229, %v249
      %v252 = vmul.f32 %v230, %v249
      %v253 = vmul.f32 %v231, %v249
      %v254 = vmul.f32 %v232, %v249
      %v255 = vmul.f32 %v233, %v249
      %v256 = vmul.f32 %v234, %v249
      %v257 = vmul.f32 %v235, %v249
      %v258 = vmul.f32 %v236, %v249
      %v259 = vmul.f32 %v237, %v249
      %v260 = vmul.f32 %v238, %v249
      %v261 = vmul.f32 %v239, %v249
      %v262 = vmul.f32 %v240, %v249
      %v263 = vmul.f32 %v241, %v249
      %v264 = vmul.f32 %v242, %v249
      %v265 = vmul.f32 %v243, %v249
      %vm266 = vcmp.ge.f32.partialorder %v250, 0.0
      %vm267 = vcmp.ge.f32.partialorder %v251, 0.0
      %vm268 = vcmp.ge.f32.partialorder %v252, 0.0
      %vm269 = vcmp.ge.f32.partialorder %v253, 0.0
      %vm270 = vcmp.ge.f32.partialorder %v254, 0.0
      %vm271 = vcmp.ge.f32.partialorder %v255, 0.0
      %vm272 = vcmp.ge.f32.partialorder %v256, 0.0
      %vm273 = vcmp.ge.f32.partialorder %v257, 0.0
      %vm274 = vcmp.ge.f32.partialorder %v258, 0.0
      %vm275 = vcmp.ge.f32.partialorder %v259, 0.0
      %vm276 = vcmp.ge.f32.partialorder %v260, 0.0
      %vm277 = vcmp.ge.f32.partialorder %v261, 0.0
      %vm278 = vcmp.ge.f32.partialorder %v262, 0.0
      %vm279 = vcmp.ge.f32.partialorder %v263, 0.0
      %vm280 = vcmp.ge.f32.partialorder %v264, 0.0
      %vm281 = vcmp.ge.f32.partialorder %v265, 0.0
      %v282 = vmul.f32 %v250, 0.2
      %v283 = vmul.f32 %v251, 0.2
      %v284 = vmul.f32 %v252, 0.2
      %v285 = vmul.f32 %v253, 0.2
      %v286 = vmul.f32 %v254, 0.2
      %v287 = vmul.f32 %v255, 0.2
      %v288 = vmul.f32 %v256, 0.2
      %v289 = vmul.f32 %v257, 0.2
      %v290 = vmul.f32 %v258, 0.2
      %v291 = vmul.f32 %v259, 0.2
      %v292 = vmul.f32 %v260, 0.2
      %v293 = vmul.f32 %v261, 0.2
      %v294 = vmul.f32 %v262, 0.2
      %v295 = vmul.f32 %v263, 0.2
      %v296 = vmul.f32 %v264, 0.2
      %v297 = vmul.f32 %v265, 0.2
      %v298 = vsel %vm266, %v250, %v282
      %v299 = vsel %vm267, %v251, %v283
      %v300 = vsel %vm268, %v252, %v284
      %v301 = vsel %vm269, %v253, %v285
      %v302 = vsel %vm270, %v254, %v286
      %v303 = vsel %vm271, %v255, %v287
      %v304 = vsel %vm272, %v256, %v288
      %v305 = vsel %vm273, %v257, %v289
      %v306 = vsel %vm274, %v258, %v290
      %v307 = vsel %vm275, %v259, %v291
      %v308 = vsel %vm276, %v260, %v292
      %v309 = vsel %vm277, %v261, %v293
      %v310 = vsel %vm278, %v262, %v294
      %v311 = vsel %vm279, %v263, %v295
      %v312 = vsel %vm280, %v264, %v296
      %v313 = vsel %vm281, %v265, %v297
      %v314 = vpack.c.bf16 %v299, %v298
      %v315 = vpack.c.bf16 %v301, %v300
      %v316 = vpack.c.bf16 %v303, %v302
      %v317 = vpack.c.bf16 %v305, %v304
      %v318 = vpack.c.bf16 %v307, %v306
      %v319 = vpack.c.bf16 %v309, %v308
      %v320 = vpack.c.bf16 %v311, %v310
      %v321 = vpack.c.bf16 %v313, %v312
      %v330 = vunpack.c.l.b16 %v314
      %v331 = vunpack.c.h.b16 %v314
      %v332 = vunpack.c.l.b16 %v315
      %v333 = vunpack.c.h.b16 %v315
      %v334 = vunpack.c.l.b16 %v316
      %v335 = vunpack.c.h.b16 %v316
      %v336 = vunpack.c.l.b16 %v317
      %v337 = vunpack.c.h.b16 %v317
      %v338 = vunpack.c.l.b16 %v318
      %v339 = vunpack.c.h.b16 %v318
      %v340 = vunpack.c.l.b16 %v319
      %v341 = vunpack.c.h.b16 %v319
      %v342 = vunpack.c.l.b16 %v320
      %v343 = vunpack.c.h.b16 %v320
      %v344 = vunpack.c.l.b16 %v321
      %v345 = vunpack.c.h.b16 %v321
      %v346 = vpack.c.b16 %v330, %v330
      %v347 = vpack.c.b16 %v331, %v331
      %v348 = vpack.c.b16 %v332, %v332
      %v349 = vpack.c.b16 %v333, %v333
      %v350 = vpack.c.b16 %v334, %v334
      %v351 = vpack.c.b16 %v335, %v335
      %v352 = vpack.c.b16 %v336, %v336
      %v353 = vpack.c.b16 %v337, %v337
      %v354 = vpack.c.b16 %v338, %v338
      %v355 = vpack.c.b16 %v339, %v339
      %v356 = vpack.c.b16 %v340, %v340
      %v357 = vpack.c.b16 %v341, %v341
      %v358 = vpack.c.b16 %v342, %v342
      %v359 = vpack.c.b16 %v343, %v343
      %v360 = vpack.c.b16 %v344, %v344
      %v361 = vpack.c.b16 %v345, %v345
      %vm378 = vcmask 125952
      %379 = vst.msk [vmem:[%s198] sm:$0xf] %vm378, %v346
      %380 = vst.msk [vmem:[%s198 + $0x4] sm:$0xf] %vm378, %v347
      %381 = vst.msk [vmem:[%s198 + $0x8] sm:$0xf] %vm378, %v348
      %382 = vst.msk [vmem:[%s198 + $0xc] sm:$0xf] %vm378, %v349
      %383 = vst.msk [vmem:[%s198 + $0x10] sm:$0xf] %vm378, %v350
      %384 = vst.msk [vmem:[%s198 + $0x14] sm:$0xf] %vm378, %v351
      %385 = vst.msk [vmem:[%s198 + $0x18] sm:$0xf] %vm378, %v352
      %386 = vst.msk [vmem:[%s198 + $0x1c] sm:$0xf] %vm378, %v353
      %387 = vst.msk [vmem:[%s198 + $0x20] sm:$0xf] %vm378, %v354
      %388 = vst.msk [vmem:[%s198 + $0x24] sm:$0xf] %vm378, %v355
      %389 = vst.msk [vmem:[%s198 + $0x28] sm:$0xf] %vm378, %v356
      %390 = vst.msk [vmem:[%s198 + $0x2c] sm:$0xf] %vm378, %v357
      %391 = vst.msk [vmem:[%s198 + $0x30] sm:$0xf] %vm378, %v358
      %392 = vst.msk [vmem:[%s198 + $0x34] sm:$0xf] %vm378, %v359
      %393 = vst.msk [vmem:[%s198 + $0x38] sm:$0xf] %vm378, %v360
      %394 = vst.msk [vmem:[%s198 + $0x3c] sm:$0xf] %vm378, %v361
      %s395 = smul.u32 16, %s18
      %p396 = scmp.lt.s32.totalorder %s17, 1
      %s397 = scalar_select %p396, %s17, 1
      %p398 = scmp.lt.s32.totalorder %s395, 31
      %s399 = scalar_select %p398, %s395, 31
      %s400 = smul.addr %s397, 32
      %s401 = sadd.s32 %s399, %s400
      %s402 = smul.addr %s401, 4
      %s403 = scalar_lea.vmem %s2, %s402
      // Predicated region
      $region29: #{discriminator_forward.9} parent=27 // pred_check
        %p404 = pneg %p99
      $region30: #{discriminator_forward.9} parent=27 // pred_check_branch
        %406 = sbr.rel (%p404) target = $region32
      $region31: #{discriminator_forward.9} parent=27 // pred_region
        %s407 = smul.u32 16, %s18
      $region32: #{discriminator_forward.9} parent=27 // pred_fallthru
        _
    $region28: #{discriminator_forward.9} parent=5 // pred_fallthru
      _
    %p408 = scmp.le.s32.totalorder 2, %s8
    // Predicated region
    $region33: #{discriminator_forward.9} parent=5 // pred_check
      %p409 = pneg %p408
    $region34: #{discriminator_forward.9} parent=5 // pred_check_branch
      %411 = sbr.rel (%p409) target = $region36
    $region35: #{discriminator_forward.9} parent=5 // pred_region
      %s412 = ssub.s32 %s8, 2
      // Predicated region
      $region37: #{discriminator_forward.9} parent=35 // pred_check
        %p413 = pneg %p105
      $region38: #{discriminator_forward.9} parent=35 // pred_check_branch
        %415 = sbr.rel (%p413) target = $region40
      $region39: #{discriminator_forward.9} parent=35 // pred_region
        %s416 = smul.u32 16, %s20
        %p417 = scmp.lt.s32.totalorder %s19, 1
        %s418 = scalar_select %p417, %s19, 1
        %p419 = scmp.lt.s32.totalorder %s416, 31
        %s420 = scalar_select %p419, %s416, 31
        %s421 = smul.addr %s418, 32
        %s422 = sadd.s32 %s420, %s421
        %s423 = smul.addr %s422, 4
        %s424 = scalar_lea.vmem %s2, %s423
      $region40: #{discriminator_forward.9} parent=35 // pred_fallthru
        _
    $region36: #{discriminator_forward.9} parent=5 // pred_fallthru
      _
  $region6: #{discriminator_forward.9} parent=0 // loop_footer
    %s12 = sadd.s32 1, %s8
  $region7: #{discriminator_forward.9} parent=0 // loop_footer_branch
    %7 = sbr.rel target = $region3
  $region8: #{discriminator_forward.9} parent=0 // loop_exit
    _

// kernel: discriminator_forward.8
$region0: #{discriminator_forward.8}
  #allocation0 [shape = 'u32[]', space=smem, size = 0x4, offset = 0x4, fixed_abs, tag = 'smem constant byte address 0x4 - core index']
  #allocation1 [shape = 'u32[144,128]{1,0:T(1,128)}', space=vmem, size = 0x12000, scoped, tag = 'internal scratch']
  %s0 = inlined_call_operand.vmem [shape: bf16[2,256,128], index: 0, kind: input, shape index: {}]
  %s1 = inlined_call_operand.vmem [shape: bf16[128,16], index: 1, kind: input, shape index: {}]
  %s2 = inlined_call_operand.vmem [shape: f32[1,16], index: 2, kind: input, shape index: {}]
  %s3 = inlined_call_operand.vmem [shape: f32[2,256,16], index: 3, kind: output, shape index: {0}]
  %s4 = inlined_call_operand.vmem [shape: f32[2,2,16], index: 4, kind: output, shape index: {1}]
  %5 = xla_tuple %s3, %s4
  %s6 = sld [smem:[#allocation0]]
  $region57: #{discriminator_forward.8} parent=0
    _
  %s8 = ssub.s32 1, %s6
  %s9 = scalar_select 0, %s8, %s6
  loop: start=0, step=1, limit=6
  $region2: #{discriminator_forward.8} parent=0 // loop_pre_header
    _
  $region3: #{discriminator_forward.8} parent=0 // loop_header
    %s11 = sphi 0, %s15
    %p12 = scmp.ge.s32.totalorder %s11, 6
    %s18 = sphi 0, %s30
    %s19 = sphi 0, %s26
    %s20 = sphi 0, %s18
    %s21 = sphi 0, %s19
    %s22 = sphi 0, %s20
    %s23 = sphi 0, %s21
    %s35 = sphi 0, %s37
    %s38 = sphi 0, %s35
    %s39 = sphi 0, %s38
    %s55 = sphi 0, %s39
    %s59 = sphi 0, %s59
    %s61 = sphi 0, %s59
    %s62 = sphi 0, %s61
    %s76 = sphi 0, %s62
    %s80 = sphi 0, %s80
    %s82 = sphi 0, %s80
    %s83 = sphi 0, %s82
    %s97 = sphi 0, %s83
    %s105 = sphi 0, %s107
    %s108 = sphi 0, %s105
    %s109 = sphi 0, %s108
    %s125 = sphi 0, %s109
    %s131 = sphi 0, %s133
    %s134 = sphi 0, %s131
    %s135 = sphi 0, %s134
    %s151 = sphi 0, %s135
  $region4: #{discriminator_forward.8} parent=0 // loop_header_branch
    %14 = sbr.rel (%p12) target = $region8
  $region5: #{discriminator_forward.8} parent=0 // loop_body
    %s16 = ssub.s32 %s11, 1
    %s17 = ssub.s32 %s11, 2
    %s24 = sadd.s32 1, %s19
    %p25 = scmp.ge.s32.totalorder %s24, 2
    %s26 = scalar_select %p25, 0, %s24
    %s27 = sadd.s32 1, %s18
    %s28 = scalar_select %p25, %s27, %s18
    %p29 = scmp.ge.s32.totalorder %s28, 2
    %s30 = scalar_select %p29, 0, %s28
    %s31 = ssub.s32 %s18, %s30
    %s32 = ssub.s32 %s19, %s26
    %s33 = sor.u32 %s31, %s32
    %p34 = scmp.eq.s32.totalorder %s33, 0
    %s36 = sadd.s32 %s35, 1
    %s37 = scalar_select %p34, %s35, %s36
    %p40 = pneg %p34
    %p41 = scmp.eq.s32.totalorder %s11, 3
    %p42 = por %p40, %p41
    %p43 = scmp.ne.s32.totalorder %s35, %s38
    %p44 = scmp.eq.s32.totalorder %s11, 0
    %p45 = por %p43, %p44
    %p46 = scmp.ne.s32.totalorder %s35, %s38
    %p47 = scmp.eq.s32.totalorder %s16, 3
    %p48 = por %p46, %p47
    %p49 = scmp.ne.s32.totalorder %s38, %s39
    %p50 = scmp.eq.s32.totalorder %s16, 0
    %p51 = por %p49, %p50
    %p52 = scmp.ne.s32.totalorder %s38, %s39
    %p53 = scmp.eq.s32.totalorder %s17, 3
    %p54 = por %p52, %p53
    %p56 = scmp.ne.s32.totalorder %s39, %s55
    %p57 = scmp.eq.s32.totalorder %s17, 0
    %p58 = por %p56, %p57
    %s60 = sadd.s32 %s59, 1
    %p63 = scmp.eq.s32.totalorder %s11, 3
    %p64 = scmp.ne.s32.totalorder %s59, %s61
    %p65 = scmp.eq.s32.totalorder %s11, 0
    %p66 = por %p64, %p65
    %p67 = scmp.ne.s32.totalorder %s59, %s61
    %p68 = scmp.eq.s32.totalorder %s16, 3
    %p69 = por %p67, %p68
    %p70 = scmp.ne.s32.totalorder %s61, %s62
    %p71 = scmp.eq.s32.totalorder %s16, 0
    %p72 = por %p70, %p71
    %p73 = scmp.ne.s32.totalorder %s61, %s62
    %p74 = scmp.eq.s32.totalorder %s17, 3
    %p75 = por %p73, %p74
    %p77 = scmp.ne.s32.totalorder %s62, %s76
    %p78 = scmp.eq.s32.totalorder %s17, 0
    %p79 = por %p77, %p78
    %s81 = sadd.s32 %s80, 1
    %p84 = scmp.eq.s32.totalorder %s11, 3
    %p85 = scmp.ne.s32.totalorder %s80, %s82
    %p86 = scmp.eq.s32.totalorder %s11, 0
    %p87 = por %p85, %p86
    %p88 = scmp.ne.s32.totalorder %s80, %s82
    %p89 = scmp.eq.s32.totalorder %s16, 3
    %p90 = por %p88, %p89
    %p91 = scmp.ne.s32.totalorder %s82, %s83
    %p92 = scmp.eq.s32.totalorder %s16, 0
    %p93 = por %p91, %p92
    %p94 = scmp.ne.s32.totalorder %s82, %s83
    %p95 = scmp.eq.s32.totalorder %s17, 3
    %p96 = por %p94, %p95
    %p98 = scmp.ne.s32.totalorder %s83, %s97
    %p99 = scmp.eq.s32.totalorder %s17, 0
    %p100 = por %p98, %p99
    %s101 = ssub.s32 %s18, %s30
    %s102 = ssub.s32 %s19, %s26
    %s103 = sor.u32 %s101, %s102
    %p104 = scmp.eq.s32.totalorder %s103, 0
    %s106 = sadd.s32 %s105, 1
    %s107 = scalar_select %p104, %s105, %s106
    %p110 = pneg %p104
    %p111 = scmp.eq.s32.totalorder %s11, 3
    %p112 = por %p110, %p111
    %p113 = scmp.ne.s32.totalorder %s105, %s108
    %p114 = scmp.eq.s32.totalorder %s11, 0
    %p115 = por %p113, %p114
    %p116 = scmp.ne.s32.totalorder %s105, %s108
    %p117 = scmp.eq.s32.totalorder %s16, 3
    %p118 = por %p116, %p117
    %p119 = scmp.ne.s32.totalorder %s108, %s109
    %p120 = scmp.eq.s32.totalorder %s16, 0
    %p121 = por %p119, %p120
    %p122 = scmp.ne.s32.totalorder %s108, %s109
    %p123 = scmp.eq.s32.totalorder %s17, 3
    %p124 = por %p122, %p123
    %p126 = scmp.ne.s32.totalorder %s109, %s125
    %p127 = scmp.eq.s32.totalorder %s17, 0
    %p128 = por %p126, %p127
    %s129 = ssub.s32 %s18, %s30
    %p130 = scmp.eq.s32.totalorder %s129, 0
    %s132 = sadd.s32 %s131, 1
    %s133 = scalar_select %p130, %s131, %s132
    %p136 = pneg %p130
    %p137 = scmp.eq.s32.totalorder %s11, 3
    %p138 = por %p136, %p137
    %p139 = scmp.ne.s32.totalorder %s131, %s134
    %p140 = scmp.eq.s32.totalorder %s11, 0
    %p141 = por %p139, %p140
    %p142 = scmp.ne.s32.totalorder %s131, %s134
    %p143 = scmp.eq.s32.totalorder %s16, 3
    %p144 = por %p142, %p143
    %p145 = scmp.ne.s32.totalorder %s134, %s135
    %p146 = scmp.eq.s32.totalorder %s16, 0
    %p147 = por %p145, %p146
    %p148 = scmp.ne.s32.totalorder %s134, %s135
    %p149 = scmp.eq.s32.totalorder %s17, 3
    %p150 = por %p148, %p149
    %p152 = scmp.ne.s32.totalorder %s135, %s151
    %p153 = scmp.eq.s32.totalorder %s17, 0
    %p154 = por %p152, %p153
    %p155 = scmp.le.s32.totalorder 1, %s11
    %p156 = scmp.lt.s32.totalorder %s11, 5
    %p157 = pnand %p155, %p156
    %p158 = pneg %p157
    // Predicated region
    $region9: #{discriminator_forward.8} parent=5 // pred_check
      _
    $region10: #{discriminator_forward.8} parent=5 // pred_check_branch
      %160 = sbr.rel (%p157) target = $region12
    $region11: #{discriminator_forward.8} parent=5 // pred_region
      %s161 = ssub.s32 %s11, 1
      // Predicated region
      $region13: #{discriminator_forward.8} parent=11 // pred_check
        %p162 = pneg %p72
      $region14: #{discriminator_forward.8} parent=11 // pred_check_branch
        %164 = sbr.rel (%p162) target = $region16
      $region15: #{discriminator_forward.8} parent=11 // pred_region
        _
      $region16: #{discriminator_forward.8} parent=11 // pred_fallthru
        _
      // Predicated region
      $region17: #{discriminator_forward.8} parent=11 // pred_check
        %p165 = pneg %p93
      $region18: #{discriminator_forward.8} parent=11 // pred_check_branch
        %167 = sbr.rel (%p165) target = $region20
      $region19: #{discriminator_forward.8} parent=11 // pred_region
        _
      $region20: #{discriminator_forward.8} parent=11 // pred_fallthru
        _
    $region12: #{discriminator_forward.8} parent=5 // pred_fallthru
      _
    %p168 = scmp.lt.s32.totalorder %s11, 4
    // Predicated region
    $region21: #{discriminator_forward.8} parent=5 // pred_check
      %p169 = pneg %p168
    $region22: #{discriminator_forward.8} parent=5 // pred_check_branch
      %171 = sbr.rel (%p169) target = $region24
    $region23: #{discriminator_forward.8} parent=5 // pred_region
      // Predicated region
      $region25: #{discriminator_forward.8} parent=23 // pred_check
        %p172 = pneg %p45
      $region26: #{discriminator_forward.8} parent=23 // pred_check_branch
        %174 = sbr.rel (%p172) target = $region28
      $region27: #{discriminator_forward.8} parent=23 // pred_region
        %s175 = smul.u32 16, %s19
        %p176 = scmp.lt.s32.totalorder %s18, 1
        %s177 = scalar_select %p176, %s18, 1
        %p178 = scmp.lt.s32.totalorder %s175, 31
        %s179 = scalar_select %p178, %s175, 31
        %s180 = smul.addr %s177, 32
        %s181 = sadd.s32 %s179, %s180
        %s182 = smul.addr %s181, 4
        %s183 = scalar_lea.vmem %s0, %s182
        %s184 = smul.u32 16, %s19
      $region28: #{discriminator_forward.8} parent=23 // pred_fallthru
        _
    $region24: #{discriminator_forward.8} parent=5 // pred_fallthru
      _
    %p185 = scmp.le.s32.totalorder 1, %s11
    %p186 = scmp.lt.s32.totalorder %s11, 5
    %p187 = pnand %p185, %p186
    %p188 = pneg %p187
    // Predicated region
    $region29: #{discriminator_forward.8} parent=5 // pred_check
      _
    $region30: #{discriminator_forward.8} parent=5 // pred_check_branch
      %190 = sbr.rel (%p187) target = $region32
    $region31: #{discriminator_forward.8} parent=5 // pred_region
      %s191 = ssub.s32 %s11, 1
      %s192 = smul.u32 16, %s21
      %p193 = scmp.lt.s32.totalorder %s20, 1
      %s194 = scalar_select %p193, %s20, 1
      %p195 = scmp.lt.s32.totalorder %s192, 31
      %s196 = scalar_select %p195, %s192, 31
      %s197 = smul.addr %s194, 32
      %s198 = sadd.s32 %s196, %s197
      %s199 = smul.addr %s198, 4
      %s200 = scalar_lea.vmem %s0, %s199
      %p201 = pneg %p51
      %p202 = pneg %p48
      %p203 = pneg %p72
      %p204 = pneg %p69
      %p205 = pneg %p93
      %p206 = pneg %p90
      %p207 = pneg %p121
      %p208 = pneg %p118
      %s209 = smul.u32 16, %s21
      %p210 = scmp.lt.s32.totalorder %s20, 1
      %s211 = scalar_select %p210, %s20, 1
      %p212 = scmp.lt.s32.totalorder %s209, 31
      %s213 = scalar_select %p212, %s209, 31
      %s214 = smul.addr %s211, 32
      %s215 = sadd.s32 %s213, %s214
      %s216 = smul.addr %s215, 8
      %s217 = scalar_lea.vmem %s3, %s216
      %p218 = pneg %p147
      %p219 = pneg %p144
      %p220 = scmp.lt.s32.totalorder %s20, 1
      %s221 = scalar_select %p220, %s20, 1
      %s222 = smul.addr %s221, 2
      %s223 = scalar_lea.vmem %s4, %s222
      %s224 = smul.u32 16, %s21
      %p225 = scmp.lt.s32.totalorder %s20, 1
      %s226 = scalar_select %p225, %s20, 1
      %p227 = scmp.lt.s32.totalorder %s224, 31
      %s228 = scalar_select %p227, %s224, 31
      %s229 = smul.addr %s226, 32
      %s230 = sadd.s32 %s228, %s229
      %s231 = smul.addr %s230, 4
      %s232 = scalar_lea.vmem %s0, %s231
      %s233 = smul.u32 16, %s21
      %s234 = smul.u32 16, %s21
      %p235 = scmp.lt.s32.totalorder %s20, 1
      %s236 = scalar_select %p235, %s20, 1
      %p237 = scmp.lt.s32.totalorder %s234, 31
      %s238 = scalar_select %p237, %s234, 31
      %s239 = smul.addr %s236, 32
      %s240 = sadd.s32 %s238, %s239
      %s241 = smul.addr %s240, 8
      %s242 = scalar_lea.vmem %s3, %s241
      %s243 = smul.u32 16, %s21
      %p244 = scmp.lt.s32.totalorder %s20, 1
      %s245 = scalar_select %p244, %s20, 1
      %s246 = smul.addr %s245, 2
      %s247 = scalar_lea.vmem %s4, %s246
      %p249 = scmp.eq.s32.totalorder %s21, 0
      // Predicated region
      $region33: #{discriminator_forward.8} parent=31 // pred_check
        %p250 = pneg %p249
      $region34: #{discriminator_forward.8} parent=31 // pred_check_branch
        %252 = sbr.rel (%p250) target = $region36
      $region35: #{discriminator_forward.8} parent=31 // pred_region
        %vm253 = vcmask 123904
        %254 = vst.msk [vmem:[%s247] sm:$0x3] %vm253, 0.0
      $region36: #{discriminator_forward.8} parent=31 // pred_fallthru
        _
      %v255 = vld [vmem:[%s232] sm:$0xf]
      %v256 = vld [vmem:[%s232 + $0x4] sm:$0xf]
      %v257 = vld [vmem:[%s232 + $0x8] sm:$0xf]
      %v258 = vld [vmem:[%s232 + $0xc] sm:$0xf]
      %v259 = vld [vmem:[%s232 + $0x10] sm:$0xf]
      %v260 = vld [vmem:[%s232 + $0x14] sm:$0xf]
      %v261 = vld [vmem:[%s232 + $0x18] sm:$0xf]
      %v262 = vld [vmem:[%s232 + $0x1c] sm:$0xf]
      %v263 = vld [vmem:[%s232 + $0x20] sm:$0xf]
      %v264 = vld [vmem:[%s232 + $0x24] sm:$0xf]
      %v265 = vld [vmem:[%s232 + $0x28] sm:$0xf]
      %v266 = vld [vmem:[%s232 + $0x2c] sm:$0xf]
      %v267 = vld [vmem:[%s232 + $0x30] sm:$0xf]
      %v268 = vld [vmem:[%s232 + $0x34] sm:$0xf]
      %v269 = vld [vmem:[%s232 + $0x38] sm:$0xf]
      %v270 = vld [vmem:[%s232 + $0x3c] sm:$0xf]
      %v271 = vld [vmem:[%s1] sm:$0xf]
      %v272 = vld [vmem:[%s1 + $0x4] sm:$0xf]
      %v273 = vld [vmem:[%s1 + $0x8] sm:$0xf]
      %v274 = vld [vmem:[%s1 + $0xc] sm:$0xf]
      %v275 = vld [vmem:[%s1 + $0x10] sm:$0xf]
      %v276 = vld [vmem:[%s1 + $0x14] sm:$0xf]
      %v277 = vld [vmem:[%s1 + $0x18] sm:$0xf]
      %v278 = vld [vmem:[%s1 + $0x1c] sm:$0xf]
      %v279 = vld [vmem:[%s1 + $0x20] sm:$0xf]
      %v280 = vld [vmem:[%s1 + $0x24] sm:$0xf]
      %v281 = vld [vmem:[%s1 + $0x28] sm:$0xf]
      %v282 = vld [vmem:[%s1 + $0x2c] sm:$0xf]
      %v283 = vld [vmem:[%s1 + $0x30] sm:$0xf]
      %v284 = vld [vmem:[%s1 + $0x34] sm:$0xf]
      %v285 = vld [vmem:[%s1 + $0x38] sm:$0xf]
      %v286 = vld [vmem:[%s1 + $0x3c] sm:$0xf]
      %v287 = vld [vmem:[%s2] sm:$0x1]
      %v289 = vlaneseq
      %v290 = vshrl.u32 %v289, 7
      %v291 = vsub.s32 0, %v290
      %v292 = vrot.slane %v287, %v291
      %v310 = vunpack.c.l.b16 %v255
      %v311 = vunpack.c.l.b16 %v256
      %v312 = vunpack.c.l.b16 %v257
      %v313 = vunpack.c.l.b16 %v258
      %v314 = vunpack.c.l.b16 %v259
      %v315 = vunpack.c.l.b16 %v260
      %v316 = vunpack.c.l.b16 %v261
      %v317 = vunpack.c.l.b16 %v262
      %v318 = vunpack.c.l.b16 %v263
      %v319 = vunpack.c.l.b16 %v264
      %v320 = vunpack.c.l.b16 %v265
      %v321 = vunpack.c.l.b16 %v266
      %v322 = vunpack.c.l.b16 %v267
      %v323 = vunpack.c.l.b16 %v268
      %v324 = vunpack.c.l.b16 %v269
      %v325 = vunpack.c.l.b16 %v270
      %v326 = vpack.c.b16 %v311, %v310
      %v327 = vpack.c.b16 %v313, %v312
      %v328 = vpack.c.b16 %v315, %v314
      %v329 = vpack.c.b16 %v317, %v316
      %v330 = vpack.c.b16 %v319, %v318
      %v331 = vpack.c.b16 %v321, %v320
      %v332 = vpack.c.b16 %v323, %v322
      %v333 = vpack.c.b16 %v325, %v324
      %v358 = vunpack.c.l.b16 %v271
      %v359 = vunpack.c.l.b16 %v272
      %v360 = vunpack.c.l.b16 %v273
      %v361 = vunpack.c.l.b16 %v274
      %v362 = vunpack.c.l.b16 %v275
      %v363 = vunpack.c.l.b16 %v276
      %v364 = vunpack.c.l.b16 %v277
      %v365 = vunpack.c.l.b16 %v278
      %v366 = vunpack.c.l.b16 %v279
      %v367 = vunpack.c.l.b16 %v280
      %v368 = vunpack.c.l.b16 %v281
      %v369 = vunpack.c.l.b16 %v282
      %v370 = vunpack.c.l.b16 %v283
      %v371 = vunpack.c.l.b16 %v284
      %v372 = vunpack.c.l.b16 %v285
      %v373 = vunpack.c.l.b16 %v286
      %v374 = vpack.c.b16 %v359, %v358
      %v375 = vpack.c.b16 %v361, %v360
      %v376 = vpack.c.b16 %v363, %v362
      %v377 = vpack.c.b16 %v365, %v364
      %v378 = vpack.c.b16 %v367, %v366
      %v379 = vpack.c.b16 %v369, %v368
      %v380 = vpack.c.b16 %v371, %v370
      %v381 = vpack.c.b16 %v373, %v372
      %390 = vmatprep.subr.bf16.mxu0 0
      %391 = vmatpush1.bf16.msra.mxu0 %v381
      %392 = vmatprep.subr.bf16.mxu0 0
      %393 = vmatpush1.bf16.msra.mxu0 %v380
      %394 = vmatprep.subr.bf16.mxu0 0
      %395 = vmatpush1.bf16.msra.mxu0 %v379
      %396 = vmatprep.subr.bf16.mxu0 0
      %397 = vmatpush1.bf16.msra.mxu0 %v378
      %398 = vmatprep.subr.bf16.mxu0 0
      %399 = vmatpush1.bf16.msra.mxu0 %v377
      %400 = vmatprep.subr.bf16.mxu0 0
      %401 = vmatpush1.bf16.msra.mxu0 %v376
      %402 = vmatprep.subr.bf16.mxu0 0
      %403 = vmatpush1.bf16.msra.mxu0 %v375
      %404 = vmatprep.subr.bf16.mxu0 0
      %405 = vmatpush1.bf16.msra.mxu0 %v374
      %406 = vmatprep.subr.bf16.mxu0 0
      %407 = vmatpush2.bf16.msra.mxu0 0
      %408 = vmatprep.subr.bf16.mxu0 0
      %409 = vmatpush2.bf16.msra.mxu0 0
      %410 = vmatprep.subr.bf16.mxu0 0
      %411 = vmatpush2.bf16.msra.mxu0 0
      %412 = vmatprep.subr.bf16.mxu0 0
      %413 = vmatpush2.bf16.msra.mxu0 0
      %414 = vmatprep.subr.bf16.mxu0 0
      %415 = vmatpush2.bf16.msra.mxu0 0
      %416 = vmatprep.subr.bf16.mxu0 0
      %417 = vmatpush2.bf16.msra.mxu0 0
      %418 = vmatprep.subr.bf16.mxu0 0
      %419 = vmatpush2.bf16.msra.mxu0 0
      %420 = vmatprep.subr.bf16.mxu0 0
      %421 = vmatpush2.bf16.msra.mxu0 0
      %422 = vmatprep.mubr.bf16.mxu0 0
      %423 = vmatmul.mubr.bf16.gmra.mxu0 %v326
      %v424 = vpop.f32.mrf.mxu0
      %v425 = vadd.f32 %v292, %v424
      %v426 = vpop.f32.mrf.mxu0
      %v427 = vpop.f32.mrf.mxu0
      %v428 = vadd.f32 %v292, %v427
      %v429 = vpop.f32.mrf.mxu0
      %430 = vmatprep.mubr.bf16.mxu0 0
      %431 = vmatmul.mubr.bf16.gmra.mxu0 %v327
      %v432 = vpop.f32.mrf.mxu0
      %v433 = vadd.f32 %v292, %v432
      %v434 = vpop.f32.mrf.mxu0
      %v435 = vpop.f32.mrf.mxu0
      %v436 = vadd.f32 %v292, %v435
      %v437 = vpop.f32.mrf.mxu0
      %438 = vmatprep.mubr.bf16.mxu0 0
      %439 = vmatmul.mubr.bf16.gmra.mxu0 %v328
      %v440 = vpop.f32.mrf.mxu0
      %v441 = vadd.f32 %v292, %v440
      %v442 = vpop.f32.mrf.mxu0
      %v443 = vpop.f32.mrf.mxu0
      %v444 = vadd.f32 %v292, %v443
      %v445 = vpop.f32.mrf.mxu0
      %446 = vmatprep.mubr.bf16.mxu0 0
      %447 = vmatmul.mubr.bf16.gmra.mxu0 %v329
      %v448 = vpop.f32.mrf.mxu0
      %v449 = vadd.f32 %v292, %v448
      %v450 = vpop.f32.mrf.mxu0
      %v451 = vpop.f32.mrf.mxu0
      %v452 = vadd.f32 %v292, %v451
      %v453 = vpop.f32.mrf.mxu0
      %454 = vmatprep.mubr.bf16.mxu0 0
      %455 = vmatmul.mubr.bf16.gmra.mxu0 %v330
      %v456 = vpop.f32.mrf.mxu0
      %v457 = vadd.f32 %v292, %v456
      %v458 = vpop.f32.mrf.mxu0
      %v459 = vpop.f32.mrf.mxu0
      %v460 = vadd.f32 %v292, %v459
      %v461 = vpop.f32.mrf.mxu0
      %462 = vmatprep.mubr.bf16.mxu0 0
      %463 = vmatmul.mubr.bf16.gmra.mxu0 %v331
      %v464 = vpop.f32.mrf.mxu0
      %v465 = vadd.f32 %v292, %v464
      %v466 = vpop.f32.mrf.mxu0
      %v467 = vpop.f32.mrf.mxu0
      %v468 = vadd.f32 %v292, %v467
      %v469 = vpop.f32.mrf.mxu0
      %470 = vmatprep.mubr.bf16.mxu0 0
      %471 = vmatmul.mubr.bf16.gmra.mxu0 %v332
      %v472 = vpop.f32.mrf.mxu0
      %v473 = vadd.f32 %v292, %v472
      %v474 = vpop.f32.mrf.mxu0
      %v475 = vpop.f32.mrf.mxu0
      %v476 = vadd.f32 %v292, %v475
      %v477 = vpop.f32.mrf.mxu0
      %478 = vmatprep.mubr.bf16.mxu0 0
      %479 = vmatmul.mubr.bf16.gmra.mxu0 %v333
      %v480 = vpop.f32.mrf.mxu0
      %v481 = vadd.f32 %v292, %v480
      %v482 = vpop.f32.mrf.mxu0
      %v483 = vpop.f32.mrf.mxu0
      %v484 = vadd.f32 %v292, %v483
      %v485 = vpop.f32.mrf.mxu0
      %486 = vdwg.mxu0
      %vm487 = vcmask 130048
      %488 = vst.msk [vmem:[%s242] sm:$0xff] %vm487, %v425
      %489 = vst.msk [vmem:[%s242 + $0x8] sm:$0xff] %vm487, %v428
      %490 = vst.msk [vmem:[%s242 + $0x10] sm:$0xff] %vm487, %v433
      %491 = vst.msk [vmem:[%s242 + $0x18] sm:$0xff] %vm487, %v436
      %492 = vst.msk [vmem:[%s242 + $0x20] sm:$0xff] %vm487, %v441
      %493 = vst.msk [vmem:[%s242 + $0x28] sm:$0xff] %vm487, %v444
      %494 = vst.msk [vmem:[%s242 + $0x30] sm:$0xff] %vm487, %v449
      %495 = vst.msk [vmem:[%s242 + $0x38] sm:$0xff] %vm487, %v452
      %496 = vst.msk [vmem:[%s242 + $0x40] sm:$0xff] %vm487, %v457
      %497 = vst.msk [vmem:[%s242 + $0x48] sm:$0xff] %vm487, %v460
      %498 = vst.msk [vmem:[%s242 + $0x50] sm:$0xff] %vm487, %v465
      %499 = vst.msk [vmem:[%s242 + $0x58] sm:$0xff] %vm487, %v468
      %500 = vst.msk [vmem:[%s242 + $0x60] sm:$0xff] %vm487, %v473
      %501 = vst.msk [vmem:[%s242 + $0x68] sm:$0xff] %vm487, %v476
      %502 = vst.msk [vmem:[%s242 + $0x70] sm:$0xff] %vm487, %v481
      %503 = vst.msk [vmem:[%s242 + $0x78] sm:$0xff] %vm487, %v484
      %v504 = vlaneseq
      %v505 = vshrl.u32 %v504, 7
      %v506 = vadd.s32 %v505, 8
      %v507 = vadd.s32 %v505, 16
      %v508 = vadd.s32 %v505, 24
      %v509 = vadd.s32 %v505, 32
      %v510 = vadd.s32 %v505, 40
      %v511 = vadd.s32 %v505, 48
      %v512 = vadd.s32 %v505, 56
      %v513 = vadd.s32 %v505, 64
      %v514 = vadd.s32 %v505, 72
      %v515 = vadd.s32 %v505, 80
      %v516 = vadd.s32 %v505, 88
      %v517 = vadd.s32 %v505, 96
      %v518 = vadd.s32 %v505, 104
      %v519 = vadd.s32 %v505, 112
      %v520 = vadd.s32 %v505, 120
      %s521 = smul.u32 %s21, 128
      %v522 = vstv %s521
      %v523 = vadd.s32 %v505, %v522
      %v524 = vadd.s32 %v506, %v522
      %v525 = vadd.s32 %v507, %v522
      %v526 = vadd.s32 %v508, %v522
      %v527 = vadd.s32 %v509, %v522
      %v528 = vadd.s32 %v510, %v522
      %v529 = vadd.s32 %v511, %v522
      %v530 = vadd.s32 %v512, %v522
      %v531 = vadd.s32 %v513, %v522
      %v532 = vadd.s32 %v514, %v522
      %v533 = vadd.s32 %v515, %v522
      %v534 = vadd.s32 %v516, %v522
      %v535 = vadd.s32 %v517, %v522
      %v536 = vadd.s32 %v518, %v522
      %v537 = vadd.s32 %v519, %v522
      %v538 = vadd.s32 %v520, %v522
      %vm539 = vcmp.lt.s32.totalorder %v523, 256
      %vm540 = vcmp.lt.s32.totalorder %v524, 256
      %vm541 = vcmp.lt.s32.totalorder %v525, 256
      %vm542 = vcmp.lt.s32.totalorder %v526, 256
      %vm543 = vcmp.lt.s32.totalorder %v527, 256
      %vm544 = vcmp.lt.s32.totalorder %v528, 256
      %vm545 = vcmp.lt.s32.totalorder %v529, 256
      %vm546 = vcmp.lt.s32.totalorder %v530, 256
      %vm547 = vcmp.lt.s32.totalorder %v531, 256
      %vm548 = vcmp.lt.s32.totalorder %v532, 256
      %vm549 = vcmp.lt.s32.totalorder %v533, 256
      %vm550 = vcmp.lt.s32.totalorder %v534, 256
      %vm551 = vcmp.lt.s32.totalorder %v535, 256
      %vm552 = vcmp.lt.s32.totalorder %v536, 256
      %vm553 = vcmp.lt.s32.totalorder %v537, 256
      %vm554 = vcmp.lt.s32.totalorder %v538, 256
      %v555 = vsel %vm539, 1, 0
      %v556 = vsel %vm540, 1, 0
      %v557 = vsel %vm541, 1, 0
      %v558 = vsel %vm542, 1, 0
      %v559 = vsel %vm543, 1, 0
      %v560 = vsel %vm544, 1, 0
      %v561 = vsel %vm545, 1, 0
      %v562 = vsel %vm546, 1, 0
      %v563 = vsel %vm547, 1, 0
      %v564 = vsel %vm548, 1, 0
      %v565 = vsel %vm549, 1, 0
      %v566 = vsel %vm550, 1, 0
      %v567 = vsel %vm551, 1, 0
      %v568 = vsel %vm552, 1, 0
      %v569 = vsel %vm553, 1, 0
      %v570 = vsel %vm554, 1, 0
      %v571 = vcvt.s32.f32 %v555
      %v572 = vcvt.s32.f32 %v556
      %v573 = vcvt.s32.f32 %v557
      %v574 = vcvt.s32.f32 %v558
      %v575 = vcvt.s32.f32 %v559
      %v576 = vcvt.s32.f32 %v560
      %v577 = vcvt.s32.f32 %v561
      %v578 = vcvt.s32.f32 %v562
      %v579 = vcvt.s32.f32 %v563
      %v580 = vcvt.s32.f32 %v564
      %v581 = vcvt.s32.f32 %v565
      %v582 = vcvt.s32.f32 %v566
      %v583 = vcvt.s32.f32 %v567
      %v584 = vcvt.s32.f32 %v568
      %v585 = vcvt.s32.f32 %v569
      %v586 = vcvt.s32.f32 %v570
      %v587 = vmul.f32 %v425, %v571
      %v588 = vmul.f32 %v428, %v572
      %v589 = vmul.f32 %v433, %v573
      %v590 = vmul.f32 %v436, %v574
      %v591 = vmul.f32 %v441, %v575
      %v592 = vmul.f32 %v444, %v576
      %v593 = vmul.f32 %v449, %v577
      %v594 = vmul.f32 %v452, %v578
      %v595 = vmul.f32 %v457, %v579
      %v596 = vmul.f32 %v460, %v580
      %v597 = vmul.f32 %v465, %v581
      %v598 = vmul.f32 %v468, %v582
      %v599 = vmul.f32 %v473, %v583
      %v600 = vmul.f32 %v476, %v584
      %v601 = vmul.f32 %v481, %v585
      %v602 = vmul.f32 %v484, %v586
      %v603 = vsel %vm487, %v587, 0.0
      %v604 = vsel %vm487, %v588, 0.0
      %v605 = vadd.f32 %v603, %v604
      %v606 = vsel %vm487, %v589, 0.0
      %v607 = vadd.f32 %v605, %v606
      %v608 = vsel %vm487, %v590, 0.0
      %v609 = vadd.f32 %v607, %v608
      %v610 = vsel %vm487, %v591, 0.0
      %v611 = vadd.f32 %v609, %v610
      %v612 = vsel %vm487, %v592, 0.0
      %v613 = vadd.f32 %v611, %v612
      %v614 = vsel %vm487, %v593, 0.0
      %v615 = vadd.f32 %v613, %v614
      %v616 = vsel %vm487, %v594, 0.0
      %v617 = vadd.f32 %v615, %v616
      %v618 = vsel %vm487, %v595, 0.0
      %v619 = vadd.f32 %v617, %v618
      %v620 = vsel %vm487, %v596, 0.0
      %v621 = vadd.f32 %v619, %v620
      %v622 = vsel %vm487, %v597, 0.0
      %v623 = vadd.f32 %v621, %v622
      %v624 = vsel %vm487, %v598, 0.0
      %v625 = vadd.f32 %v623, %v624
      %v626 = vsel %vm487, %v599, 0.0
      %v627 = vadd.f32 %v625, %v626
      %v628 = vsel %vm487, %v600, 0.0
      %v629 = vadd.f32 %v627, %v628
      %v630 = vsel %vm487, %v601, 0.0
      %v631 = vadd.f32 %v629, %v630
      %v632 = vsel %vm487, %v602, 0.0
      %v633 = vadd.f32 %v631, %v632
      %v634 = vrot.slane %v633, 4
      %v635 = vadd.f32 %v633, %v634
      %v636 = vrot.slane %v635, 2
      %v637 = vadd.f32 %v635, %v636
      %v638 = vrot.slane %v637, 1
      %v639 = vadd.f32 %v637, %v638
      %v640 = vmul.f32 %v587, %v425
      %v641 = vmul.f32 %v588, %v428
      %v642 = vmul.f32 %v589, %v433
      %v643 = vmul.f32 %v590, %v436
      %v644 = vmul.f32 %v591, %v441
      %v645 = vmul.f32 %v592, %v444
      %v646 = vmul.f32 %v593, %v449
      %v647 = vmul.f32 %v594, %v452
      %v648 = vmul.f32 %v595, %v457
      %v649 = vmul.f32 %v596, %v460
      %v650 = vmul.f32 %v597, %v465
      %v651 = vmul.f32 %v598, %v468
      %v652 = vmul.f32 %v599, %v473
      %v653 = vmul.f32 %v600, %v476
      %v654 = vmul.f32 %v601, %v481
      %v655 = vmul.f32 %v602, %v484
      %v656 = vsel %vm487, %v640, 0.0
      %v657 = vsel %vm487, %v641, 0.0
      %v658 = vadd.f32 %v656, %v657
      %v659 = vsel %vm487, %v642, 0.0
      %v660 = vadd.f32 %v658, %v659
      %v661 = vsel %vm487, %v643, 0.0
      %v662 = vadd.f32 %v660, %v661
      %v663 = vsel %vm487, %v644, 0.0
      %v664 = vadd.f32 %v662, %v663
      %v665 = vsel %vm487, %v645, 0.0
      %v666 = vadd.f32 %v664, %v665
      %v667 = vsel %vm487, %v646, 0.0
      %v668 = vadd.f32 %v666, %v667
      %v669 = vsel %vm487, %v647, 0.0
      %v670 = vadd.f32 %v668, %v669
      %v671 = vsel %vm487, %v648, 0.0
      %v672 = vadd.f32 %v670, %v671
      %v673 = vsel %vm487, %v649, 0.0
      %v674 = vadd.f32 %v672, %v673
      %v675 = vsel %vm487, %v650, 0.0
      %v676 = vadd.f32 %v674, %v675
      %v677 = vsel %vm487, %v651, 0.0
      %v678 = vadd.f32 %v676, %v677
      %v679 = vsel %vm487, %v652, 0.0
      %v680 = vadd.f32 %v678, %v679
      %v681 = vsel %vm487, %v653, 0.0
      %v682 = vadd.f32 %v680, %v681
      %v683 = vsel %vm487, %v654, 0.0
      %v684 = vadd.f32 %v682, %v683
      %v685 = vsel %vm487, %v655, 0.0
      %v686 = vadd.f32 %v684, %v685
      %v687 = vrot.slane %v686, 4
      %v688 = vadd.f32 %v686, %v687
      %v689 = vrot.slane %v688, 2
      %v690 = vadd.f32 %v688, %v689
      %v691 = vrot.slane %v690, 1
      %v692 = vadd.f32 %v690, %v691
      %v693 = vld [vmem:[%s247] sm:$0x3]
      %vm694 = vcmask 1040384
      %v695 = vsel %vm694, %v639, %v692
      %v696 = vadd.f32 %v693, %v695
      %vm697 = vcmask 123904
      %698 = vst.msk [vmem:[%s247] sm:$0x3] %vm697, %v696
      %s699 = smul.u32 16, %s21
      %p700 = scmp.lt.s32.totalorder %s20, 1
      %s701 = scalar_select %p700, %s20, 1
      %p702 = scmp.lt.s32.totalorder %s699, 31
      %s703 = scalar_select %p702, %s699, 31
      %s704 = smul.addr %s701, 32
      %s705 = sadd.s32 %s703, %s704
      %s706 = smul.addr %s705, 8
      %s707 = scalar_lea.vmem %s3, %s706
      %p708 = scmp.lt.s32.totalorder %s20, 1
      %s709 = scalar_select %p708, %s20, 1
      %s710 = smul.addr %s709, 2
      %s711 = scalar_lea.vmem %s4, %s710
      // Predicated region
      $region37: #{discriminator_forward.8} parent=31 // pred_check
        %p712 = pneg %p118
      $region38: #{discriminator_forward.8} parent=31 // pred_check_branch
        %714 = sbr.rel (%p712) target = $region40
      $region39: #{discriminator_forward.8} parent=31 // pred_region
        %s715 = smul.u32 16, %s21
      $region40: #{discriminator_forward.8} parent=31 // pred_fallthru
        _
      // Predicated region
      $region41: #{discriminator_forward.8} parent=31 // pred_check
        %p716 = pneg %p144
      $region42: #{discriminator_forward.8} parent=31 // pred_check_branch
        %718 = sbr.rel (%p716) target = $region44
      $region43: #{discriminator_forward.8} parent=31 // pred_region
        _
      $region44: #{discriminator_forward.8} parent=31 // pred_fallthru
        _
    $region32: #{discriminator_forward.8} parent=5 // pred_fallthru
      _
    %p719 = scmp.le.s32.totalorder 2, %s11
    // Predicated region
    $region45: #{discriminator_forward.8} parent=5 // pred_check
      %p720 = pneg %p719
    $region46: #{discriminator_forward.8} parent=5 // pred_check_branch
      %722 = sbr.rel (%p720) target = $region48
    $region47: #{discriminator_forward.8} parent=5 // pred_region
      %s723 = ssub.s32 %s11, 2
      // Predicated region
      $region49: #{discriminator_forward.8} parent=47 // pred_check
        %p724 = pneg %p124
      $region50: #{discriminator_forward.8} parent=47 // pred_check_branch
        %726 = sbr.rel (%p724) target = $region52
      $region51: #{discriminator_forward.8} parent=47 // pred_region
        %s727 = smul.u32 16, %s23
        %p728 = scmp.lt.s32.totalorder %s22, 1
        %s729 = scalar_select %p728, %s22, 1
        %p730 = scmp.lt.s32.totalorder %s727, 31
        %s731 = scalar_select %p730, %s727, 31
        %s732 = smul.addr %s729, 32
        %s733 = sadd.s32 %s731, %s732
        %s734 = smul.addr %s733, 8
        %s735 = scalar_lea.vmem %s3, %s734
      $region52: #{discriminator_forward.8} parent=47 // pred_fallthru
        _
      // Predicated region
      $region53: #{discriminator_forward.8} parent=47 // pred_check
        %p736 = pneg %p150
      $region54: #{discriminator_forward.8} parent=47 // pred_check_branch
        %738 = sbr.rel (%p736) target = $region56
      $region55: #{discriminator_forward.8} parent=47 // pred_region
        %p739 = scmp.lt.s32.totalorder %s22, 1
        %s740 = scalar_select %p739, %s22, 1
        %s741 = smul.addr %s740, 2
        %s742 = scalar_lea.vmem %s4, %s741
      $region56: #{discriminator_forward.8} parent=47 // pred_fallthru
        _
    $region48: #{discriminator_forward.8} parent=5 // pred_fallthru
      _
  $region6: #{discriminator_forward.8} parent=0 // loop_footer
    %s15 = sadd.s32 1, %s11
  $region7: #{discriminator_forward.8} parent=0 // loop_footer_branch
    %10 = sbr.rel target = $region3
  $region8: #{discriminator_forward.8} parent=0 // loop_exit
    _

// kernel: discriminator_forward.10
$region0: #{discriminator_forward.10}
  #allocation0 [shape = 'u32[]', space=smem, size = 0x4, offset = 0x4, fixed_abs, tag = 'smem constant byte address 0x4 - core index']
  #allocation1 [shape = 'u32[144,128]{1,0:T(1,128)}', space=vmem, size = 0x12000, scoped, tag = 'internal scratch']
  %s0 = inlined_call_operand.vmem [shape: bf16[2,64,256], index: 0, kind: input, shape index: {}]
  %s1 = inlined_call_operand.vmem [shape: bf16[256,32], index: 1, kind: input, shape index: {}]
  %s2 = inlined_call_operand.vmem [shape: f32[1,32], index: 2, kind: input, shape index: {}]
  %s3 = inlined_call_operand.vmem [shape: bf16[2,64,32], index: 3, kind: output, shape index: {}]
  %s4 = sld [smem:[#allocation0]]
  $region45: #{discriminator_forward.10} parent=0
    _
  %s6 = ssub.s32 1, %s4
  %s7 = scalar_select 0, %s6, %s4
  loop: start=0, step=1, limit=4
  $region2: #{discriminator_forward.10} parent=0 // loop_pre_header
    _
  $region3: #{discriminator_forward.10} parent=0 // loop_header
    %s9 = sphi 0, %s13
    %p10 = scmp.ge.s32.totalorder %s9, 4
    %s19 = sphi 0, %s21
    %s22 = sphi 0, %s19
    %s23 = sphi 0, %s22
    %s39 = sphi 0, %s23
    %s43 = sphi 0, %s43
    %s45 = sphi 0, %s43
    %s46 = sphi 0, %s45
    %s60 = sphi 0, %s46
    %s64 = sphi 0, %s64
    %s66 = sphi 0, %s64
    %s67 = sphi 0, %s66
    %s81 = sphi 0, %s67
    %s87 = sphi 0, %s89
    %s90 = sphi 0, %s87
    %s91 = sphi 0, %s90
    %s107 = sphi 0, %s91
  $region4: #{discriminator_forward.10} parent=0 // loop_header_branch
    %12 = sbr.rel (%p10) target = $region8
  $region5: #{discriminator_forward.10} parent=0 // loop_body
    %s14 = ssub.s32 %s9, 1
    %s15 = ssub.s32 %s9, 2
    %s16 = sadd.s32 %s9, 1
    %s17 = ssub.s32 %s9, %s16
    %p18 = scmp.eq.s32.totalorder %s17, 0
    %s20 = sadd.s32 %s19, 1
    %s21 = scalar_select %p18, %s19, %s20
    %p24 = pneg %p18
    %p25 = scmp.eq.s32.totalorder %s9, 1
    %p26 = por %p24, %p25
    %p27 = scmp.ne.s32.totalorder %s19, %s22
    %p28 = scmp.eq.s32.totalorder %s9, 0
    %p29 = por %p27, %p28
    %p30 = scmp.ne.s32.totalorder %s19, %s22
    %p31 = scmp.eq.s32.totalorder %s14, 1
    %p32 = por %p30, %p31
    %p33 = scmp.ne.s32.totalorder %s22, %s23
    %p34 = scmp.eq.s32.totalorder %s14, 0
    %p35 = por %p33, %p34
    %p36 = scmp.ne.s32.totalorder %s22, %s23
    %p37 = scmp.eq.s32.totalorder %s15, 1
    %p38 = por %p36, %p37
    %p40 = scmp.ne.s32.totalorder %s23, %s39
    %p41 = scmp.eq.s32.totalorder %s15, 0
    %p42 = por %p40, %p41
    %s44 = sadd.s32 %s43, 1
    %p47 = scmp.eq.s32.totalorder %s9, 1
    %p48 = scmp.ne.s32.totalorder %s43, %s45
    %p49 = scmp.eq.s32.totalorder %s9, 0
    %p50 = por %p48, %p49
    %p51 = scmp.ne.s32.totalorder %s43, %s45
    %p52 = scmp.eq.s32.totalorder %s14, 1
    %p53 = por %p51, %p52
    %p54 = scmp.ne.s32.totalorder %s45, %s46
    %p55 = scmp.eq.s32.totalorder %s14, 0
    %p56 = por %p54, %p55
    %p57 = scmp.ne.s32.totalorder %s45, %s46
    %p58 = scmp.eq.s32.totalorder %s15, 1
    %p59 = por %p57, %p58
    %p61 = scmp.ne.s32.totalorder %s46, %s60
    %p62 = scmp.eq.s32.totalorder %s15, 0
    %p63 = por %p61, %p62
    %s65 = sadd.s32 %s64, 1
    %p68 = scmp.eq.s32.totalorder %s9, 1
    %p69 = scmp.ne.s32.totalorder %s64, %s66
    %p70 = scmp.eq.s32.totalorder %s9, 0
    %p71 = por %p69, %p70
    %p72 = scmp.ne.s32.totalorder %s64, %s66
    %p73 = scmp.eq.s32.totalorder %s14, 1
    %p74 = por %p72, %p73
    %p75 = scmp.ne.s32.totalorder %s66, %s67
    %p76 = scmp.eq.s32.totalorder %s14, 0
    %p77 = por %p75, %p76
    %p78 = scmp.ne.s32.totalorder %s66, %s67
    %p79 = scmp.eq.s32.totalorder %s15, 1
    %p80 = por %p78, %p79
    %p82 = scmp.ne.s32.totalorder %s67, %s81
    %p83 = scmp.eq.s32.totalorder %s15, 0
    %p84 = por %p82, %p83
    %s85 = ssub.s32 %s9, %s16
    %p86 = scmp.eq.s32.totalorder %s85, 0
    %s88 = sadd.s32 %s87, 1
    %s89 = scalar_select %p86, %s87, %s88
    %p92 = pneg %p86
    %p93 = scmp.eq.s32.totalorder %s9, 1
    %p94 = por %p92, %p93
    %p95 = scmp.ne.s32.totalorder %s87, %s90
    %p96 = scmp.eq.s32.totalorder %s9, 0
    %p97 = por %p95, %p96
    %p98 = scmp.ne.s32.totalorder %s87, %s90
    %p99 = scmp.eq.s32.totalorder %s14, 1
    %p100 = por %p98, %p99
    %p101 = scmp.ne.s32.totalorder %s90, %s91
    %p102 = scmp.eq.s32.totalorder %s14, 0
    %p103 = por %p101, %p102
    %p104 = scmp.ne.s32.totalorder %s90, %s91
    %p105 = scmp.eq.s32.totalorder %s15, 1
    %p106 = por %p104, %p105
    %p108 = scmp.ne.s32.totalorder %s91, %s107
    %p109 = scmp.eq.s32.totalorder %s15, 0
    %p110 = por %p108, %p109
    %p111 = scmp.le.s32.totalorder 1, %s9
    %p112 = scmp.lt.s32.totalorder %s9, 3
    %p113 = pnand %p111, %p112
    %p114 = pneg %p113
    // Predicated region
    $region9: #{discriminator_forward.10} parent=5 // pred_check
      _
    $region10: #{discriminator_forward.10} parent=5 // pred_check_branch
      %116 = sbr.rel (%p113) target = $region12
    $region11: #{discriminator_forward.10} parent=5 // pred_region
      %s117 = ssub.s32 %s9, 1
      // Predicated region
      $region13: #{discriminator_forward.10} parent=11 // pred_check
        %p118 = pneg %p56
      $region14: #{discriminator_forward.10} parent=11 // pred_check_branch
        %120 = sbr.rel (%p118) target = $region16
      $region15: #{discriminator_forward.10} parent=11 // pred_region
        _
      $region16: #{discriminator_forward.10} parent=11 // pred_fallthru
        _
      // Predicated region
      $region17: #{discriminator_forward.10} parent=11 // pred_check
        %p121 = pneg %p77
      $region18: #{discriminator_forward.10} parent=11 // pred_check_branch
        %123 = sbr.rel (%p121) target = $region20
      $region19: #{discriminator_forward.10} parent=11 // pred_region
        _
      $region20: #{discriminator_forward.10} parent=11 // pred_fallthru
        _
    $region12: #{discriminator_forward.10} parent=5 // pred_fallthru
      _
    %p124 = scmp.lt.s32.totalorder %s9, 2
    // Predicated region
    $region21: #{discriminator_forward.10} parent=5 // pred_check
      %p125 = pneg %p124
    $region22: #{discriminator_forward.10} parent=5 // pred_check_branch
      %127 = sbr.rel (%p125) target = $region24
    $region23: #{discriminator_forward.10} parent=5 // pred_region
      // Predicated region
      $region25: #{discriminator_forward.10} parent=23 // pred_check
        %p128 = pneg %p29
      $region26: #{discriminator_forward.10} parent=23 // pred_check_branch
        %130 = sbr.rel (%p128) target = $region28
      $region27: #{discriminator_forward.10} parent=23 // pred_region
        %p131 = scmp.lt.s32.totalorder %s9, 1
        %s132 = scalar_select %p131, %s9, 1
        %s133 = smul.addr %s132, 16
        %s134 = smul.addr %s133, 4
        %s135 = scalar_lea.vmem %s0, %s134
      $region28: #{discriminator_forward.10} parent=23 // pred_fallthru
        _
    $region24: #{discriminator_forward.10} parent=5 // pred_fallthru
      _
    %p136 = scmp.le.s32.totalorder 1, %s9
    %p137 = scmp.lt.s32.totalorder %s9, 3
    %p138 = pnand %p136, %p137
    %p139 = pneg %p138
    // Predicated region
    $region29: #{discriminator_forward.10} parent=5 // pred_check
      _
    $region30: #{discriminator_forward.10} parent=5 // pred_check_branch
      %141 = sbr.rel (%p138) target = $region32
    $region31: #{discriminator_forward.10} parent=5 // pred_region
      %s142 = ssub.s32 %s9, 1
      %p143 = scmp.lt.s32.totalorder %s14, 1
      %s144 = scalar_select %p143, %s14, 1
      %s145 = smul.addr %s144, 16
      %s146 = smul.addr %s145, 4
      %s147 = scalar_lea.vmem %s0, %s146
      %p148 = pneg %p35
      %p149 = pneg %p32
      %p150 = pneg %p56
      %p151 = pneg %p53
      %p152 = pneg %p77
      %p153 = pneg %p74
      %p154 = pneg %p103
      %p155 = pneg %p100
      %p156 = scmp.lt.s32.totalorder %s14, 1
      %s157 = scalar_select %p156, %s14, 1
      %s158 = smul.addr %s157, 8
      %s159 = smul.addr %s158, 4
      %s160 = scalar_lea.vmem %s3, %s159
      %p161 = scmp.lt.s32.totalorder %s14, 1
      %s162 = scalar_select %p161, %s14, 1
      %s163 = smul.addr %s162, 16
      %s164 = smul.addr %s163, 4
      %s165 = scalar_lea.vmem %s0, %s164
      %p166 = scmp.lt.s32.totalorder %s14, 1
      %s167 = scalar_select %p166, %s14, 1
      %s168 = smul.addr %s167, 8
      %s169 = smul.addr %s168, 4
      %s170 = scalar_lea.vmem %s3, %s169
      %v172 = vld [vmem:[%s165] sm:$0xff]
      %v173 = vld [vmem:[%s165 + $0x8] sm:$0xff]
      %v174 = vld [vmem:[%s165 + $0x10] sm:$0xff]
      %v175 = vld [vmem:[%s165 + $0x18] sm:$0xff]
      %v176 = vld [vmem:[%s165 + $0x20] sm:$0xff]
      %v177 = vld [vmem:[%s165 + $0x28] sm:$0xff]
      %v178 = vld [vmem:[%s165 + $0x30] sm:$0xff]
      %v179 = vld [vmem:[%s165 + $0x38] sm:$0xff]
      %v180 = vld [vmem:[%s1] sm:$0xf]
      %v181 = vld [vmem:[%s1 + $0x4] sm:$0xf]
      %v182 = vld [vmem:[%s1 + $0x8] sm:$0xf]
      %v183 = vld [vmem:[%s1 + $0xc] sm:$0xf]
      %v184 = vld [vmem:[%s1 + $0x10] sm:$0xf]
      %v185 = vld [vmem:[%s1 + $0x14] sm:$0xf]
      %v186 = vld [vmem:[%s1 + $0x18] sm:$0xf]
      %v187 = vld [vmem:[%s1 + $0x1c] sm:$0xf]
      %v188 = vld [vmem:[%s1 + $0x20] sm:$0xf]
      %v189 = vld [vmem:[%s1 + $0x24] sm:$0xf]
      %v190 = vld [vmem:[%s1 + $0x28] sm:$0xf]
      %v191 = vld [vmem:[%s1 + $0x2c] sm:$0xf]
      %v192 = vld [vmem:[%s1 + $0x30] sm:$0xf]
      %v193 = vld [vmem:[%s1 + $0x34] sm:$0xf]
      %v194 = vld [vmem:[%s1 + $0x38] sm:$0xf]
      %v195 = vld [vmem:[%s1 + $0x3c] sm:$0xf]
      %v196 = vld [vmem:[%s1 + $0x40] sm:$0xf]
      %v197 = vld [vmem:[%s1 + $0x44] sm:$0xf]
      %v198 = vld [vmem:[%s1 + $0x48] sm:$0xf]
      %v199 = vld [vmem:[%s1 + $0x4c] sm:$0xf]
      %v200 = vld [vmem:[%s1 + $0x50] sm:$0xf]
      %v201 = vld [vmem:[%s1 + $0x54] sm:$0xf]
      %v202 = vld [vmem:[%s1 + $0x58] sm:$0xf]
      %v203 = vld [vmem:[%s1 + $0x5c] sm:$0xf]
      %v204 = vld [vmem:[%s1 + $0x60] sm:$0xf]
      %v205 = vld [vmem:[%s1 + $0x64] sm:$0xf]
      %v206 = vld [vmem:[%s1 + $0x68] sm:$0xf]
      %v207 = vld [vmem:[%s1 + $0x6c] sm:$0xf]
      %v208 = vld [vmem:[%s1 + $0x70] sm:$0xf]
      %v209 = vld [vmem:[%s1 + $0x74] sm:$0xf]
      %v210 = vld [vmem:[%s1 + $0x78] sm:$0xf]
      %v211 = vld [vmem:[%s1 + $0x7c] sm:$0xf]
      %v212 = vld [vmem:[%s2] sm:$0x1]
      %v214 = vlaneseq
      %v215 = vshrl.u32 %v214, 7
      %v216 = vsub.s32 0, %v215
      %v217 = vrot.slane %v212, %v216
      %v227 = vunpack.c.l.b16 %v172
      %v228 = vunpack.c.h.b16 %v172
      %v229 = vunpack.c.l.b16 %v173
      %v230 = vunpack.c.h.b16 %v173
      %v231 = vunpack.c.l.b16 %v174
      %v232 = vunpack.c.h.b16 %v174
      %v233 = vunpack.c.l.b16 %v175
      %v234 = vunpack.c.h.b16 %v175
      %v235 = vunpack.c.l.b16 %v176
      %v236 = vunpack.c.h.b16 %v176
      %v237 = vunpack.c.l.b16 %v177
      %v238 = vunpack.c.h.b16 %v177
      %v239 = vunpack.c.l.b16 %v178
      %v240 = vunpack.c.h.b16 %v178
      %v241 = vunpack.c.l.b16 %v179
      %v242 = vunpack.c.h.b16 %v179
      %v243 = vpack.c.b16 %v229, %v227
      %v244 = vpack.c.b16 %v230, %v228
      %v245 = vpack.c.b16 %v233, %v231
      %v246 = vpack.c.b16 %v234, %v232
      %v247 = vpack.c.b16 %v237, %v235
      %v248 = vpack.c.b16 %v238, %v236
      %v249 = vpack.c.b16 %v241, %v239
      %v250 = vpack.c.b16 %v242, %v240
      %v291 = vunpack.c.l.b16 %v180
      %v292 = vunpack.c.l.b16 %v181
      %v293 = vunpack.c.l.b16 %v182
      %v294 = vunpack.c.l.b16 %v183
      %v295 = vunpack.c.l.b16 %v184
      %v296 = vunpack.c.l.b16 %v185
      %v297 = vunpack.c.l.b16 %v186
      %v298 = vunpack.c.l.b16 %v187
      %v299 = vunpack.c.l.b16 %v188
      %v300 = vunpack.c.l.b16 %v189
      %v301 = vunpack.c.l.b16 %v190
      %v302 = vunpack.c.l.b16 %v191
      %v303 = vunpack.c.l.b16 %v192
      %v304 = vunpack.c.l.b16 %v193
      %v305 = vunpack.c.l.b16 %v194
      %v306 = vunpack.c.l.b16 %v195
      %v307 = vunpack.c.l.b16 %v196
      %v308 = vunpack.c.l.b16 %v197
      %v309 = vunpack.c.l.b16 %v198
      %v310 = vunpack.c.l.b16 %v199
      %v311 = vunpack.c.l.b16 %v200
      %v312 = vunpack.c.l.b16 %v201
      %v313 = vunpack.c.l.b16 %v202
      %v314 = vunpack.c.l.b16 %v203
      %v315 = vunpack.c.l.b16 %v204
      %v316 = vunpack.c.l.b16 %v205
      %v317 = vunpack.c.l.b16 %v206
      %v318 = vunpack.c.l.b16 %v207
      %v319 = vunpack.c.l.b16 %v208
      %v320 = vunpack.c.l.b16 %v209
      %v321 = vunpack.c.l.b16 %v210
      %v322 = vunpack.c.l.b16 %v211
      %v323 = vpack.c.b16 %v292, %v291
      %v324 = vpack.c.b16 %v294, %v293
      %v325 = vpack.c.b16 %v296, %v295
      %v326 = vpack.c.b16 %v298, %v297
      %v327 = vpack.c.b16 %v300, %v299
      %v328 = vpack.c.b16 %v302, %v301
      %v329 = vpack.c.b16 %v304, %v303
      %v330 = vpack.c.b16 %v306, %v305
      %v331 = vpack.c.b16 %v308, %v307
      %v332 = vpack.c.b16 %v310, %v309
      %v333 = vpack.c.b16 %v312, %v311
      %v334 = vpack.c.b16 %v314, %v313
      %v335 = vpack.c.b16 %v316, %v315
      %v336 = vpack.c.b16 %v318, %v317
      %v337 = vpack.c.b16 %v320, %v319
      %v338 = vpack.c.b16 %v322, %v321
      %355 = vmatprep.subr.bf16.mxu0 0
      %356 = vmatpush1.bf16.msra.mxu0 %v330
      %357 = vmatprep.subr.bf16.mxu0 0
      %358 = vmatpush1.bf16.msra.mxu0 %v329
      %359 = vmatprep.subr.bf16.mxu0 0
      %360 = vmatpush1.bf16.msra.mxu0 %v328
      %361 = vmatprep.subr.bf16.mxu0 0
      %362 = vmatpush1.bf16.msra.mxu0 %v327
      %363 = vmatprep.subr.bf16.mxu0 0
      %364 = vmatpush1.bf16.msra.mxu0 %v326
      %365 = vmatprep.subr.bf16.mxu0 0
      %366 = vmatpush1.bf16.msra.mxu0 %v325
      %367 = vmatprep.subr.bf16.mxu0 0
      %368 = vmatpush1.bf16.msra.mxu0 %v324
      %369 = vmatprep.subr.bf16.mxu0 0
      %370 = vmatpush1.bf16.msra.mxu0 %v323
      %371 = vmatprep.subr.bf16.mxu0 0
      %372 = vmatpush2.bf16.msra.mxu0 %v338
      %373 = vmatprep.subr.bf16.mxu0 0
      %374 = vmatpush2.bf16.msra.mxu0 %v337
      %375 = vmatprep.subr.bf16.mxu0 0
      %376 = vmatpush2.bf16.msra.mxu0 %v336
      %377 = vmatprep.subr.bf16.mxu0 0
      %378 = vmatpush2.bf16.msra.mxu0 %v335
      %379 = vmatprep.subr.bf16.mxu0 0
      %380 = vmatpush2.bf16.msra.mxu0 %v334
      %381 = vmatprep.subr.bf16.mxu0 0
      %382 = vmatpush2.bf16.msra.mxu0 %v333
      %383 = vmatprep.subr.bf16.mxu0 0
      %384 = vmatpush2.bf16.msra.mxu0 %v332
      %385 = vmatprep.subr.bf16.mxu0 0
      %386 = vmatpush2.bf16.msra.mxu0 %v331
      %387 = vmatprep.mubr.bf16.mxu0 %v244
      %388 = vmatmul.mubr.bf16.gmra.mxu0 %v243
      %v389 = vpop.f32.mrf.mxu0
      %v390 = vadd.f32 %v217, %v389
      %v391 = vpop.f32.mrf.mxu0
      %v392 = vpop.f32.mrf.mxu0
      %v393 = vadd.f32 %v217, %v392
      %v394 = vpop.f32.mrf.mxu0
      %395 = vmatprep.mubr.bf16.mxu0 %v246
      %396 = vmatmul.mubr.bf16.gmra.mxu0 %v245
      %v397 = vpop.f32.mrf.mxu0
      %v398 = vadd.f32 %v217, %v397
      %v399 = vpop.f32.mrf.mxu0
      %v400 = vpop.f32.mrf.mxu0
      %v401 = vadd.f32 %v217, %v400
      %v402 = vpop.f32.mrf.mxu0
      %403 = vmatprep.mubr.bf16.mxu0 %v248
      %404 = vmatmul.mubr.bf16.gmra.mxu0 %v247
      %v405 = vpop.f32.mrf.mxu0
      %v406 = vadd.f32 %v217, %v405
      %v407 = vpop.f32.mrf.mxu0
      %v408 = vpop.f32.mrf.mxu0
      %v409 = vadd.f32 %v217, %v408
      %v410 = vpop.f32.mrf.mxu0
      %411 = vmatprep.mubr.bf16.mxu0 %v250
      %412 = vmatmul.mubr.bf16.gmra.mxu0 %v249
      %v413 = vpop.f32.mrf.mxu0
      %v414 = vadd.f32 %v217, %v413
      %v415 = vpop.f32.mrf.mxu0
      %v416 = vpop.f32.mrf.mxu0
      %v417 = vadd.f32 %v217, %v416
      %v418 = vpop.f32.mrf.mxu0
      %419 = vdwg.mxu0
      %vm420 = vcmask 261120
      %v421 = vsel %vm420, %v390, 0.0
      %v422 = vsel %vm420, %v393, 0.0
      %v423 = vadd.f32 %v421, %v422
      %v424 = vsel %vm420, %v398, 0.0
      %v425 = vadd.f32 %v423, %v424
      %v426 = vsel %vm420, %v401, 0.0
      %v427 = vadd.f32 %v425, %v426
      %v428 = vsel %vm420, %v406, 0.0
      %v429 = vadd.f32 %v427, %v428
      %v430 = vsel %vm420, %v409, 0.0
      %v431 = vadd.f32 %v429, %v430
      %v432 = vsel %vm420, %v414, 0.0
      %v433 = vadd.f32 %v431, %v432
      %v434 = vsel %vm420, %v417, 0.0
      %v435 = vadd.f32 %v433, %v434
      %v436 = vrot.slane %v435, 4
      %v437 = vadd.f32 %v435, %v436
      %v438 = vrot.slane %v437, 2
      %v439 = vadd.f32 %v437, %v438
      %v440 = vrot.slane %v439, 1
      %v441 = vadd.f32 %v439, %v440
      %v442 = vrcp.pop 64.0
      %v443 = vmul.f32 %v441, %v442
      %v444 = vsub.f32 %v390, %v443
      %v445 = vsub.f32 %v393, %v443
      %v446 = vsub.f32 %v398, %v443
      %v447 = vsub.f32 %v401, %v443
      %v448 = vsub.f32 %v406, %v443
      %v449 = vsub.f32 %v409, %v443
      %v450 = vsub.f32 %v414, %v443
      %v451 = vsub.f32 %v417, %v443
      %v452 = vmul.f32 %v444, %v444
      %v453 = vmul.f32 %v445, %v445
      %v454 = vmul.f32 %v446, %v446
      %v455 = vmul.f32 %v447, %v447
      %v456 = vmul.f32 %v448, %v448
      %v457 = vmul.f32 %v449, %v449
      %v458 = vmul.f32 %v450, %v450
      %v459 = vmul.f32 %v451, %v451
      %v460 = vsel %vm420, %v452, 0.0
      %v461 = vsel %vm420, %v453, 0.0
      %v462 = vadd.f32 %v460, %v461
      %v463 = vsel %vm420, %v454, 0.0
      %v464 = vadd.f32 %v462, %v463
      %v465 = vsel %vm420, %v455, 0.0
      %v466 = vadd.f32 %v464, %v465
      %v467 = vsel %vm420, %v456, 0.0
      %v468 = vadd.f32 %v466, %v467
      %v469 = vsel %vm420, %v457, 0.0
      %v470 = vadd.f32 %v468, %v469
      %v471 = vsel %vm420, %v458, 0.0
      %v472 = vadd.f32 %v470, %v471
      %v473 = vsel %vm420, %v459, 0.0
      %v474 = vadd.f32 %v472, %v473
      %v475 = vrot.slane %v474, 4
      %v476 = vadd.f32 %v474, %v475
      %v477 = vrot.slane %v476, 2
      %v478 = vadd.f32 %v476, %v477
      %v479 = vrot.slane %v478, 1
      %v480 = vadd.f32 %v478, %v479
      %v481 = vmul.f32 %v480, %v442
      %v482 = vadd.f32 %v481, 1e-05
      %v483 = vrsqrt.pop %v482
      %v484 = vmul.f32 %v444, %v483
      %v485 = vmul.f32 %v445, %v483
      %v486 = vmul.f32 %v446, %v483
      %v487 = vmul.f32 %v447, %v483
      %v488 = vmul.f32 %v448, %v483
      %v489 = vmul.f32 %v449, %v483
      %v490 = vmul.f32 %v450, %v483
      %v491 = vmul.f32 %v451, %v483
      %vm492 = vcmp.ge.f32.partialorder %v484, 0.0
      %vm493 = vcmp.ge.f32.partialorder %v485, 0.0
      %vm494 = vcmp.ge.f32.partialorder %v486, 0.0
      %vm495 = vcmp.ge.f32.partialorder %v487, 0.0
      %vm496 = vcmp.ge.f32.partialorder %v488, 0.0
      %vm497 = vcmp.ge.f32.partialorder %v489, 0.0
      %vm498 = vcmp.ge.f32.partialorder %v490, 0.0
      %vm499 = vcmp.ge.f32.partialorder %v491, 0.0
      %v500 = vmul.f32 %v484, 0.2
      %v501 = vmul.f32 %v485, 0.2
      %v502 = vmul.f32 %v486, 0.2
      %v503 = vmul.f32 %v487, 0.2
      %v504 = vmul.f32 %v488, 0.2
      %v505 = vmul.f32 %v489, 0.2
      %v506 = vmul.f32 %v490, 0.2
      %v507 = vmul.f32 %v491, 0.2
      %v508 = vsel %vm492, %v484, %v500
      %v509 = vsel %vm493, %v485, %v501
      %v510 = vsel %vm494, %v486, %v502
      %v511 = vsel %vm495, %v487, %v503
      %v512 = vsel %vm496, %v488, %v504
      %v513 = vsel %vm497, %v489, %v505
      %v514 = vsel %vm498, %v490, %v506
      %v515 = vsel %vm499, %v491, %v507
      %v516 = vpack.c.bf16 %v509, %v508
      %v517 = vpack.c.bf16 %v511, %v510
      %v518 = vpack.c.bf16 %v513, %v512
      %v519 = vpack.c.bf16 %v515, %v514
      %v524 = vunpack.c.l.b16 %v516
      %v525 = vunpack.c.h.b16 %v516
      %v526 = vunpack.c.l.b16 %v517
      %v527 = vunpack.c.h.b16 %v517
      %v528 = vunpack.c.l.b16 %v518
      %v529 = vunpack.c.h.b16 %v518
      %v530 = vunpack.c.l.b16 %v519
      %v531 = vunpack.c.h.b16 %v519
      %v532 = vpack.c.b16 %v524, %v524
      %v533 = vpack.c.b16 %v525, %v525
      %v534 = vpack.c.b16 %v526, %v526
      %v535 = vpack.c.b16 %v527, %v527
      %v536 = vpack.c.b16 %v528, %v528
      %v537 = vpack.c.b16 %v529, %v529
      %v538 = vpack.c.b16 %v530, %v530
      %v539 = vpack.c.b16 %v531, %v531
      %vm548 = vcmask 257024
      %549 = vst.msk [vmem:[%s170] sm:$0xf] %vm548, %v532
      %550 = vst.msk [vmem:[%s170 + $0x4] sm:$0xf] %vm548, %v533
      %551 = vst.msk [vmem:[%s170 + $0x8] sm:$0xf] %vm548, %v534
      %552 = vst.msk [vmem:[%s170 + $0xc] sm:$0xf] %vm548, %v535
      %553 = vst.msk [vmem:[%s170 + $0x10] sm:$0xf] %vm548, %v536
      %554 = vst.msk [vmem:[%s170 + $0x14] sm:$0xf] %vm548, %v537
      %555 = vst.msk [vmem:[%s170 + $0x18] sm:$0xf] %vm548, %v538
      %556 = vst.msk [vmem:[%s170 + $0x1c] sm:$0xf] %vm548, %v539
      %p557 = scmp.lt.s32.totalorder %s14, 1
      %s558 = scalar_select %p557, %s14, 1
      %s559 = smul.addr %s558, 8
      %s560 = smul.addr %s559, 4
      %s561 = scalar_lea.vmem %s3, %s560
      // Predicated region
      $region33: #{discriminator_forward.10} parent=31 // pred_check
        %p562 = pneg %p100
      $region34: #{discriminator_forward.10} parent=31 // pred_check_branch
        %564 = sbr.rel (%p562) target = $region36
      $region35: #{discriminator_forward.10} parent=31 // pred_region
        _
      $region36: #{discriminator_forward.10} parent=31 // pred_fallthru
        _
    $region32: #{discriminator_forward.10} parent=5 // pred_fallthru
      _
    %p565 = scmp.le.s32.totalorder 2, %s9
    // Predicated region
    $region37: #{discriminator_forward.10} parent=5 // pred_check
      %p566 = pneg %p565
    $region38: #{discriminator_forward.10} parent=5 // pred_check_branch
      %568 = sbr.rel (%p566) target = $region40
    $region39: #{discriminator_forward.10} parent=5 // pred_region
      %s569 = ssub.s32 %s9, 2
      // Predicated region
      $region41: #{discriminator_forward.10} parent=39 // pred_check
        %p570 = pneg %p106
      $region42: #{discriminator_forward.10} parent=39 // pred_check_branch
        %572 = sbr.rel (%p570) target = $region44
      $region43: #{discriminator_forward.10} parent=39 // pred_region
        %p573 = scmp.lt.s32.totalorder %s15, 1
        %s574 = scalar_select %p573, %s15, 1
        %s575 = smul.addr %s574, 8
        %s576 = smul.addr %s575, 4
        %s577 = scalar_lea.vmem %s3, %s576
      $region44: #{discriminator_forward.10} parent=39 // pred_fallthru
        _
    $region40: #{discriminator_forward.10} parent=5 // pred_fallthru
      _
  $region6: #{discriminator_forward.10} parent=0 // loop_footer
    %s13 = sadd.s32 1, %s9
  $region7: #{discriminator_forward.10} parent=0 // loop_footer_branch
    %8 = sbr.rel target = $region3
  $region8: #{discriminator_forward.10} parent=0 // loop_exit
    _

// kernel: discriminator_forward.11
$region0: #{discriminator_forward.11}
  #allocation0 [shape = 'u32[]', space=smem, size = 0x4, offset = 0x4, fixed_abs, tag = 'smem constant byte address 0x4 - core index']
  #allocation1 [shape = 'u32[144,128]{1,0:T(1,128)}', space=vmem, size = 0x12000, scoped, tag = 'internal scratch']
  %s0 = inlined_call_operand.vmem [shape: bf16[2,16,512], index: 0, kind: input, shape index: {}]
  %s1 = inlined_call_operand.vmem [shape: bf16[512,64], index: 1, kind: input, shape index: {}]
  %s2 = inlined_call_operand.vmem [shape: f32[1,64], index: 2, kind: input, shape index: {}]
  %s3 = inlined_call_operand.vmem [shape: bf16[2,16,64], index: 3, kind: output, shape index: {}]
  %s4 = sld [smem:[#allocation0]]
  $region45: #{discriminator_forward.11} parent=0
    _
  %s6 = ssub.s32 1, %s4
  %s7 = scalar_select 0, %s6, %s4
  loop: start=0, step=1, limit=4
  $region2: #{discriminator_forward.11} parent=0 // loop_pre_header
    _
  $region3: #{discriminator_forward.11} parent=0 // loop_header
    %s9 = sphi 0, %s13
    %p10 = scmp.ge.s32.totalorder %s9, 4
    %s19 = sphi 0, %s21
    %s22 = sphi 0, %s19
    %s23 = sphi 0, %s22
    %s39 = sphi 0, %s23
    %s43 = sphi 0, %s43
    %s45 = sphi 0, %s43
    %s46 = sphi 0, %s45
    %s60 = sphi 0, %s46
    %s64 = sphi 0, %s64
    %s66 = sphi 0, %s64
    %s67 = sphi 0, %s66
    %s81 = sphi 0, %s67
    %s87 = sphi 0, %s89
    %s90 = sphi 0, %s87
    %s91 = sphi 0, %s90
    %s107 = sphi 0, %s91
  $region4: #{discriminator_forward.11} parent=0 // loop_header_branch
    %12 = sbr.rel (%p10) target = $region8
  $region5: #{discriminator_forward.11} parent=0 // loop_body
    %s14 = ssub.s32 %s9, 1
    %s15 = ssub.s32 %s9, 2
    %s16 = sadd.s32 %s9, 1
    %s17 = ssub.s32 %s9, %s16
    %p18 = scmp.eq.s32.totalorder %s17, 0
    %s20 = sadd.s32 %s19, 1
    %s21 = scalar_select %p18, %s19, %s20
    %p24 = pneg %p18
    %p25 = scmp.eq.s32.totalorder %s9, 1
    %p26 = por %p24, %p25
    %p27 = scmp.ne.s32.totalorder %s19, %s22
    %p28 = scmp.eq.s32.totalorder %s9, 0
    %p29 = por %p27, %p28
    %p30 = scmp.ne.s32.totalorder %s19, %s22
    %p31 = scmp.eq.s32.totalorder %s14, 1
    %p32 = por %p30, %p31
    %p33 = scmp.ne.s32.totalorder %s22, %s23
    %p34 = scmp.eq.s32.totalorder %s14, 0
    %p35 = por %p33, %p34
    %p36 = scmp.ne.s32.totalorder %s22, %s23
    %p37 = scmp.eq.s32.totalorder %s15, 1
    %p38 = por %p36, %p37
    %p40 = scmp.ne.s32.totalorder %s23, %s39
    %p41 = scmp.eq.s32.totalorder %s15, 0
    %p42 = por %p40, %p41
    %s44 = sadd.s32 %s43, 1
    %p47 = scmp.eq.s32.totalorder %s9, 1
    %p48 = scmp.ne.s32.totalorder %s43, %s45
    %p49 = scmp.eq.s32.totalorder %s9, 0
    %p50 = por %p48, %p49
    %p51 = scmp.ne.s32.totalorder %s43, %s45
    %p52 = scmp.eq.s32.totalorder %s14, 1
    %p53 = por %p51, %p52
    %p54 = scmp.ne.s32.totalorder %s45, %s46
    %p55 = scmp.eq.s32.totalorder %s14, 0
    %p56 = por %p54, %p55
    %p57 = scmp.ne.s32.totalorder %s45, %s46
    %p58 = scmp.eq.s32.totalorder %s15, 1
    %p59 = por %p57, %p58
    %p61 = scmp.ne.s32.totalorder %s46, %s60
    %p62 = scmp.eq.s32.totalorder %s15, 0
    %p63 = por %p61, %p62
    %s65 = sadd.s32 %s64, 1
    %p68 = scmp.eq.s32.totalorder %s9, 1
    %p69 = scmp.ne.s32.totalorder %s64, %s66
    %p70 = scmp.eq.s32.totalorder %s9, 0
    %p71 = por %p69, %p70
    %p72 = scmp.ne.s32.totalorder %s64, %s66
    %p73 = scmp.eq.s32.totalorder %s14, 1
    %p74 = por %p72, %p73
    %p75 = scmp.ne.s32.totalorder %s66, %s67
    %p76 = scmp.eq.s32.totalorder %s14, 0
    %p77 = por %p75, %p76
    %p78 = scmp.ne.s32.totalorder %s66, %s67
    %p79 = scmp.eq.s32.totalorder %s15, 1
    %p80 = por %p78, %p79
    %p82 = scmp.ne.s32.totalorder %s67, %s81
    %p83 = scmp.eq.s32.totalorder %s15, 0
    %p84 = por %p82, %p83
    %s85 = ssub.s32 %s9, %s16
    %p86 = scmp.eq.s32.totalorder %s85, 0
    %s88 = sadd.s32 %s87, 1
    %s89 = scalar_select %p86, %s87, %s88
    %p92 = pneg %p86
    %p93 = scmp.eq.s32.totalorder %s9, 1
    %p94 = por %p92, %p93
    %p95 = scmp.ne.s32.totalorder %s87, %s90
    %p96 = scmp.eq.s32.totalorder %s9, 0
    %p97 = por %p95, %p96
    %p98 = scmp.ne.s32.totalorder %s87, %s90
    %p99 = scmp.eq.s32.totalorder %s14, 1
    %p100 = por %p98, %p99
    %p101 = scmp.ne.s32.totalorder %s90, %s91
    %p102 = scmp.eq.s32.totalorder %s14, 0
    %p103 = por %p101, %p102
    %p104 = scmp.ne.s32.totalorder %s90, %s91
    %p105 = scmp.eq.s32.totalorder %s15, 1
    %p106 = por %p104, %p105
    %p108 = scmp.ne.s32.totalorder %s91, %s107
    %p109 = scmp.eq.s32.totalorder %s15, 0
    %p110 = por %p108, %p109
    %p111 = scmp.le.s32.totalorder 1, %s9
    %p112 = scmp.lt.s32.totalorder %s9, 3
    %p113 = pnand %p111, %p112
    %p114 = pneg %p113
    // Predicated region
    $region9: #{discriminator_forward.11} parent=5 // pred_check
      _
    $region10: #{discriminator_forward.11} parent=5 // pred_check_branch
      %116 = sbr.rel (%p113) target = $region12
    $region11: #{discriminator_forward.11} parent=5 // pred_region
      %s117 = ssub.s32 %s9, 1
      // Predicated region
      $region13: #{discriminator_forward.11} parent=11 // pred_check
        %p118 = pneg %p56
      $region14: #{discriminator_forward.11} parent=11 // pred_check_branch
        %120 = sbr.rel (%p118) target = $region16
      $region15: #{discriminator_forward.11} parent=11 // pred_region
        _
      $region16: #{discriminator_forward.11} parent=11 // pred_fallthru
        _
      // Predicated region
      $region17: #{discriminator_forward.11} parent=11 // pred_check
        %p121 = pneg %p77
      $region18: #{discriminator_forward.11} parent=11 // pred_check_branch
        %123 = sbr.rel (%p121) target = $region20
      $region19: #{discriminator_forward.11} parent=11 // pred_region
        _
      $region20: #{discriminator_forward.11} parent=11 // pred_fallthru
        _
    $region12: #{discriminator_forward.11} parent=5 // pred_fallthru
      _
    %p124 = scmp.lt.s32.totalorder %s9, 2
    // Predicated region
    $region21: #{discriminator_forward.11} parent=5 // pred_check
      %p125 = pneg %p124
    $region22: #{discriminator_forward.11} parent=5 // pred_check_branch
      %127 = sbr.rel (%p125) target = $region24
    $region23: #{discriminator_forward.11} parent=5 // pred_region
      // Predicated region
      $region25: #{discriminator_forward.11} parent=23 // pred_check
        %p128 = pneg %p29
      $region26: #{discriminator_forward.11} parent=23 // pred_check_branch
        %130 = sbr.rel (%p128) target = $region28
      $region27: #{discriminator_forward.11} parent=23 // pred_region
        %p131 = scmp.lt.s32.totalorder %s9, 1
        %s132 = scalar_select %p131, %s9, 1
        %s133 = smul.addr %s132, 8
        %s134 = smul.addr %s133, 4
        %s135 = scalar_lea.vmem %s0, %s134
      $region28: #{discriminator_forward.11} parent=23 // pred_fallthru
        _
    $region24: #{discriminator_forward.11} parent=5 // pred_fallthru
      _
    %p136 = scmp.le.s32.totalorder 1, %s9
    %p137 = scmp.lt.s32.totalorder %s9, 3
    %p138 = pnand %p136, %p137
    %p139 = pneg %p138
    // Predicated region
    $region29: #{discriminator_forward.11} parent=5 // pred_check
      _
    $region30: #{discriminator_forward.11} parent=5 // pred_check_branch
      %141 = sbr.rel (%p138) target = $region32
    $region31: #{discriminator_forward.11} parent=5 // pred_region
      %s142 = ssub.s32 %s9, 1
      %p143 = scmp.lt.s32.totalorder %s14, 1
      %s144 = scalar_select %p143, %s14, 1
      %s145 = smul.addr %s144, 8
      %s146 = smul.addr %s145, 4
      %s147 = scalar_lea.vmem %s0, %s146
      %p148 = pneg %p35
      %p149 = pneg %p32
      %p150 = pneg %p56
      %p151 = pneg %p53
      %p152 = pneg %p77
      %p153 = pneg %p74
      %p154 = pneg %p103
      %p155 = pneg %p100
      %p156 = scmp.lt.s32.totalorder %s14, 1
      %s157 = scalar_select %p156, %s14, 1
      %s158 = smul.addr %s157, 2
      %s159 = smul.addr %s158, 4
      %s160 = scalar_lea.vmem %s3, %s159
      %p161 = scmp.lt.s32.totalorder %s14, 1
      %s162 = scalar_select %p161, %s14, 1
      %s163 = smul.addr %s162, 8
      %s164 = smul.addr %s163, 4
      %s165 = scalar_lea.vmem %s0, %s164
      %p166 = scmp.lt.s32.totalorder %s14, 1
      %s167 = scalar_select %p166, %s14, 1
      %s168 = smul.addr %s167, 2
      %s169 = smul.addr %s168, 4
      %s170 = scalar_lea.vmem %s3, %s169
      %v172 = vld [vmem:[%s165] sm:$0xff]
      %v173 = vld [vmem:[%s165 + $0x8] sm:$0xff]
      %v174 = vld [vmem:[%s165 + $0x10] sm:$0xff]
      %v175 = vld [vmem:[%s165 + $0x18] sm:$0xff]
      %v176 = vld [vmem:[%s1] sm:$0xf]
      %v177 = vld [vmem:[%s1 + $0x4] sm:$0xf]
      %v178 = vld [vmem:[%s1 + $0x8] sm:$0xf]
      %v179 = vld [vmem:[%s1 + $0xc] sm:$0xf]
      %v180 = vld [vmem:[%s1 + $0x10] sm:$0xf]
      %v181 = vld [vmem:[%s1 + $0x14] sm:$0xf]
      %v182 = vld [vmem:[%s1 + $0x18] sm:$0xf]
      %v183 = vld [vmem:[%s1 + $0x1c] sm:$0xf]
      %v184 = vld [vmem:[%s1 + $0x20] sm:$0xf]
      %v185 = vld [vmem:[%s1 + $0x24] sm:$0xf]
      %v186 = vld [vmem:[%s1 + $0x28] sm:$0xf]
      %v187 = vld [vmem:[%s1 + $0x2c] sm:$0xf]
      %v188 = vld [vmem:[%s1 + $0x30] sm:$0xf]
      %v189 = vld [vmem:[%s1 + $0x34] sm:$0xf]
      %v190 = vld [vmem:[%s1 + $0x38] sm:$0xf]
      %v191 = vld [vmem:[%s1 + $0x3c] sm:$0xf]
      %v192 = vld [vmem:[%s1 + $0x40] sm:$0xf]
      %v193 = vld [vmem:[%s1 + $0x44] sm:$0xf]
      %v194 = vld [vmem:[%s1 + $0x48] sm:$0xf]
      %v195 = vld [vmem:[%s1 + $0x4c] sm:$0xf]
      %v196 = vld [vmem:[%s1 + $0x50] sm:$0xf]
      %v197 = vld [vmem:[%s1 + $0x54] sm:$0xf]
      %v198 = vld [vmem:[%s1 + $0x58] sm:$0xf]
      %v199 = vld [vmem:[%s1 + $0x5c] sm:$0xf]
      %v200 = vld [vmem:[%s1 + $0x60] sm:$0xf]
      %v201 = vld [vmem:[%s1 + $0x64] sm:$0xf]
      %v202 = vld [vmem:[%s1 + $0x68] sm:$0xf]
      %v203 = vld [vmem:[%s1 + $0x6c] sm:$0xf]
      %v204 = vld [vmem:[%s1 + $0x70] sm:$0xf]
      %v205 = vld [vmem:[%s1 + $0x74] sm:$0xf]
      %v206 = vld [vmem:[%s1 + $0x78] sm:$0xf]
      %v207 = vld [vmem:[%s1 + $0x7c] sm:$0xf]
      %v208 = vld [vmem:[%s1 + $0x80] sm:$0xf]
      %v209 = vld [vmem:[%s1 + $0x84] sm:$0xf]
      %v210 = vld [vmem:[%s1 + $0x88] sm:$0xf]
      %v211 = vld [vmem:[%s1 + $0x8c] sm:$0xf]
      %v212 = vld [vmem:[%s1 + $0x90] sm:$0xf]
      %v213 = vld [vmem:[%s1 + $0x94] sm:$0xf]
      %v214 = vld [vmem:[%s1 + $0x98] sm:$0xf]
      %v215 = vld [vmem:[%s1 + $0x9c] sm:$0xf]
      %v216 = vld [vmem:[%s1 + $0xa0] sm:$0xf]
      %v217 = vld [vmem:[%s1 + $0xa4] sm:$0xf]
      %v218 = vld [vmem:[%s1 + $0xa8] sm:$0xf]
      %v219 = vld [vmem:[%s1 + $0xac] sm:$0xf]
      %v220 = vld [vmem:[%s1 + $0xb0] sm:$0xf]
      %v221 = vld [vmem:[%s1 + $0xb4] sm:$0xf]
      %v222 = vld [vmem:[%s1 + $0xb8] sm:$0xf]
      %v223 = vld [vmem:[%s1 + $0xbc] sm:$0xf]
      %v224 = vld [vmem:[%s1 + $0xc0] sm:$0xf]
      %v225 = vld [vmem:[%s1 + $0xc4] sm:$0xf]
      %v226 = vld [vmem:[%s1 + $0xc8] sm:$0xf]
      %v227 = vld [vmem:[%s1 + $0xcc] sm:$0xf]
      %v228 = vld [vmem:[%s1 + $0xd0] sm:$0xf]
      %v229 = vld [vmem:[%s1 + $0xd4] sm:$0xf]
      %v230 = vld [vmem:[%s1 + $0xd8] sm:$0xf]
      %v231 = vld [vmem:[%s1 + $0xdc] sm:$0xf]
      %v232 = vld [vmem:[%s1 + $0xe0] sm:$0xf]
      %v233 = vld [vmem:[%s1 + $0xe4] sm:$0xf]
      %v234 = vld [vmem:[%s1 + $0xe8] sm:$0xf]
      %v235 = vld [vmem:[%s1 + $0xec] sm:$0xf]
      %v236 = vld [vmem:[%s1 + $0xf0] sm:$0xf]
      %v237 = vld [vmem:[%s1 + $0xf4] sm:$0xf]
      %v238 = vld [vmem:[%s1 + $0xf8] sm:$0xf]
      %v239 = vld [vmem:[%s1 + $0xfc] sm:$0xf]
      %v240 = vld [vmem:[%s2] sm:$0x1]
      %v242 = vlaneseq
      %v243 = vshrl.u32 %v242, 7
      %v244 = vsub.s32 0, %v243
      %v245 = vrot.slane %v240, %v244
      %v251 = vunpack.c.l.b16 %v172
      %v252 = vunpack.c.h.b16 %v172
      %v253 = vunpack.c.l.b16 %v173
      %v254 = vunpack.c.h.b16 %v173
      %v255 = vunpack.c.l.b16 %v174
      %v256 = vunpack.c.h.b16 %v174
      %v257 = vunpack.c.l.b16 %v175
      %v258 = vunpack.c.h.b16 %v175
      %v259 = vpack.c.b16 %v255, %v251
      %v260 = vpack.c.b16 %v256, %v252
      %v261 = vpack.c.b16 %v257, %v253
      %v262 = vpack.c.b16 %v258, %v254
      %v331 = vunpack.c.l.b16 %v176
      %v332 = vunpack.c.l.b16 %v177
      %v333 = vunpack.c.l.b16 %v178
      %v334 = vunpack.c.l.b16 %v179
      %v335 = vunpack.c.l.b16 %v180
      %v336 = vunpack.c.l.b16 %v181
      %v337 = vunpack.c.l.b16 %v182
      %v338 = vunpack.c.l.b16 %v183
      %v339 = vunpack.c.l.b16 %v184
      %v340 = vunpack.c.l.b16 %v185
      %v341 = vunpack.c.l.b16 %v186
      %v342 = vunpack.c.l.b16 %v187
      %v343 = vunpack.c.l.b16 %v188
      %v344 = vunpack.c.l.b16 %v189
      %v345 = vunpack.c.l.b16 %v190
      %v346 = vunpack.c.l.b16 %v191
      %v347 = vunpack.c.l.b16 %v192
      %v348 = vunpack.c.l.b16 %v193
      %v349 = vunpack.c.l.b16 %v194
      %v350 = vunpack.c.l.b16 %v195
      %v351 = vunpack.c.l.b16 %v196
      %v352 = vunpack.c.l.b16 %v197
      %v353 = vunpack.c.l.b16 %v198
      %v354 = vunpack.c.l.b16 %v199
      %v355 = vunpack.c.l.b16 %v200
      %v356 = vunpack.c.l.b16 %v201
      %v357 = vunpack.c.l.b16 %v202
      %v358 = vunpack.c.l.b16 %v203
      %v359 = vunpack.c.l.b16 %v204
      %v360 = vunpack.c.l.b16 %v205
      %v361 = vunpack.c.l.b16 %v206
      %v362 = vunpack.c.l.b16 %v207
      %v363 = vunpack.c.l.b16 %v208
      %v364 = vunpack.c.l.b16 %v209
      %v365 = vunpack.c.l.b16 %v210
      %v366 = vunpack.c.l.b16 %v211
      %v367 = vunpack.c.l.b16 %v212
      %v368 = vunpack.c.l.b16 %v213
      %v369 = vunpack.c.l.b16 %v214
      %v370 = vunpack.c.l.b16 %v215
      %v371 = vunpack.c.l.b16 %v216
      %v372 = vunpack.c.l.b16 %v217
      %v373 = vunpack.c.l.b16 %v218
      %v374 = vunpack.c.l.b16 %v219
      %v375 = vunpack.c.l.b16 %v220
      %v376 = vunpack.c.l.b16 %v221
      %v377 = vunpack.c.l.b16 %v222
      %v378 = vunpack.c.l.b16 %v223
      %v379 = vunpack.c.l.b16 %v224
      %v380 = vunpack.c.l.b16 %v225
      %v381 = vunpack.c.l.b16 %v226
      %v382 = vunpack.c.l.b16 %v227
      %v383 = vunpack.c.l.b16 %v228
      %v384 = vunpack.c.l.b16 %v229
      %v385 = vunpack.c.l.b16 %v230
      %v386 = vunpack.c.l.b16 %v231
      %v387 = vunpack.c.l.b16 %v232
      %v388 = vunpack.c.l.b16 %v233
      %v389 = vunpack.c.l.b16 %v234
      %v390 = vunpack.c.l.b16 %v235
      %v391 = vunpack.c.l.b16 %v236
      %v392 = vunpack.c.l.b16 %v237
      %v393 = vunpack.c.l.b16 %v238
      %v394 = vunpack.c.l.b16 %v239
      %v395 = vpack.c.b16 %v332, %v331
      %v396 = vpack.c.b16 %v334, %v333
      %v397 = vpack.c.b16 %v336, %v335
      %v398 = vpack.c.b16 %v338, %v337
      %v399 = vpack.c.b16 %v340, %v339
      %v400 = vpack.c.b16 %v342, %v341
      %v401 = vpack.c.b16 %v344, %v343
      %v402 = vpack.c.b16 %v346, %v345
      %v403 = vpack.c.b16 %v348, %v347
      %v404 = vpack.c.b16 %v350, %v349
      %v405 = vpack.c.b16 %v352, %v351
      %v406 = vpack.c.b16 %v354, %v353
      %v407 = vpack.c.b16 %v356, %v355
      %v408 = vpack.c.b16 %v358, %v357
      %v409 = vpack.c.b16 %v360, %v359
      %v410 = vpack.c.b16 %v362, %v361
      %v411 = vpack.c.b16 %v364, %v363
      %v412 = vpack.c.b16 %v366, %v365
      %v413 = vpack.c.b16 %v368, %v367
      %v414 = vpack.c.b16 %v370, %v369
      %v415 = vpack.c.b16 %v372, %v371
      %v416 = vpack.c.b16 %v374, %v373
      %v417 = vpack.c.b16 %v376, %v375
      %v418 = vpack.c.b16 %v378, %v377
      %v419 = vpack.c.b16 %v380, %v379
      %v420 = vpack.c.b16 %v382, %v381
      %v421 = vpack.c.b16 %v384, %v383
      %v422 = vpack.c.b16 %v386, %v385
      %v423 = vpack.c.b16 %v388, %v387
      %v424 = vpack.c.b16 %v390, %v389
      %v425 = vpack.c.b16 %v392, %v391
      %v426 = vpack.c.b16 %v394, %v393
      %459 = vmatprep.subr.bf16.mxu0 0
      %460 = vmatpush1.bf16.msra.mxu0 %v402
      %461 = vmatprep.subr.bf16.mxu0 0
      %462 = vmatpush1.bf16.msra.mxu0 %v401
      %463 = vmatprep.subr.bf16.mxu0 0
      %464 = vmatpush1.bf16.msra.mxu0 %v400
      %465 = vmatprep.subr.bf16.mxu0 0
      %466 = vmatpush1.bf16.msra.mxu0 %v399
      %467 = vmatprep.subr.bf16.mxu0 0
      %468 = vmatpush1.bf16.msra.mxu0 %v398
      %469 = vmatprep.subr.bf16.mxu0 0
      %470 = vmatpush1.bf16.msra.mxu0 %v397
      %471 = vmatprep.subr.bf16.mxu0 0
      %472 = vmatpush1.bf16.msra.mxu0 %v396
      %473 = vmatprep.subr.bf16.mxu0 0
      %474 = vmatpush1.bf16.msra.mxu0 %v395
      %475 = vmatprep.subr.bf16.mxu0 0
      %476 = vmatpush2.bf16.msra.mxu0 %v410
      %477 = vmatprep.subr.bf16.mxu0 0
      %478 = vmatpush2.bf16.msra.mxu0 %v409
      %479 = vmatprep.subr.bf16.mxu0 0
      %480 = vmatpush2.bf16.msra.mxu0 %v408
      %481 = vmatprep.subr.bf16.mxu0 0
      %482 = vmatpush2.bf16.msra.mxu0 %v407
      %483 = vmatprep.subr.bf16.mxu0 0
      %484 = vmatpush2.bf16.msra.mxu0 %v406
      %485 = vmatprep.subr.bf16.mxu0 0
      %486 = vmatpush2.bf16.msra.mxu0 %v405
      %487 = vmatprep.subr.bf16.mxu0 0
      %488 = vmatpush2.bf16.msra.mxu0 %v404
      %489 = vmatprep.subr.bf16.mxu0 0
      %490 = vmatpush2.bf16.msra.mxu0 %v403
      %491 = vmatprep.mubr.bf16.mxu0 %v260
      %492 = vmatmul.mubr.bf16.gmra.mxu0 %v259
      %v493 = vpop.f32.mrf.mxu0
      %v494 = vadd.f32 %v245, %v493
      %v495 = vpop.f32.mrf.mxu0
      %v496 = vpop.f32.mrf.mxu0
      %v497 = vadd.f32 %v245, %v496
      %v498 = vpop.f32.mrf.mxu0
      %499 = vdwg.mxu0
      %500 = vmatprep.subr.bf16.mxu0 0
      %501 = vmatpush1.bf16.msra.mxu0 %v418
      %502 = vmatprep.subr.bf16.mxu0 0
      %503 = vmatpush1.bf16.msra.mxu0 %v417
      %504 = vmatprep.subr.bf16.mxu0 0
      %505 = vmatpush1.bf16.msra.mxu0 %v416
      %506 = vmatprep.subr.bf16.mxu0 0
      %507 = vmatpush1.bf16.msra.mxu0 %v415
      %508 = vmatprep.subr.bf16.mxu0 0
      %509 = vmatpush1.bf16.msra.mxu0 %v414
      %510 = vmatprep.subr.bf16.mxu0 0
      %511 = vmatpush1.bf16.msra.mxu0 %v413
      %512 = vmatprep.subr.bf16.mxu0 0
      %513 = vmatpush1.bf16.msra.mxu0 %v412
      %514 = vmatprep.subr.bf16.mxu0 0
      %515 = vmatpush1.bf16.msra.mxu0 %v411
      %516 = vmatprep.subr.bf16.mxu0 0
      %517 = vmatpush2.bf16.msra.mxu0 %v426
      %518 = vmatprep.subr.bf16.mxu0 0
      %519 = vmatpush2.bf16.msra.mxu0 %v425
      %520 = vmatprep.subr.bf16.mxu0 0
      %521 = vmatpush2.bf16.msra.mxu0 %v424
      %522 = vmatprep.subr.bf16.mxu0 0
      %523 = vmatpush2.bf16.msra.mxu0 %v423
      %524 = vmatprep.subr.bf16.mxu0 0
      %525 = vmatpush2.bf16.msra.mxu0 %v422
      %526 = vmatprep.subr.bf16.mxu0 0
      %527 = vmatpush2.bf16.msra.mxu0 %v421
      %528 = vmatprep.subr.bf16.mxu0 0
      %529 = vmatpush2.bf16.msra.mxu0 %v420
      %530 = vmatprep.subr.bf16.mxu0 0
      %531 = vmatpush2.bf16.msra.mxu0 %v419
      %532 = vmatprep.mubr.bf16.mxu0 %v262
      %533 = vmatmul.mubr.bf16.gmra.mxu0 %v261
      %v534 = vpop.f32.mrf.mxu0
      %v535 = vadd.f32 %v494, %v534
      %v536 = vpop.f32.mrf.mxu0
      %v537 = vpop.f32.mrf.mxu0
      %v538 = vadd.f32 %v497, %v537
      %v539 = vpop.f32.mrf.mxu0
      %540 = vdwg.mxu0
      %vm541 = vcmask 523264
      %v542 = vsel %vm541, %v535, 0.0
      %v543 = vsel %vm541, %v538, 0.0
      %v544 = vadd.f32 %v542, %v543
      %v545 = vrot.slane %v544, 4
      %v546 = vadd.f32 %v544, %v545
      %v547 = vrot.slane %v546, 2
      %v548 = vadd.f32 %v546, %v547
      %v549 = vrot.slane %v548, 1
      %v550 = vadd.f32 %v548, %v549
      %v551 = vrcp.pop 16.0
      %v552 = vmul.f32 %v550, %v551
      %v553 = vsub.f32 %v535, %v552
      %v554 = vsub.f32 %v538, %v552
      %v555 = vmul.f32 %v553, %v553
      %v556 = vmul.f32 %v554, %v554
      %v557 = vsel %vm541, %v555, 0.0
      %v558 = vsel %vm541, %v556, 0.0
      %v559 = vadd.f32 %v557, %v558
      %v560 = vrot.slane %v559, 4
      %v561 = vadd.f32 %v559, %v560
      %v562 = vrot.slane %v561, 2
      %v563 = vadd.f32 %v561, %v562
      %v564 = vrot.slane %v563, 1
      %v565 = vadd.f32 %v563, %v564
      %v566 = vmul.f32 %v565, %v551
      %v567 = vadd.f32 %v566, 1e-05
      %v568 = vrsqrt.pop %v567
      %v569 = vmul.f32 %v553, %v568
      %v570 = vmul.f32 %v554, %v568
      %vm571 = vcmp.ge.f32.partialorder %v569, 0.0
      %vm572 = vcmp.ge.f32.partialorder %v570, 0.0
      %v573 = vmul.f32 %v569, 0.2
      %v574 = vmul.f32 %v570, 0.2
      %v575 = vsel %vm571, %v569, %v573
      %v576 = vsel %vm572, %v570, %v574
      %v577 = vpack.c.bf16 %v576, %v575
      %v579 = vunpack.c.l.b16 %v577
      %v580 = vunpack.c.h.b16 %v577
      %v581 = vpack.c.b16 %v579, %v579
      %v582 = vpack.c.b16 %v580, %v580
      %vm585 = vcmask 519168
      %586 = vst.msk [vmem:[%s170] sm:$0xf] %vm585, %v581
      %587 = vst.msk [vmem:[%s170 + $0x4] sm:$0xf] %vm585, %v582
      %p588 = scmp.lt.s32.totalorder %s14, 1
      %s589 = scalar_select %p588, %s14, 1
      %s590 = smul.addr %s589, 2
      %s591 = smul.addr %s590, 4
      %s592 = scalar_lea.vmem %s3, %s591
      // Predicated region
      $region33: #{discriminator_forward.11} parent=31 // pred_check
        %p593 = pneg %p100
      $region34: #{discriminator_forward.11} parent=31 // pred_check_branch
        %595 = sbr.rel (%p593) target = $region36
      $region35: #{discriminator_forward.11} parent=31 // pred_region
        _
      $region36: #{discriminator_forward.11} parent=31 // pred_fallthru
        _
    $region32: #{discriminator_forward.11} parent=5 // pred_fallthru
      _
    %p596 = scmp.le.s32.totalorder 2, %s9
    // Predicated region
    $region37: #{discriminator_forward.11} parent=5 // pred_check
      %p597 = pneg %p596
    $region38: #{discriminator_forward.11} parent=5 // pred_check_branch
      %599 = sbr.rel (%p597) target = $region40
    $region39: #{discriminator_forward.11} parent=5 // pred_region
      %s600 = ssub.s32 %s9, 2
      // Predicated region
      $region41: #{discriminator_forward.11} parent=39 // pred_check
        %p601 = pneg %p106
      $region42: #{discriminator_forward.11} parent=39 // pred_check_branch
        %603 = sbr.rel (%p601) target = $region44
      $region43: #{discriminator_forward.11} parent=39 // pred_region
        %p604 = scmp.lt.s32.totalorder %s15, 1
        %s605 = scalar_select %p604, %s15, 1
        %s606 = smul.addr %s605, 2
        %s607 = smul.addr %s606, 4
        %s608 = scalar_lea.vmem %s3, %s607
      $region44: #{discriminator_forward.11} parent=39 // pred_fallthru
        _
    $region40: #{discriminator_forward.11} parent=5 // pred_fallthru
      _
  $region6: #{discriminator_forward.11} parent=0 // loop_footer
    %s13 = sadd.s32 1, %s9
  $region7: #{discriminator_forward.11} parent=0 // loop_footer_branch
    %8 = sbr.rel target = $region3
  $region8: #{discriminator_forward.11} parent=0 // loop_exit
    _

// kernel: discriminator_forward.12
$region0: #{discriminator_forward.12}
  #allocation0 [shape = 'u32[]', space=smem, size = 0x4, offset = 0x4, fixed_abs, tag = 'smem constant byte address 0x4 - core index']
  #allocation1 [shape = 'u32[144,128]{1,0:T(1,128)}', space=vmem, size = 0x12000, scoped, tag = 'internal scratch']
  #allocation2 [shape = 'f32[1,1]{1,0:T(1,128)S(6)}', space=smem, size = 0x200, scoped, tag = 'scoped memory for discriminator_forward.12']
  %s0 = inlined_call_operand.vmem [shape: bf16[2,16,64], index: 0, kind: input, shape index: {}]
  %s1 = inlined_call_operand.vmem [shape: bf16[64,320], index: 1, kind: input, shape index: {}]
  %s2 = inlined_call_operand.vmem [shape: f32[1,320], index: 2, kind: input, shape index: {}]
  %s3 = inlined_call_operand.<no memory space> [shape: f32[1,1], index: 3, kind: input, shape index: {}]
  %s4 = inlined_call_operand.vmem [shape: bf16[2,16,64], index: 4, kind: output, shape index: {}]
  %s5 = sld [smem:[#allocation0]]
  $region49: #{discriminator_forward.12} parent=0
    _
  %s7 = ssub.s32 1, %s5
  %s8 = scalar_select 0, %s7, %s5
  %9 = sst [smem:[#allocation2]] %s3
  loop: start=0, step=1, limit=4
  $region2: #{discriminator_forward.12} parent=0 // loop_pre_header
    _
  $region3: #{discriminator_forward.12} parent=0 // loop_header
    %s11 = sphi 0, %s15
    %p12 = scmp.ge.s32.totalorder %s11, 4
    %s21 = sphi 0, %s23
    %s24 = sphi 0, %s21
    %s25 = sphi 0, %s24
    %s41 = sphi 0, %s25
    %s45 = sphi 0, %s45
    %s47 = sphi 0, %s45
    %s48 = sphi 0, %s47
    %s62 = sphi 0, %s48
    %s66 = sphi 0, %s66
    %s68 = sphi 0, %s66
    %s69 = sphi 0, %s68
    %s83 = sphi 0, %s69
    %s87 = sphi 0, %s87
    %s89 = sphi 0, %s87
    %s90 = sphi 0, %s89
    %s104 = sphi 0, %s90
    %s110 = sphi 0, %s112
    %s113 = sphi 0, %s110
    %s114 = sphi 0, %s113
    %s130 = sphi 0, %s114
  $region4: #{discriminator_forward.12} parent=0 // loop_header_branch
    %14 = sbr.rel (%p12) target = $region8
  $region5: #{discriminator_forward.12} parent=0 // loop_body
    %s16 = ssub.s32 %s11, 1
    %s17 = ssub.s32 %s11, 2
    %s18 = sadd.s32 %s11, 1
    %s19 = ssub.s32 %s11, %s18
    %p20 = scmp.eq.s32.totalorder %s19, 0
    %s22 = sadd.s32 %s21, 1
    %s23 = scalar_select %p20, %s21, %s22
    %p26 = pneg %p20
    %p27 = scmp.eq.s32.totalorder %s11, 1
    %p28 = por %p26, %p27
    %p29 = scmp.ne.s32.totalorder %s21, %s24
    %p30 = scmp.eq.s32.totalorder %s11, 0
    %p31 = por %p29, %p30
    %p32 = scmp.ne.s32.totalorder %s21, %s24
    %p33 = scmp.eq.s32.totalorder %s16, 1
    %p34 = por %p32, %p33
    %p35 = scmp.ne.s32.totalorder %s24, %s25
    %p36 = scmp.eq.s32.totalorder %s16, 0
    %p37 = por %p35, %p36
    %p38 = scmp.ne.s32.totalorder %s24, %s25
    %p39 = scmp.eq.s32.totalorder %s17, 1
    %p40 = por %p38, %p39
    %p42 = scmp.ne.s32.totalorder %s25, %s41
    %p43 = scmp.eq.s32.totalorder %s17, 0
    %p44 = por %p42, %p43
    %s46 = sadd.s32 %s45, 1
    %p49 = scmp.eq.s32.totalorder %s11, 1
    %p50 = scmp.ne.s32.totalorder %s45, %s47
    %p51 = scmp.eq.s32.totalorder %s11, 0
    %p52 = por %p50, %p51
    %p53 = scmp.ne.s32.totalorder %s45, %s47
    %p54 = scmp.eq.s32.totalorder %s16, 1
    %p55 = por %p53, %p54
    %p56 = scmp.ne.s32.totalorder %s47, %s48
    %p57 = scmp.eq.s32.totalorder %s16, 0
    %p58 = por %p56, %p57
    %p59 = scmp.ne.s32.totalorder %s47, %s48
    %p60 = scmp.eq.s32.totalorder %s17, 1
    %p61 = por %p59, %p60
    %p63 = scmp.ne.s32.totalorder %s48, %s62
    %p64 = scmp.eq.s32.totalorder %s17, 0
    %p65 = por %p63, %p64
    %s67 = sadd.s32 %s66, 1
    %p70 = scmp.eq.s32.totalorder %s11, 1
    %p71 = scmp.ne.s32.totalorder %s66, %s68
    %p72 = scmp.eq.s32.totalorder %s11, 0
    %p73 = por %p71, %p72
    %p74 = scmp.ne.s32.totalorder %s66, %s68
    %p75 = scmp.eq.s32.totalorder %s16, 1
    %p76 = por %p74, %p75
    %p77 = scmp.ne.s32.totalorder %s68, %s69
    %p78 = scmp.eq.s32.totalorder %s16, 0
    %p79 = por %p77, %p78
    %p80 = scmp.ne.s32.totalorder %s68, %s69
    %p81 = scmp.eq.s32.totalorder %s17, 1
    %p82 = por %p80, %p81
    %p84 = scmp.ne.s32.totalorder %s69, %s83
    %p85 = scmp.eq.s32.totalorder %s17, 0
    %p86 = por %p84, %p85
    %s88 = sadd.s32 %s87, 1
    %p91 = scmp.eq.s32.totalorder %s11, 1
    %p92 = scmp.ne.s32.totalorder %s87, %s89
    %p93 = scmp.eq.s32.totalorder %s11, 0
    %p94 = por %p92, %p93
    %p95 = scmp.ne.s32.totalorder %s87, %s89
    %p96 = scmp.eq.s32.totalorder %s16, 1
    %p97 = por %p95, %p96
    %p98 = scmp.ne.s32.totalorder %s89, %s90
    %p99 = scmp.eq.s32.totalorder %s16, 0
    %p100 = por %p98, %p99
    %p101 = scmp.ne.s32.totalorder %s89, %s90
    %p102 = scmp.eq.s32.totalorder %s17, 1
    %p103 = por %p101, %p102
    %p105 = scmp.ne.s32.totalorder %s90, %s104
    %p106 = scmp.eq.s32.totalorder %s17, 0
    %p107 = por %p105, %p106
    %s108 = ssub.s32 %s11, %s18
    %p109 = scmp.eq.s32.totalorder %s108, 0
    %s111 = sadd.s32 %s110, 1
    %s112 = scalar_select %p109, %s110, %s111
    %p115 = pneg %p109
    %p116 = scmp.eq.s32.totalorder %s11, 1
    %p117 = por %p115, %p116
    %p118 = scmp.ne.s32.totalorder %s110, %s113
    %p119 = scmp.eq.s32.totalorder %s11, 0
    %p120 = por %p118, %p119
    %p121 = scmp.ne.s32.totalorder %s110, %s113
    %p122 = scmp.eq.s32.totalorder %s16, 1
    %p123 = por %p121, %p122
    %p124 = scmp.ne.s32.totalorder %s113, %s114
    %p125 = scmp.eq.s32.totalorder %s16, 0
    %p126 = por %p124, %p125
    %p127 = scmp.ne.s32.totalorder %s113, %s114
    %p128 = scmp.eq.s32.totalorder %s17, 1
    %p129 = por %p127, %p128
    %p131 = scmp.ne.s32.totalorder %s114, %s130
    %p132 = scmp.eq.s32.totalorder %s17, 0
    %p133 = por %p131, %p132
    %p134 = scmp.le.s32.totalorder 1, %s11
    %p135 = scmp.lt.s32.totalorder %s11, 3
    %p136 = pnand %p134, %p135
    %p137 = pneg %p136
    // Predicated region
    $region9: #{discriminator_forward.12} parent=5 // pred_check
      _
    $region10: #{discriminator_forward.12} parent=5 // pred_check_branch
      %139 = sbr.rel (%p136) target = $region12
    $region11: #{discriminator_forward.12} parent=5 // pred_region
      %s140 = ssub.s32 %s11, 1
      // Predicated region
      $region13: #{discriminator_forward.12} parent=11 // pred_check
        %p141 = pneg %p58
      $region14: #{discriminator_forward.12} parent=11 // pred_check_branch
        %143 = sbr.rel (%p141) target = $region16
      $region15: #{discriminator_forward.12} parent=11 // pred_region
        _
      $region16: #{discriminator_forward.12} parent=11 // pred_fallthru
        _
      // Predicated region
      $region17: #{discriminator_forward.12} parent=11 // pred_check
        %p144 = pneg %p79
      $region18: #{discriminator_forward.12} parent=11 // pred_check_branch
        %146 = sbr.rel (%p144) target = $region20
      $region19: #{discriminator_forward.12} parent=11 // pred_region
        _
      $region20: #{discriminator_forward.12} parent=11 // pred_fallthru
        _
      // Predicated region
      $region21: #{discriminator_forward.12} parent=11 // pred_check
        %p147 = pneg %p100
      $region22: #{discriminator_forward.12} parent=11 // pred_check_branch
        %149 = sbr.rel (%p147) target = $region24
      $region23: #{discriminator_forward.12} parent=11 // pred_region
        _
      $region24: #{discriminator_forward.12} parent=11 // pred_fallthru
        _
    $region12: #{discriminator_forward.12} parent=5 // pred_fallthru
      _
    %p150 = scmp.lt.s32.totalorder %s11, 2
    // Predicated region
    $region25: #{discriminator_forward.12} parent=5 // pred_check
      %p151 = pneg %p150
    $region26: #{discriminator_forward.12} parent=5 // pred_check_branch
      %153 = sbr.rel (%p151) target = $region28
    $region27: #{discriminator_forward.12} parent=5 // pred_region
      // Predicated region
      $region29: #{discriminator_forward.12} parent=27 // pred_check
        %p154 = pneg %p31
      $region30: #{discriminator_forward.12} parent=27 // pred_check_branch
        %156 = sbr.rel (%p154) target = $region32
      $region31: #{discriminator_forward.12} parent=27 // pred_region
        %p157 = scmp.lt.s32.totalorder %s11, 1
        %s158 = scalar_select %p157, %s11, 1
        %s159 = smul.addr %s158, 2
        %s160 = smul.addr %s159, 4
        %s161 = scalar_lea.vmem %s0, %s160
      $region32: #{discriminator_forward.12} parent=27 // pred_fallthru
        _
    $region28: #{discriminator_forward.12} parent=5 // pred_fallthru
      _
    %p162 = scmp.le.s32.totalorder 1, %s11
    %p163 = scmp.lt.s32.totalorder %s11, 3
    %p164 = pnand %p162, %p163
    %p165 = pneg %p164
    // Predicated region
    $region33: #{discriminator_forward.12} parent=5 // pred_check
      _
    $region34: #{discriminator_forward.12} parent=5 // pred_check_branch
      %167 = sbr.rel (%p164) target = $region36
    $region35: #{discriminator_forward.12} parent=5 // pred_region
      %s168 = ssub.s32 %s11, 1
      %p169 = scmp.lt.s32.totalorder %s16, 1
      %s170 = scalar_select %p169, %s16, 1
      %s171 = smul.addr %s170, 2
      %s172 = smul.addr %s171, 4
      %s173 = scalar_lea.vmem %s0, %s172
      %p174 = pneg %p37
      %p175 = pneg %p34
      %p176 = pneg %p58
      %p177 = pneg %p55
      %p178 = pneg %p79
      %p179 = pneg %p76
      %p180 = pneg %p100
      %p181 = pneg %p97
      %p182 = pneg %p126
      %p183 = pneg %p123
      %p184 = scmp.lt.s32.totalorder %s16, 1
      %s185 = scalar_select %p184, %s16, 1
      %s186 = smul.addr %s185, 2
      %s187 = smul.addr %s186, 4
      %s188 = scalar_lea.vmem %s4, %s187
      %p189 = scmp.lt.s32.totalorder %s16, 1
      %s190 = scalar_select %p189, %s16, 1
      %s191 = smul.addr %s190, 2
      %s192 = smul.addr %s191, 4
      %s193 = scalar_lea.vmem %s0, %s192
      %p194 = scmp.lt.s32.totalorder %s16, 1
      %s195 = scalar_select %p194, %s16, 1
      %s196 = smul.addr %s195, 2
      %s197 = smul.addr %s196, 4
      %s198 = scalar_lea.vmem %s4, %s197
      %v200 = vld [vmem:[%s193] sm:$0xf]
      %v201 = vld [vmem:[%s193 + $0x4] sm:$0xf]
      %v202 = vld [vmem:[%s1] sm:$0xff]
      %v203 = vld [vmem:[%s1 + $0x8] sm:$0xf]
      %v204 = vld [vmem:[%s1 + $0xc] sm:$0xff]
      %v205 = vld [vmem:[%s1 + $0x14] sm:$0xf]
      %v206 = vld [vmem:[%s1 + $0x18] sm:$0xff]
      %v207 = vld [vmem:[%s1 + $0x20] sm:$0xf]
      %v208 = vld [vmem:[%s1 + $0x24] sm:$0xff]
      %v209 = vld [vmem:[%s1 + $0x2c] sm:$0xf]
      %v210 = vld [vmem:[%s1 + $0x30] sm:$0xff]
      %v211 = vld [vmem:[%s1 + $0x38] sm:$0xf]
      %v212 = vld [vmem:[%s1 + $0x3c] sm:$0xff]
      %v213 = vld [vmem:[%s1 + $0x44] sm:$0xf]
      %v214 = vld [vmem:[%s1 + $0x48] sm:$0xff]
      %v215 = vld [vmem:[%s1 + $0x50] sm:$0xf]
      %v216 = vld [vmem:[%s1 + $0x54] sm:$0xff]
      %v217 = vld [vmem:[%s1 + $0x5c] sm:$0xf]
      %v218 = vld [vmem:[%s2] sm:$0x7]
      %v220 = vlaneseq
      %v221 = vshrl.u32 %v220, 7
      %v222 = vsub.s32 0, %v221
      %v223 = vrot.slane %v218, %v222
      %v224 = vlaneseq
      %v225 = vshrl.u32 %v224, 7
      %v226 = vsub.s32 1, %v225
      %v227 = vrot.slane %v218, %v226
      %v228 = vlaneseq
      %v229 = vshrl.u32 %v228, 7
      %v230 = vsub.s32 2, %v229
      %v231 = vrot.slane %v218, %v230
      %v237 = vunpack.c.l.b16 %v200
      %v238 = vunpack.c.l.b16 %v201
      %v239 = vpack.c.b16 %v238, %v237
      %v256 = vunpack.c.l.b16 %v202
      %v257 = vunpack.c.h.b16 %v202
      %v258 = vunpack.c.l.b16 %v203
      %v259 = vunpack.c.l.b16 %v204
      %v260 = vunpack.c.h.b16 %v204
      %v261 = vunpack.c.l.b16 %v205
      %v262 = vunpack.c.l.b16 %v206
      %v263 = vunpack.c.h.b16 %v206
      %v264 = vunpack.c.l.b16 %v207
      %v265 = vunpack.c.l.b16 %v208
      %v266 = vunpack.c.h.b16 %v208
      %v267 = vunpack.c.l.b16 %v209
      %v268 = vunpack.c.l.b16 %v210
      %v269 = vunpack.c.h.b16 %v210
      %v270 = vunpack.c.l.b16 %v211
      %v271 = vunpack.c.l.b16 %v212
      %v272 = vunpack.c.h.b16 %v212
      %v273 = vunpack.c.l.b16 %v213
      %v274 = vunpack.c.l.b16 %v214
      %v275 = vunpack.c.h.b16 %v214
      %v276 = vunpack.c.l.b16 %v215
      %v277 = vunpack.c.l.b16 %v216
      %v278 = vunpack.c.h.b16 %v216
      %v279 = vunpack.c.l.b16 %v217
      %v280 = vpack.c.b16 %v259, %v256
      %v281 = vpack.c.b16 %v260, %v257
      %v282 = vpack.c.b16 %v261, %v258
      %v283 = vpack.c.b16 %v265, %v262
      %v284 = vpack.c.b16 %v266, %v263
      %v285 = vpack.c.b16 %v267, %v264
      %v286 = vpack.c.b16 %v271, %v268
      %v287 = vpack.c.b16 %v272, %v269
      %v288 = vpack.c.b16 %v273, %v270
      %v289 = vpack.c.b16 %v277, %v274
      %v290 = vpack.c.b16 %v278, %v275
      %v291 = vpack.c.b16 %v279, %v276
      %vm304 = vcmask 523264
      %v306 = vsel %vm304, %v239, 0
      %308 = vmatprep.subr.bf16.mxu0 0
      %309 = vmatpush1.bf16.msra.mxu0 0
      %310 = vmatprep.subr.bf16.mxu0 0
      %311 = vmatpush1.bf16.msra.mxu0 0
      %312 = vmatprep.subr.bf16.mxu0 0
      %313 = vmatpush1.bf16.msra.mxu0 0
      %314 = vmatprep.subr.bf16.mxu0 0
      %315 = vmatpush1.bf16.msra.mxu0 0
      %316 = vmatprep.subr.bf16.mxu0 %v290
      %317 = vmatpush1.bf16.msra.mxu0 %v289
      %318 = vmatprep.subr.bf16.mxu0 %v287
      %319 = vmatpush1.bf16.msra.mxu0 %v286
      %320 = vmatprep.subr.bf16.mxu0 %v284
      %321 = vmatpush1.bf16.msra.mxu0 %v283
      %322 = vmatprep.subr.bf16.mxu0 %v281
      %323 = vmatpush1.bf16.msra.mxu0 %v280
      %324 = vmatprep.subr.bf16.mxu0 0
      %325 = vmatpush2.bf16.msra.mxu0 0
      %326 = vmatprep.subr.bf16.mxu0 0
      %327 = vmatpush2.bf16.msra.mxu0 0
      %328 = vmatprep.subr.bf16.mxu0 0
      %329 = vmatpush2.bf16.msra.mxu0 0
      %330 = vmatprep.subr.bf16.mxu0 0
      %331 = vmatpush2.bf16.msra.mxu0 0
      %332 = vmatprep.subr.bf16.mxu0 0
      %333 = vmatpush2.bf16.msra.mxu0 0
      %334 = vmatprep.subr.bf16.mxu0 0
      %335 = vmatpush2.bf16.msra.mxu0 0
      %336 = vmatprep.subr.bf16.mxu0 0
      %337 = vmatpush2.bf16.msra.mxu0 0
      %338 = vmatprep.subr.bf16.mxu0 0
      %339 = vmatpush2.bf16.msra.mxu0 0
      %340 = vmatprep.mubr.bf16.mxu0 0
      %341 = vmatmul.mubr.bf16.gmra.mxu0 %v306
      %v342 = vpop.f32.mrf.mxu0
      %v343 = vadd.f32 %v223, %v342
      %v344 = vpop.f32.mrf.mxu0
      %v345 = vadd.f32 %v227, %v344
      %v346 = vpop.f32.mrf.mxu0
      %v347 = vadd.f32 %v223, %v346
      %v348 = vpop.f32.mrf.mxu0
      %v349 = vadd.f32 %v227, %v348
      %350 = vdwg.mxu0
      %351 = vmatprep.subr.bf16.mxu0 0
      %352 = vmatpush1.bf16.msra.mxu0 0
      %353 = vmatprep.subr.bf16.mxu0 0
      %354 = vmatpush1.bf16.msra.mxu0 0
      %355 = vmatprep.subr.bf16.mxu0 0
      %356 = vmatpush1.bf16.msra.mxu0 0
      %357 = vmatprep.subr.bf16.mxu0 0
      %358 = vmatpush1.bf16.msra.mxu0 0
      %359 = vmatprep.subr.bf16.mxu0 0
      %360 = vmatpush1.bf16.msra.mxu0 %v291
      %361 = vmatprep.subr.bf16.mxu0 0
      %362 = vmatpush1.bf16.msra.mxu0 %v288
      %363 = vmatprep.subr.bf16.mxu0 0
      %364 = vmatpush1.bf16.msra.mxu0 %v285
      %365 = vmatprep.subr.bf16.mxu0 0
      %366 = vmatpush1.bf16.msra.mxu0 %v282
      %367 = vmatprep.subr.bf16.mxu0 0
      %368 = vmatpush2.bf16.msra.mxu0 0
      %369 = vmatprep.subr.bf16.mxu0 0
      %370 = vmatpush2.bf16.msra.mxu0 0
      %371 = vmatprep.subr.bf16.mxu0 0
      %372 = vmatpush2.bf16.msra.mxu0 0
      %373 = vmatprep.subr.bf16.mxu0 0
      %374 = vmatpush2.bf16.msra.mxu0 0
      %375 = vmatprep.subr.bf16.mxu0 0
      %376 = vmatpush2.bf16.msra.mxu0 0
      %377 = vmatprep.subr.bf16.mxu0 0
      %378 = vmatpush2.bf16.msra.mxu0 0
      %379 = vmatprep.subr.bf16.mxu0 0
      %380 = vmatpush2.bf16.msra.mxu0 0
      %381 = vmatprep.subr.bf16.mxu0 0
      %382 = vmatpush2.bf16.msra.mxu0 0
      %383 = vmatprep.mubr.bf16.mxu0 0
      %384 = vmatmul.mubr.bf16.gmra.mxu0 %v306
      %v385 = vpop.f32.mrf.mxu0
      %v386 = vadd.f32 %v231, %v385
      %v387 = vpop.f32.mrf.mxu0
      %v388 = vpop.f32.mrf.mxu0
      %v389 = vadd.f32 %v231, %v388
      %v390 = vpop.f32.mrf.mxu0
      %391 = vdwg.mxu0
      %v392 = vpack.c.bf16 %v347, %v343
      %v393 = vpack.c.bf16 %v349, %v345
      %v394 = vpack.c.bf16 %v389, %v386
      %395 = vmatprep.subr.bf16.mxu0 0
      %396 = vmatpush1.bf16.xpose.msra.mxu0 0
      %397 = vmatprep.subr.bf16.mxu0 0
      %398 = vmatpush1.bf16.xpose.msra.mxu0 0
      %399 = vmatprep.subr.bf16.mxu0 0
      %400 = vmatpush1.bf16.xpose.msra.mxu0 0
      %401 = vmatprep.subr.bf16.mxu0 0
      %402 = vmatpush1.bf16.xpose.msra.mxu0 0
      %403 = vmatprep.subr.bf16.mxu0 0
      %404 = vmatpush1.bf16.xpose.msra.mxu0 0
      %405 = vmatprep.subr.bf16.mxu0 0
      %406 = vmatpush1.bf16.xpose.msra.mxu0 0
      %407 = vmatprep.subr.bf16.mxu0 0
      %408 = vmatpush1.bf16.xpose.msra.mxu0 0
      %409 = vmatprep.subr.bf16.mxu0 0
      %410 = vmatpush1.bf16.xpose.msra.mxu0 %v393
      %411 = vmatprep.subr.bf16.mxu0 0
      %412 = vmatpush2.bf16.xpose.msra.mxu0 0
      %413 = vmatprep.subr.bf16.mxu0 0
      %414 = vmatpush2.bf16.xpose.msra.mxu0 0
      %415 = vmatprep.subr.bf16.mxu0 0
      %416 = vmatpush2.bf16.xpose.msra.mxu0 0
      %417 = vmatprep.subr.bf16.mxu0 0
      %418 = vmatpush2.bf16.xpose.msra.mxu0 0
      %419 = vmatprep.subr.bf16.mxu0 0
      %420 = vmatpush2.bf16.xpose.msra.mxu0 0
      %421 = vmatprep.subr.bf16.mxu0 0
      %422 = vmatpush2.bf16.xpose.msra.mxu0 0
      %423 = vmatprep.subr.bf16.mxu0 0
      %424 = vmatpush2.bf16.xpose.msra.mxu0 0
      %425 = vmatprep.subr.bf16.mxu0 0
      %426 = vmatpush2.bf16.xpose.msra.mxu0 0
      %427 = vmatprep.mubr.bf16.mxu0 0
      %428 = vmatmul.mubr.bf16.gmra.mxu0 %v392
      %v429 = vpop.f32.mrf.mxu0
      %v430 = vadd.f32 0.0, %v429
      %v431 = vpop.f32.mrf.mxu0
      %v432 = vpop.f32.mrf.mxu0
      %v433 = vadd.f32 0.0, %v432
      %v434 = vpop.f32.mrf.mxu0
      %435 = vdwg.mxu0
      %v436 = vmul.f32 %v430, 0.35355338
      %v437 = vmul.f32 %v433, 0.35355338
      %vm438 = vcmask 130048
      %v439 = vsel %vm438, %v436, -inf
      %440 = vmax.xlane.f32.xlu0 %v439
      %v441 = vpop.xlane.xlu0 %440
      %v442 = vsel %vm438, %v437, -inf
      %443 = vmax.xlane.f32.xlu0 %v442
      %v444 = vpop.xlane.xlu0 %443
      %v445 = vsub.f32 %v436, %v441
      %v446 = vsub.f32 %v437, %v444
      %v447 = vmul.f32 %v445, 1.442695
      %v448 = vpow.pop %v447
      %v449 = vmul.f32 %v446, 1.442695
      %v450 = vpow.pop %v449
      %v451 = vsel %vm438, %v448, 0.0
      %452 = vadd.xlane.f32.xlu0 %v451
      %v453 = vpop.xlane.xlu0 %452
      %v454 = vsel %vm438, %v450, 0.0
      %455 = vadd.xlane.f32.xlu0 %v454
      %v456 = vpop.xlane.xlu0 %455
      %v457 = vrcp.pop %v453
      %v458 = vrcp.pop %v456
      %v459 = vmul.f32 %v448, %v457
      %v460 = vmul.f32 %v450, %v458
      %v461 = vpack.c.bf16 %v460, %v459
      %v463 = vsel %vm438, %v461, 0
      %465 = vmatprep.subr.bf16.mxu0 0
      %466 = vmatpush1.bf16.msra.mxu0 0
      %467 = vmatprep.subr.bf16.mxu0 0
      %468 = vmatpush1.bf16.msra.mxu0 0
      %469 = vmatprep.subr.bf16.mxu0 0
      %470 = vmatpush1.bf16.msra.mxu0 0
      %471 = vmatprep.subr.bf16.mxu0 0
      %472 = vmatpush1.bf16.msra.mxu0 0
      %473 = vmatprep.subr.bf16.mxu0 0
      %474 = vmatpush1.bf16.msra.mxu0 0
      %475 = vmatprep.subr.bf16.mxu0 0
      %476 = vmatpush1.bf16.msra.mxu0 0
      %477 = vmatprep.subr.bf16.mxu0 0
      %478 = vmatpush1.bf16.msra.mxu0 0
      %479 = vmatprep.subr.bf16.mxu0 0
      %480 = vmatpush1.bf16.msra.mxu0 %v394
      %481 = vmatprep.subr.bf16.mxu0 0
      %482 = vmatpush2.bf16.msra.mxu0 0
      %483 = vmatprep.subr.bf16.mxu0 0
      %484 = vmatpush2.bf16.msra.mxu0 0
      %485 = vmatprep.subr.bf16.mxu0 0
      %486 = vmatpush2.bf16.msra.mxu0 0
      %487 = vmatprep.subr.bf16.mxu0 0
      %488 = vmatpush2.bf16.msra.mxu0 0
      %489 = vmatprep.subr.bf16.mxu0 0
      %490 = vmatpush2.bf16.msra.mxu0 0
      %491 = vmatprep.subr.bf16.mxu0 0
      %492 = vmatpush2.bf16.msra.mxu0 0
      %493 = vmatprep.subr.bf16.mxu0 0
      %494 = vmatpush2.bf16.msra.mxu0 0
      %495 = vmatprep.subr.bf16.mxu0 0
      %496 = vmatpush2.bf16.msra.mxu0 0
      %497 = vmatprep.mubr.bf16.mxu0 0
      %498 = vmatmul.mubr.bf16.gmra.mxu0 %v463
      %v499 = vpop.f32.mrf.mxu0
      %v500 = vadd.f32 0.0, %v499
      %v501 = vpop.f32.mrf.mxu0
      %v502 = vpop.f32.mrf.mxu0
      %v503 = vadd.f32 0.0, %v502
      %v504 = vpop.f32.mrf.mxu0
      %505 = vdwg.mxu0
      %s506 = sld [smem:[#allocation2]]
      %v507 = vstv %s506
      %v508 = vmul.f32 %v507, %v500
      %v509 = vmul.f32 %v507, %v503
      %v510 = vunpack.c.l.bf16 %v200
      %v511 = vunpack.c.l.bf16 %v201
      %v512 = vadd.f32 %v508, %v510
      %v513 = vadd.f32 %v509, %v511
      %v514 = vpack.c.bf16 %v513, %v512
      %v516 = vunpack.c.l.b16 %v514
      %v517 = vunpack.c.h.b16 %v514
      %v518 = vpack.c.b16 %v516, %v516
      %v519 = vpack.c.b16 %v517, %v517
      %vm522 = vcmask 519168
      %523 = vst.msk [vmem:[%s198] sm:$0xf] %vm522, %v518
      %524 = vst.msk [vmem:[%s198 + $0x4] sm:$0xf] %vm522, %v519
      %p525 = scmp.lt.s32.totalorder %s16, 1
      %s526 = scalar_select %p525, %s16, 1
      %s527 = smul.addr %s526, 2
      %s528 = smul.addr %s527, 4
      %s529 = scalar_lea.vmem %s4, %s528
      // Predicated region
      $region37: #{discriminator_forward.12} parent=35 // pred_check
        %p530 = pneg %p123
      $region38: #{discriminator_forward.12} parent=35 // pred_check_branch
        %532 = sbr.rel (%p530) target = $region40
      $region39: #{discriminator_forward.12} parent=35 // pred_region
        _
      $region40: #{discriminator_forward.12} parent=35 // pred_fallthru
        _
    $region36: #{discriminator_forward.12} parent=5 // pred_fallthru
      _
    %p533 = scmp.le.s32.totalorder 2, %s11
    // Predicated region
    $region41: #{discriminator_forward.12} parent=5 // pred_check
      %p534 = pneg %p533
    $region42: #{discriminator_forward.12} parent=5 // pred_check_branch
      %536 = sbr.rel (%p534) target = $region44
    $region43: #{discriminator_forward.12} parent=5 // pred_region
      %s537 = ssub.s32 %s11, 2
      // Predicated region
      $region45: #{discriminator_forward.12} parent=43 // pred_check
        %p538 = pneg %p129
      $region46: #{discriminator_forward.12} parent=43 // pred_check_branch
        %540 = sbr.rel (%p538) target = $region48
      $region47: #{discriminator_forward.12} parent=43 // pred_region
        %p541 = scmp.lt.s32.totalorder %s17, 1
        %s542 = scalar_select %p541, %s17, 1
        %s543 = smul.addr %s542, 2
        %s544 = smul.addr %s543, 4
        %s545 = scalar_lea.vmem %s4, %s544
      $region48: #{discriminator_forward.12} parent=43 // pred_fallthru
        _
    $region44: #{discriminator_forward.12} parent=5 // pred_fallthru
      _
  $region6: #{discriminator_forward.12} parent=0 // loop_footer
    %s15 = sadd.s32 1, %s11
  $region7: #{discriminator_forward.12} parent=0 // loop_footer_branch
    %10 = sbr.rel target = $region3
  $region8: #{discriminator_forward.12} parent=0 // loop_exit
    _

// kernel: discriminator_forward.13
$region0: #{discriminator_forward.13}
  #allocation0 [shape = 'u32[]', space=smem, size = 0x4, offset = 0x4, fixed_abs, tag = 'smem constant byte address 0x4 - core index']
  #allocation1 [shape = 'u32[144,128]{1,0:T(1,128)}', space=vmem, size = 0x12000, scoped, tag = 'internal scratch']
  #allocation2 [shape = 'f32[1,1]{1,0:T(1,128)S(1)}', space=vmem, size = 0x200, scoped, tag = 'scoped memory for discriminator_forward.13']
  %s0 = inlined_call_operand.vmem [shape: bf16[2,128,1024], index: 0, kind: input, shape index: {}]
  %s1 = inlined_call_operand.vmem [shape: bf16[1,1024], index: 1, kind: input, shape index: {}]
  %s2 = inlined_call_operand.<no memory space> [shape: f32[1,1], index: 2, kind: input, shape index: {}]
  %s3 = inlined_call_operand.vmem [shape: f32[2,1,128], index: 3, kind: output, shape index: {}]
  %s4 = sld [smem:[#allocation0]]
  $region45: #{discriminator_forward.13} parent=0
    _
  %s6 = ssub.s32 1, %s4
  %s7 = scalar_select 0, %s6, %s4
  %v8 = vstv %s2
  %9 = vst [vmem:[#allocation2] sm:$0x1] %v8
  loop: start=0, step=1, limit=4
  $region2: #{discriminator_forward.13} parent=0 // loop_pre_header
    _
  $region3: #{discriminator_forward.13} parent=0 // loop_header
    %s11 = sphi 0, %s15
    %p12 = scmp.ge.s32.totalorder %s11, 4
    %s21 = sphi 0, %s23
    %s24 = sphi 0, %s21
    %s25 = sphi 0, %s24
    %s41 = sphi 0, %s25
    %s45 = sphi 0, %s45
    %s47 = sphi 0, %s45
    %s48 = sphi 0, %s47
    %s62 = sphi 0, %s48
    %s66 = sphi 0, %s66
    %s68 = sphi 0, %s66
    %s69 = sphi 0, %s68
    %s83 = sphi 0, %s69
    %s89 = sphi 0, %s91
    %s92 = sphi 0, %s89
    %s93 = sphi 0, %s92
    %s109 = sphi 0, %s93
  $region4: #{discriminator_forward.13} parent=0 // loop_header_branch
    %14 = sbr.rel (%p12) target = $region8
  $region5: #{discriminator_forward.13} parent=0 // loop_body
    %s16 = ssub.s32 %s11, 1
    %s17 = ssub.s32 %s11, 2
    %s18 = sadd.s32 %s11, 1
    %s19 = ssub.s32 %s11, %s18
    %p20 = scmp.eq.s32.totalorder %s19, 0
    %s22 = sadd.s32 %s21, 1
    %s23 = scalar_select %p20, %s21, %s22
    %p26 = pneg %p20
    %p27 = scmp.eq.s32.totalorder %s11, 1
    %p28 = por %p26, %p27
    %p29 = scmp.ne.s32.totalorder %s21, %s24
    %p30 = scmp.eq.s32.totalorder %s11, 0
    %p31 = por %p29, %p30
    %p32 = scmp.ne.s32.totalorder %s21, %s24
    %p33 = scmp.eq.s32.totalorder %s16, 1
    %p34 = por %p32, %p33
    %p35 = scmp.ne.s32.totalorder %s24, %s25
    %p36 = scmp.eq.s32.totalorder %s16, 0
    %p37 = por %p35, %p36
    %p38 = scmp.ne.s32.totalorder %s24, %s25
    %p39 = scmp.eq.s32.totalorder %s17, 1
    %p40 = por %p38, %p39
    %p42 = scmp.ne.s32.totalorder %s25, %s41
    %p43 = scmp.eq.s32.totalorder %s17, 0
    %p44 = por %p42, %p43
    %s46 = sadd.s32 %s45, 1
    %p49 = scmp.eq.s32.totalorder %s11, 1
    %p50 = scmp.ne.s32.totalorder %s45, %s47
    %p51 = scmp.eq.s32.totalorder %s11, 0
    %p52 = por %p50, %p51
    %p53 = scmp.ne.s32.totalorder %s45, %s47
    %p54 = scmp.eq.s32.totalorder %s16, 1
    %p55 = por %p53, %p54
    %p56 = scmp.ne.s32.totalorder %s47, %s48
    %p57 = scmp.eq.s32.totalorder %s16, 0
    %p58 = por %p56, %p57
    %p59 = scmp.ne.s32.totalorder %s47, %s48
    %p60 = scmp.eq.s32.totalorder %s17, 1
    %p61 = por %p59, %p60
    %p63 = scmp.ne.s32.totalorder %s48, %s62
    %p64 = scmp.eq.s32.totalorder %s17, 0
    %p65 = por %p63, %p64
    %s67 = sadd.s32 %s66, 1
    %p70 = scmp.eq.s32.totalorder %s11, 1
    %p71 = scmp.ne.s32.totalorder %s66, %s68
    %p72 = scmp.eq.s32.totalorder %s11, 0
    %p73 = por %p71, %p72
    %p74 = scmp.ne.s32.totalorder %s66, %s68
    %p75 = scmp.eq.s32.totalorder %s16, 1
    %p76 = por %p74, %p75
    %p77 = scmp.ne.s32.totalorder %s68, %s69
    %p78 = scmp.eq.s32.totalorder %s16, 0
    %p79 = por %p77, %p78
    %p80 = scmp.ne.s32.totalorder %s68, %s69
    %p81 = scmp.eq.s32.totalorder %s17, 1
    %p82 = por %p80, %p81
    %p84 = scmp.ne.s32.totalorder %s69, %s83
    %p85 = scmp.eq.s32.totalorder %s17, 0
    %p86 = por %p84, %p85
    %s87 = ssub.s32 %s11, %s18
    %p88 = scmp.eq.s32.totalorder %s87, 0
    %s90 = sadd.s32 %s89, 1
    %s91 = scalar_select %p88, %s89, %s90
    %p94 = pneg %p88
    %p95 = scmp.eq.s32.totalorder %s11, 1
    %p96 = por %p94, %p95
    %p97 = scmp.ne.s32.totalorder %s89, %s92
    %p98 = scmp.eq.s32.totalorder %s11, 0
    %p99 = por %p97, %p98
    %p100 = scmp.ne.s32.totalorder %s89, %s92
    %p101 = scmp.eq.s32.totalorder %s16, 1
    %p102 = por %p100, %p101
    %p103 = scmp.ne.s32.totalorder %s92, %s93
    %p104 = scmp.eq.s32.totalorder %s16, 0
    %p105 = por %p103, %p104
    %p106 = scmp.ne.s32.totalorder %s92, %s93
    %p107 = scmp.eq.s32.totalorder %s17, 1
    %p108 = por %p106, %p107
    %p110 = scmp.ne.s32.totalorder %s93, %s109
    %p111 = scmp.eq.s32.totalorder %s17, 0
    %p112 = por %p110, %p111
    %p113 = scmp.le.s32.totalorder 1, %s11
    %p114 = scmp.lt.s32.totalorder %s11, 3
    %p115 = pnand %p113, %p114
    %p116 = pneg %p115
    // Predicated region
    $region9: #{discriminator_forward.13} parent=5 // pred_check
      _
    $region10: #{discriminator_forward.13} parent=5 // pred_check_branch
      %118 = sbr.rel (%p115) target = $region12
    $region11: #{discriminator_forward.13} parent=5 // pred_region
      %s119 = ssub.s32 %s11, 1
      // Predicated region
      $region13: #{discriminator_forward.13} parent=11 // pred_check
        %p120 = pneg %p58
      $region14: #{discriminator_forward.13} parent=11 // pred_check_branch
        %122 = sbr.rel (%p120) target = $region16
      $region15: #{discriminator_forward.13} parent=11 // pred_region
        _
      $region16: #{discriminator_forward.13} parent=11 // pred_fallthru
        _
      // Predicated region
      $region17: #{discriminator_forward.13} parent=11 // pred_check
        %p123 = pneg %p79
      $region18: #{discriminator_forward.13} parent=11 // pred_check_branch
        %125 = sbr.rel (%p123) target = $region20
      $region19: #{discriminator_forward.13} parent=11 // pred_region
        _
      $region20: #{discriminator_forward.13} parent=11 // pred_fallthru
        _
    $region12: #{discriminator_forward.13} parent=5 // pred_fallthru
      _
    %p126 = scmp.lt.s32.totalorder %s11, 2
    // Predicated region
    $region21: #{discriminator_forward.13} parent=5 // pred_check
      %p127 = pneg %p126
    $region22: #{discriminator_forward.13} parent=5 // pred_check_branch
      %129 = sbr.rel (%p127) target = $region24
    $region23: #{discriminator_forward.13} parent=5 // pred_region
      // Predicated region
      $region25: #{discriminator_forward.13} parent=23 // pred_check
        %p130 = pneg %p31
      $region26: #{discriminator_forward.13} parent=23 // pred_check_branch
        %132 = sbr.rel (%p130) target = $region28
      $region27: #{discriminator_forward.13} parent=23 // pred_region
        %p133 = scmp.lt.s32.totalorder %s11, 1
        %s134 = scalar_select %p133, %s11, 1
        %s135 = smul.addr %s134, 128
        %s136 = smul.addr %s135, 4
        %s137 = scalar_lea.vmem %s0, %s136
      $region28: #{discriminator_forward.13} parent=23 // pred_fallthru
        _
    $region24: #{discriminator_forward.13} parent=5 // pred_fallthru
      _
    %p138 = scmp.le.s32.totalorder 1, %s11
    %p139 = scmp.lt.s32.totalorder %s11, 3
    %p140 = pnand %p138, %p139
    %p141 = pneg %p140
    // Predicated region
    $region29: #{discriminator_forward.13} parent=5 // pred_check
      _
    $region30: #{discriminator_forward.13} parent=5 // pred_check_branch
      %143 = sbr.rel (%p140) target = $region32
    $region31: #{discriminator_forward.13} parent=5 // pred_region
      %s144 = ssub.s32 %s11, 1
      %p145 = scmp.lt.s32.totalorder %s16, 1
      %s146 = scalar_select %p145, %s16, 1
      %s147 = smul.addr %s146, 128
      %s148 = smul.addr %s147, 4
      %s149 = scalar_lea.vmem %s0, %s148
      %p150 = pneg %p37
      %p151 = pneg %p34
      %p152 = pneg %p58
      %p153 = pneg %p55
      %p154 = pneg %p79
      %p155 = pneg %p76
      %p156 = pneg %p105
      %p157 = pneg %p102
      %p158 = scmp.lt.s32.totalorder %s16, 1
      %s159 = scalar_select %p158, %s16, 1
      %s160 = scalar_lea.vmem %s3, %s159
      %p161 = scmp.lt.s32.totalorder %s16, 1
      %s162 = scalar_select %p161, %s16, 1
      %s163 = smul.addr %s162, 128
      %s164 = smul.addr %s163, 4
      %s165 = scalar_lea.vmem %s0, %s164
      %p166 = scmp.lt.s32.totalorder %s16, 1
      %s167 = scalar_select %p166, %s16, 1
      %s168 = scalar_lea.vmem %s3, %s167
      %v170 = vld [vmem:[%s165] sm:$0xff]
      %v171 = vld [vmem:[%s165 + $0x8] sm:$0xff]
      %v172 = vld [vmem:[%s165 + $0x10] sm:$0xff]
      %v173 = vld [vmem:[%s165 + $0x18] sm:$0xff]
      %v174 = vld [vmem:[%s165 + $0x20] sm:$0xff]
      %v175 = vld [vmem:[%s165 + $0x28] sm:$0xff]
      %v176 = vld [vmem:[%s165 + $0x30] sm:$0xff]
      %v177 = vld [vmem:[%s165 + $0x38] sm:$0xff]
      %v178 = vld [vmem:[%s165 + $0x40] sm:$0xff]
      %v179 = vld [vmem:[%s165 + $0x48] sm:$0xff]
      %v180 = vld [vmem:[%s165 + $0x50] sm:$0xff]
      %v181 = vld [vmem:[%s165 + $0x58] sm:$0xff]
      %v182 = vld [vmem:[%s165 + $0x60] sm:$0xff]
      %v183 = vld [vmem:[%s165 + $0x68] sm:$0xff]
      %v184 = vld [vmem:[%s165 + $0x70] sm:$0xff]
      %v185 = vld [vmem:[%s165 + $0x78] sm:$0xff]
      %v186 = vld [vmem:[%s165 + $0x80] sm:$0xff]
      %v187 = vld [vmem:[%s165 + $0x88] sm:$0xff]
      %v188 = vld [vmem:[%s165 + $0x90] sm:$0xff]
      %v189 = vld [vmem:[%s165 + $0x98] sm:$0xff]
      %v190 = vld [vmem:[%s165 + $0xa0] sm:$0xff]
      %v191 = vld [vmem:[%s165 + $0xa8] sm:$0xff]
      %v192 = vld [vmem:[%s165 + $0xb0] sm:$0xff]
      %v193 = vld [vmem:[%s165 + $0xb8] sm:$0xff]
      %v194 = vld [vmem:[%s165 + $0xc0] sm:$0xff]
      %v195 = vld [vmem:[%s165 + $0xc8] sm:$0xff]
      %v196 = vld [vmem:[%s165 + $0xd0] sm:$0xff]
      %v197 = vld [vmem:[%s165 + $0xd8] sm:$0xff]
      %v198 = vld [vmem:[%s165 + $0xe0] sm:$0xff]
      %v199 = vld [vmem:[%s165 + $0xe8] sm:$0xff]
      %v200 = vld [vmem:[%s165 + $0xf0] sm:$0xff]
      %v201 = vld [vmem:[%s165 + $0xf8] sm:$0xff]
      %v202 = vld [vmem:[%s165 + $0x100] sm:$0xff]
      %v203 = vld [vmem:[%s165 + $0x108] sm:$0xff]
      %v204 = vld [vmem:[%s165 + $0x110] sm:$0xff]
      %v205 = vld [vmem:[%s165 + $0x118] sm:$0xff]
      %v206 = vld [vmem:[%s165 + $0x120] sm:$0xff]
      %v207 = vld [vmem:[%s165 + $0x128] sm:$0xff]
      %v208 = vld [vmem:[%s165 + $0x130] sm:$0xff]
      %v209 = vld [vmem:[%s165 + $0x138] sm:$0xff]
      %v210 = vld [vmem:[%s165 + $0x140] sm:$0xff]
      %v211 = vld [vmem:[%s165 + $0x148] sm:$0xff]
      %v212 = vld [vmem:[%s165 + $0x150] sm:$0xff]
      %v213 = vld [vmem:[%s165 + $0x158] sm:$0xff]
      %v214 = vld [vmem:[%s165 + $0x160] sm:$0xff]
      %v215 = vld [vmem:[%s165 + $0x168] sm:$0xff]
      %v216 = vld [vmem:[%s165 + $0x170] sm:$0xff]
      %v217 = vld [vmem:[%s165 + $0x178] sm:$0xff]
      %v218 = vld [vmem:[%s165 + $0x180] sm:$0xff]
      %v219 = vld [vmem:[%s165 + $0x188] sm:$0xff]
      %v220 = vld [vmem:[%s165 + $0x190] sm:$0xff]
      %v221 = vld [vmem:[%s165 + $0x198] sm:$0xff]
      %v222 = vld [vmem:[%s165 + $0x1a0] sm:$0xff]
      %v223 = vld [vmem:[%s165 + $0x1a8] sm:$0xff]
      %v224 = vld [vmem:[%s165 + $0x1b0] sm:$0xff]
      %v225 = vld [vmem:[%s165 + $0x1b8] sm:$0xff]
      %v226 = vld [vmem:[%s165 + $0x1c0] sm:$0xff]
      %v227 = vld [vmem:[%s165 + $0x1c8] sm:$0xff]
      %v228 = vld [vmem:[%s165 + $0x1d0] sm:$0xff]
      %v229 = vld [vmem:[%s165 + $0x1d8] sm:$0xff]
      %v230 = vld [vmem:[%s165 + $0x1e0] sm:$0xff]
      %v231 = vld [vmem:[%s165 + $0x1e8] sm:$0xff]
      %v232 = vld [vmem:[%s165 + $0x1f0] sm:$0xff]
      %v233 = vld [vmem:[%s165 + $0x1f8] sm:$0xff]
      %v234 = vld [vmem:[%s1] sm:$0xff]
      %v235 = vld [vmem:[#allocation2] sm:$0x1]
      %237 = vset.pattern.permute.xlu0 0
      %238 = vperm.xlu0 %237, %v235
      %v239 = vpop.permute.xlu0 %238
      %v241 = vlaneseq
      %v242 = vshrl.u32 %v241, 7
      %v243 = vsub.s32 0, %v242
      %v244 = vrot.slane %v239, %v243
      %v246 = vcombine.high %v234, %v234
      %v248 = vunpack.c.l.s4 1966171168
      %v249 = vunpack.c.0.s8 %v248
      %v250 = vlaneseq
      %v251 = vshrl.u32 %v250, 7
      %v252 = vsub.s32 %v249, %v251
      %v253 = vrot.slane %v234, %v252
      %v255 = vunpack.c.l.s4 1966171168
      %v256 = vunpack.c.0.s8 %v255
      %v257 = vlaneseq
      %v258 = vshrl.u32 %v257, 7
      %v259 = vsub.s32 %v256, %v258
      %v260 = vrot.slane %v246, %v259
      %v261 = vcombine.high %v253, %v253
      %v262 = vcombine.high %v260, %v260
      %v264 = vunpack.c.l.s4 1966171168
      %v265 = vunpack.c.0.s8 %v264
      %v266 = vlaneseq
      %v267 = vshrl.u32 %v266, 7
      %v268 = vsub.s32 %v265, %v267
      %v269 = vrot.slane %v253, %v268
      %v271 = vunpack.c.l.s4 1966171168
      %v272 = vunpack.c.0.s8 %v271
      %v273 = vlaneseq
      %v274 = vshrl.u32 %v273, 7
      %v275 = vsub.s32 %v272, %v274
      %v276 = vrot.slane %v260, %v275
      %v278 = vunpack.c.l.s4 1966171168
      %v279 = vunpack.c.0.s8 %v278
      %v280 = vlaneseq
      %v281 = vshrl.u32 %v280, 7
      %v282 = vsub.s32 %v279, %v281
      %v283 = vrot.slane %v261, %v282
      %v285 = vunpack.c.l.s4 1966171168
      %v286 = vunpack.c.0.s8 %v285
      %v287 = vlaneseq
      %v288 = vshrl.u32 %v287, 7
      %v289 = vsub.s32 %v286, %v288
      %v290 = vrot.slane %v262, %v289
      %v291 = vcombine.high %v269, %v269
      %v292 = vcombine.high %v276, %v276
      %v293 = vcombine.high %v283, %v283
      %v294 = vcombine.high %v290, %v290
      %v367 = vunpack.c.l.b16 %v170
      %v368 = vunpack.c.h.b16 %v170
      %v369 = vunpack.c.l.b16 %v171
      %v370 = vunpack.c.h.b16 %v171
      %v371 = vunpack.c.l.b16 %v172
      %v372 = vunpack.c.h.b16 %v172
      %v373 = vunpack.c.l.b16 %v173
      %v374 = vunpack.c.h.b16 %v173
      %v375 = vunpack.c.l.b16 %v174
      %v376 = vunpack.c.h.b16 %v174
      %v377 = vunpack.c.l.b16 %v175
      %v378 = vunpack.c.h.b16 %v175
      %v379 = vunpack.c.l.b16 %v176
      %v380 = vunpack.c.h.b16 %v176
      %v381 = vunpack.c.l.b16 %v177
      %v382 = vunpack.c.h.b16 %v177
      %v383 = vunpack.c.l.b16 %v178
      %v384 = vunpack.c.h.b16 %v178
      %v385 = vunpack.c.l.b16 %v179
      %v386 = vunpack.c.h.b16 %v179
      %v387 = vunpack.c.l.b16 %v180
      %v388 = vunpack.c.h.b16 %v180
      %v389 = vunpack.c.l.b16 %v181
      %v390 = vunpack.c.h.b16 %v181
      %v391 = vunpack.c.l.b16 %v182
      %v392 = vunpack.c.h.b16 %v182
      %v393 = vunpack.c.l.b16 %v183
      %v394 = vunpack.c.h.b16 %v183
      %v395 = vunpack.c.l.b16 %v184
      %v396 = vunpack.c.h.b16 %v184
      %v397 = vunpack.c.l.b16 %v185
      %v398 = vunpack.c.h.b16 %v185
      %v399 = vunpack.c.l.b16 %v186
      %v400 = vunpack.c.h.b16 %v186
      %v401 = vunpack.c.l.b16 %v187
      %v402 = vunpack.c.h.b16 %v187
      %v403 = vunpack.c.l.b16 %v188
      %v404 = vunpack.c.h.b16 %v188
      %v405 = vunpack.c.l.b16 %v189
      %v406 = vunpack.c.h.b16 %v189
      %v407 = vunpack.c.l.b16 %v190
      %v408 = vunpack.c.h.b16 %v190
      %v409 = vunpack.c.l.b16 %v191
      %v410 = vunpack.c.h.b16 %v191
      %v411 = vunpack.c.l.b16 %v192
      %v412 = vunpack.c.h.b16 %v192
      %v413 = vunpack.c.l.b16 %v193
      %v414 = vunpack.c.h.b16 %v193
      %v415 = vunpack.c.l.b16 %v194
      %v416 = vunpack.c.h.b16 %v194
      %v417 = vunpack.c.l.b16 %v195
      %v418 = vunpack.c.h.b16 %v195
      %v419 = vunpack.c.l.b16 %v196
      %v420 = vunpack.c.h.b16 %v196
      %v421 = vunpack.c.l.b16 %v197
      %v422 = vunpack.c.h.b16 %v197
      %v423 = vunpack.c.l.b16 %v198
      %v424 = vunpack.c.h.b16 %v198
      %v425 = vunpack.c.l.b16 %v199
      %v426 = vunpack.c.h.b16 %v199
      %v427 = vunpack.c.l.b16 %v200
      %v428 = vunpack.c.h.b16 %v200
      %v429 = vunpack.c.l.b16 %v201
      %v430 = vunpack.c.h.b16 %v201
      %v431 = vunpack.c.l.b16 %v202
      %v432 = vunpack.c.h.b16 %v202
      %v433 = vunpack.c.l.b16 %v203
      %v434 = vunpack.c.h.b16 %v203
      %v435 = vunpack.c.l.b16 %v204
      %v436 = vunpack.c.h.b16 %v204
      %v437 = vunpack.c.l.b16 %v205
      %v438 = vunpack.c.h.b16 %v205
      %v439 = vunpack.c.l.b16 %v206
      %v440 = vunpack.c.h.b16 %v206
      %v441 = vunpack.c.l.b16 %v207
      %v442 = vunpack.c.h.b16 %v207
      %v443 = vunpack.c.l.b16 %v208
      %v444 = vunpack.c.h.b16 %v208
      %v445 = vunpack.c.l.b16 %v209
      %v446 = vunpack.c.h.b16 %v209
      %v447 = vunpack.c.l.b16 %v210
      %v448 = vunpack.c.h.b16 %v210
      %v449 = vunpack.c.l.b16 %v211
      %v450 = vunpack.c.h.b16 %v211
      %v451 = vunpack.c.l.b16 %v212
      %v452 = vunpack.c.h.b16 %v212
      %v453 = vunpack.c.l.b16 %v213
      %v454 = vunpack.c.h.b16 %v213
      %v455 = vunpack.c.l.b16 %v214
      %v456 = vunpack.c.h.b16 %v214
      %v457 = vunpack.c.l.b16 %v215
      %v458 = vunpack.c.h.b16 %v215
      %v459 = vunpack.c.l.b16 %v216
      %v460 = vunpack.c.h.b16 %v216
      %v461 = vunpack.c.l.b16 %v217
      %v462 = vunpack.c.h.b16 %v217
      %v463 = vunpack.c.l.b16 %v218
      %v464 = vunpack.c.h.b16 %v218
      %v465 = vunpack.c.l.b16 %v219
      %v466 = vunpack.c.h.b16 %v219
      %v467 = vunpack.c.l.b16 %v220
      %v468 = vunpack.c.h.b16 %v220
      %v469 = vunpack.c.l.b16 %v221
      %v470 = vunpack.c.h.b16 %v221
      %v471 = vunpack.c.l.b16 %v222
      %v472 = vunpack.c.h.b16 %v222
      %v473 = vunpack.c.l.b16 %v223
      %v474 = vunpack.c.h.b16 %v223
      %v475 = vunpack.c.l.b16 %v224
      %v476 = vunpack.c.h.b16 %v224
      %v477 = vunpack.c.l.b16 %v225
      %v478 = vunpack.c.h.b16 %v225
      %v479 = vunpack.c.l.b16 %v226
      %v480 = vunpack.c.h.b16 %v226
      %v481 = vunpack.c.l.b16 %v227
      %v482 = vunpack.c.h.b16 %v227
      %v483 = vunpack.c.l.b16 %v228
      %v484 = vunpack.c.h.b16 %v228
      %v485 = vunpack.c.l.b16 %v229
      %v486 = vunpack.c.h.b16 %v229
      %v487 = vunpack.c.l.b16 %v230
      %v488 = vunpack.c.h.b16 %v230
      %v489 = vunpack.c.l.b16 %v231
      %v490 = vunpack.c.h.b16 %v231
      %v491 = vunpack.c.l.b16 %v232
      %v492 = vunpack.c.h.b16 %v232
      %v493 = vunpack.c.l.b16 %v233
      %v494 = vunpack.c.h.b16 %v233
      %v495 = vpack.c.b16 %v375, %v367
      %v496 = vpack.c.b16 %v376, %v368
      %v497 = vpack.c.b16 %v377, %v369
      %v498 = vpack.c.b16 %v378, %v370
      %v499 = vpack.c.b16 %v379, %v371
      %v500 = vpack.c.b16 %v380, %v372
      %v501 = vpack.c.b16 %v381, %v373
      %v502 = vpack.c.b16 %v382, %v374
      %v503 = vpack.c.b16 %v391, %v383
      %v504 = vpack.c.b16 %v392, %v384
      %v505 = vpack.c.b16 %v393, %v385
      %v506 = vpack.c.b16 %v394, %v386
      %v507 = vpack.c.b16 %v395, %v387
      %v508 = vpack.c.b16 %v396, %v388
      %v509 = vpack.c.b16 %v397, %v389
      %v510 = vpack.c.b16 %v398, %v390
      %v511 = vpack.c.b16 %v407, %v399
      %v512 = vpack.c.b16 %v408, %v400
      %v513 = vpack.c.b16 %v409, %v401
      %v514 = vpack.c.b16 %v410, %v402
      %v515 = vpack.c.b16 %v411, %v403
      %v516 = vpack.c.b16 %v412, %v404
      %v517 = vpack.c.b16 %v413, %v405
      %v518 = vpack.c.b16 %v414, %v406
      %v519 = vpack.c.b16 %v423, %v415
      %v520 = vpack.c.b16 %v424, %v416
      %v521 = vpack.c.b16 %v425, %v417
      %v522 = vpack.c.b16 %v426, %v418
      %v523 = vpack.c.b16 %v427, %v419
      %v524 = vpack.c.b16 %v428, %v420
      %v525 = vpack.c.b16 %v429, %v421
      %v526 = vpack.c.b16 %v430, %v422
      %v527 = vpack.c.b16 %v439, %v431
      %v528 = vpack.c.b16 %v440, %v432
      %v529 = vpack.c.b16 %v441, %v433
      %v530 = vpack.c.b16 %v442, %v434
      %v531 = vpack.c.b16 %v443, %v435
      %v532 = vpack.c.b16 %v444, %v436
      %v533 = vpack.c.b16 %v445, %v437
      %v534 = vpack.c.b16 %v446, %v438
      %v535 = vpack.c.b16 %v455, %v447
      %v536 = vpack.c.b16 %v456, %v448
      %v537 = vpack.c.b16 %v457, %v449
      %v538 = vpack.c.b16 %v458, %v450
      %v539 = vpack.c.b16 %v459, %v451
      %v540 = vpack.c.b16 %v460, %v452
      %v541 = vpack.c.b16 %v461, %v453
      %v542 = vpack.c.b16 %v462, %v454
      %v543 = vpack.c.b16 %v471, %v463
      %v544 = vpack.c.b16 %v472, %v464
      %v545 = vpack.c.b16 %v473, %v465
      %v546 = vpack.c.b16 %v474, %v466
      %v547 = vpack.c.b16 %v475, %v467
      %v548 = vpack.c.b16 %v476, %v468
      %v549 = vpack.c.b16 %v477, %v469
      %v550 = vpack.c.b16 %v478, %v470
      %v551 = vpack.c.b16 %v487, %v479
      %v552 = vpack.c.b16 %v488, %v480
      %v553 = vpack.c.b16 %v489, %v481
      %v554 = vpack.c.b16 %v490, %v482
      %v555 = vpack.c.b16 %v491, %v483
      %v556 = vpack.c.b16 %v492, %v484
      %v557 = vpack.c.b16 %v493, %v485
      %v558 = vpack.c.b16 %v494, %v486
      %623 = vmatprep.subr.bf16.mxu0 %v552
      %624 = vmatpush1.bf16.xpose.msra.mxu0 %v551
      %625 = vmatprep.subr.bf16.mxu0 %v544
      %626 = vmatpush1.bf16.xpose.msra.mxu0 %v543
      %627 = vmatprep.subr.bf16.mxu0 %v536
      %628 = vmatpush1.bf16.xpose.msra.mxu0 %v535
      %629 = vmatprep.subr.bf16.mxu0 %v528
      %630 = vmatpush1.bf16.xpose.msra.mxu0 %v527
      %631 = vmatprep.subr.bf16.mxu0 %v520
      %632 = vmatpush1.bf16.xpose.msra.mxu0 %v519
      %633 = vmatprep.subr.bf16.mxu0 %v512
      %634 = vmatpush1.bf16.xpose.msra.mxu0 %v511
      %635 = vmatprep.subr.bf16.mxu0 %v504
      %636 = vmatpush1.bf16.xpose.msra.mxu0 %v503
      %637 = vmatprep.subr.bf16.mxu0 %v496
      %638 = vmatpush1.bf16.xpose.msra.mxu0 %v495
      %639 = vmatprep.subr.bf16.mxu0 0
      %640 = vmatpush2.bf16.xpose.msra.mxu0 0
      %641 = vmatprep.subr.bf16.mxu0 0
      %642 = vmatpush2.bf16.xpose.msra.mxu0 0
      %643 = vmatprep.subr.bf16.mxu0 0
      %644 = vmatpush2.bf16.xpose.msra.mxu0 0
      %645 = vmatprep.subr.bf16.mxu0 0
      %646 = vmatpush2.bf16.xpose.msra.mxu0 0
      %647 = vmatprep.subr.bf16.mxu0 0
      %648 = vmatpush2.bf16.xpose.msra.mxu0 0
      %649 = vmatprep.subr.bf16.mxu0 0
      %650 = vmatpush2.bf16.xpose.msra.mxu0 0
      %651 = vmatprep.subr.bf16.mxu0 0
      %652 = vmatpush2.bf16.xpose.msra.mxu0 0
      %653 = vmatprep.subr.bf16.mxu0 0
      %654 = vmatpush2.bf16.xpose.msra.mxu0 0
      %655 = vmatprep.mubr.bf16.mxu0 %v283
      %656 = vmatmul.mubr.bf16.gmra.mxu0 %v269
      %v657 = vpop.f32.mrf.mxu0
      %v658 = vadd.f32 %v244, %v657
      %v659 = vpop.f32.mrf.mxu0
      %v660 = vpop.f32.mrf.mxu0
      %v661 = vpop.f32.mrf.mxu0
      %662 = vdwg.mxu0
      %663 = vmatprep.subr.bf16.mxu0 %v554
      %664 = vmatpush1.bf16.xpose.msra.mxu0 %v553
      %665 = vmatprep.subr.bf16.mxu0 %v546
      %666 = vmatpush1.bf16.xpose.msra.mxu0 %v545
      %667 = vmatprep.subr.bf16.mxu0 %v538
      %668 = vmatpush1.bf16.xpose.msra.mxu0 %v537
      %669 = vmatprep.subr.bf16.mxu0 %v530
      %670 = vmatpush1.bf16.xpose.msra.mxu0 %v529
      %671 = vmatprep.subr.bf16.mxu0 %v522
      %672 = vmatpush1.bf16.xpose.msra.mxu0 %v521
      %673 = vmatprep.subr.bf16.mxu0 %v514
      %674 = vmatpush1.bf16.xpose.msra.mxu0 %v513
      %675 = vmatprep.subr.bf16.mxu0 %v506
      %676 = vmatpush1.bf16.xpose.msra.mxu0 %v505
      %677 = vmatprep.subr.bf16.mxu0 %v498
      %678 = vmatpush1.bf16.xpose.msra.mxu0 %v497
      %679 = vmatprep.subr.bf16.mxu0 0
      %680 = vmatpush2.bf16.xpose.msra.mxu0 0
      %681 = vmatprep.subr.bf16.mxu0 0
      %682 = vmatpush2.bf16.xpose.msra.mxu0 0
      %683 = vmatprep.subr.bf16.mxu0 0
      %684 = vmatpush2.bf16.xpose.msra.mxu0 0
      %685 = vmatprep.subr.bf16.mxu0 0
      %686 = vmatpush2.bf16.xpose.msra.mxu0 0
      %687 = vmatprep.subr.bf16.mxu0 0
      %688 = vmatpush2.bf16.xpose.msra.mxu0 0
      %689 = vmatprep.subr.bf16.mxu0 0
      %690 = vmatpush2.bf16.xpose.msra.mxu0 0
      %691 = vmatprep.subr.bf16.mxu0 0
      %692 = vmatpush2.bf16.xpose.msra.mxu0 0
      %693 = vmatprep.subr.bf16.mxu0 0
      %694 = vmatpush2.bf16.xpose.msra.mxu0 0
      %695 = vmatprep.mubr.bf16.mxu0 %v293
      %696 = vmatmul.mubr.bf16.gmra.mxu0 %v291
      %v697 = vpop.f32.mrf.mxu0
      %v698 = vadd.f32 %v658, %v697
      %v699 = vpop.f32.mrf.mxu0
      %v700 = vpop.f32.mrf.mxu0
      %v701 = vpop.f32.mrf.mxu0
      %702 = vdwg.mxu0
      %703 = vmatprep.subr.bf16.mxu0 %v556
      %704 = vmatpush1.bf16.xpose.msra.mxu0 %v555
      %705 = vmatprep.subr.bf16.mxu0 %v548
      %706 = vmatpush1.bf16.xpose.msra.mxu0 %v547
      %707 = vmatprep.subr.bf16.mxu0 %v540
      %708 = vmatpush1.bf16.xpose.msra.mxu0 %v539
      %709 = vmatprep.subr.bf16.mxu0 %v532
      %710 = vmatpush1.bf16.xpose.msra.mxu0 %v531
      %711 = vmatprep.subr.bf16.mxu0 %v524
      %712 = vmatpush1.bf16.xpose.msra.mxu0 %v523
      %713 = vmatprep.subr.bf16.mxu0 %v516
      %714 = vmatpush1.bf16.xpose.msra.mxu0 %v515
      %715 = vmatprep.subr.bf16.mxu0 %v508
      %716 = vmatpush1.bf16.xpose.msra.mxu0 %v507
      %717 = vmatprep.subr.bf16.mxu0 %v500
      %718 = vmatpush1.bf16.xpose.msra.mxu0 %v499
      %719 = vmatprep.subr.bf16.mxu0 0
      %720 = vmatpush2.bf16.xpose.msra.mxu0 0
      %721 = vmatprep.subr.bf16.mxu0 0
      %722 = vmatpush2.bf16.xpose.msra.mxu0 0
      %723 = vmatprep.subr.bf16.mxu0 0
      %724 = vmatpush2.bf16.xpose.msra.mxu0 0
      %725 = vmatprep.subr.bf16.mxu0 0
      %726 = vmatpush2.bf16.xpose.msra.mxu0 0
      %727 = vmatprep.subr.bf16.mxu0 0
      %728 = vmatpush2.bf16.xpose.msra.mxu0 0
      %729 = vmatprep.subr.bf16.mxu0 0
      %730 = vmatpush2.bf16.xpose.msra.mxu0 0
      %731 = vmatprep.subr.bf16.mxu0 0
      %732 = vmatpush2.bf16.xpose.msra.mxu0 0
      %733 = vmatprep.subr.bf16.mxu0 0
      %734 = vmatpush2.bf16.xpose.msra.mxu0 0
      %735 = vmatprep.mubr.bf16.mxu0 %v290
      %736 = vmatmul.mubr.bf16.gmra.mxu0 %v276
      %v737 = vpop.f32.mrf.mxu0
      %v738 = vadd.f32 %v698, %v737
      %v739 = vpop.f32.mrf.mxu0
      %v740 = vpop.f32.mrf.mxu0
      %v741 = vpop.f32.mrf.mxu0
      %742 = vdwg.mxu0
      %743 = vmatprep.subr.bf16.mxu0 %v558
      %744 = vmatpush1.bf16.xpose.msra.mxu0 %v557
      %745 = vmatprep.subr.bf16.mxu0 %v550
      %746 = vmatpush1.bf16.xpose.msra.mxu0 %v549
      %747 = vmatprep.subr.bf16.mxu0 %v542
      %748 = vmatpush1.bf16.xpose.msra.mxu0 %v541
      %749 = vmatprep.subr.bf16.mxu0 %v534
      %750 = vmatpush1.bf16.xpose.msra.mxu0 %v533
      %751 = vmatprep.subr.bf16.mxu0 %v526
      %752 = vmatpush1.bf16.xpose.msra.mxu0 %v525
      %753 = vmatprep.subr.bf16.mxu0 %v518
      %754 = vmatpush1.bf16.xpose.msra.mxu0 %v517
      %755 = vmatprep.subr.bf16.mxu0 %v510
      %756 = vmatpush1.bf16.xpose.msra.mxu0 %v509
      %757 = vmatprep.subr.bf16.mxu0 %v502
      %758 = vmatpush1.bf16.xpose.msra.mxu0 %v501
      %759 = vmatprep.subr.bf16.mxu0 0
      %760 = vmatpush2.bf16.xpose.msra.mxu0 0
      %761 = vmatprep.subr.bf16.mxu0 0
      %762 = vmatpush2.bf16.xpose.msra.mxu0 0
      %763 = vmatprep.subr.bf16.mxu0 0
      %764 = vmatpush2.bf16.xpose.msra.mxu0 0
      %765 = vmatprep.subr.bf16.mxu0 0
      %766 = vmatpush2.bf16.xpose.msra.mxu0 0
      %767 = vmatprep.subr.bf16.mxu0 0
      %768 = vmatpush2.bf16.xpose.msra.mxu0 0
      %769 = vmatprep.subr.bf16.mxu0 0
      %770 = vmatpush2.bf16.xpose.msra.mxu0 0
      %771 = vmatprep.subr.bf16.mxu0 0
      %772 = vmatpush2.bf16.xpose.msra.mxu0 0
      %773 = vmatprep.subr.bf16.mxu0 0
      %774 = vmatpush2.bf16.xpose.msra.mxu0 0
      %775 = vmatprep.mubr.bf16.mxu0 %v294
      %776 = vmatmul.mubr.bf16.gmra.mxu0 %v292
      %v777 = vpop.f32.mrf.mxu0
      %v778 = vadd.f32 %v738, %v777
      %v779 = vpop.f32.mrf.mxu0
      %v780 = vpop.f32.mrf.mxu0
      %v781 = vpop.f32.mrf.mxu0
      %782 = vdwg.mxu0
      %783 = vst [vmem:[%s168] sm:$0x1] %v778
      %p784 = scmp.lt.s32.totalorder %s16, 1
      %s785 = scalar_select %p784, %s16, 1
      %s786 = scalar_lea.vmem %s3, %s785
      // Predicated region
      $region33: #{discriminator_forward.13} parent=31 // pred_check
        %p787 = pneg %p102
      $region34: #{discriminator_forward.13} parent=31 // pred_check_branch
        %789 = sbr.rel (%p787) target = $region36
      $region35: #{discriminator_forward.13} parent=31 // pred_region
        _
      $region36: #{discriminator_forward.13} parent=31 // pred_fallthru
        _
    $region32: #{discriminator_forward.13} parent=5 // pred_fallthru
      _
    %p790 = scmp.le.s32.totalorder 2, %s11
    // Predicated region
    $region37: #{discriminator_forward.13} parent=5 // pred_check
      %p791 = pneg %p790
    $region38: #{discriminator_forward.13} parent=5 // pred_check_branch
      %793 = sbr.rel (%p791) target = $region40
    $region39: #{discriminator_forward.13} parent=5 // pred_region
      %s794 = ssub.s32 %s11, 2
      // Predicated region
      $region41: #{discriminator_forward.13} parent=39 // pred_check
        %p795 = pneg %p108
      $region42: #{discriminator_forward.13} parent=39 // pred_check_branch
        %797 = sbr.rel (%p795) target = $region44
      $region43: #{discriminator_forward.13} parent=39 // pred_region
        %p798 = scmp.lt.s32.totalorder %s17, 1
        %s799 = scalar_select %p798, %s17, 1
        %s800 = scalar_lea.vmem %s3, %s799
      $region44: #{discriminator_forward.13} parent=39 // pred_fallthru
        _
    $region40: #{discriminator_forward.13} parent=5 // pred_fallthru
      _
  $region6: #{discriminator_forward.13} parent=0 // loop_footer
    %s15 = sadd.s32 1, %s11
  $region7: #{discriminator_forward.13} parent=0 // loop_footer_branch
    %10 = sbr.rel target = $region3
  $region8: #{discriminator_forward.13} parent=0 // loop_exit
    _

</llo_original>
